<compile_context>
chip_gen: v6e
topology: v6e:2x2x1
jax: 0.10.0
libtpu: 0.0.40
codegen_flags: <defaults>
</compile_context>

<pallas_src>
import functools

import jax
import jax.numpy as jnp
from jax.experimental import pallas as pl
from jax.experimental.pallas import tpu as pltpu

COMPUTE_DTYPE = jnp.bfloat16   # MXU operand dtype (f32 accumulate / epilogue)


def _round_up(x, m):
    return ((x + m - 1) // m) * m


# ---------------------------------------------------------------------------
# Kernel 1: reduced-SVD reconstruction  sw = (U * S) @ Vh
#   u_ref  : (Cout, r)   left singular vectors
#   s_ref  : (1, r)      singular values (row vector)
#   vh_ref : (r, K)      right singular vectors (transposed)
#   out    : (Cout, K)   reconstructed flattened weight
# ---------------------------------------------------------------------------
def _svd_reconstruct_kernel(u_ref, s_ref, vh_ref, out_ref):
    us = u_ref[...] * s_ref[...]                       # (Cout, r) * (1, r)
    out_ref[...] = jnp.dot(
        us, vh_ref[...], preferred_element_type=jnp.float32
    ).astype(out_ref.dtype)


def svd_reconstruct(U, S, Vh):
    """U:(Cout,r) f32, S:(r,) f32, Vh:(r,K) f32 -> (Cout,K) f32."""
    Cout, r = U.shape
    K = Vh.shape[1]
    return pl.pallas_call(
        _svd_reconstruct_kernel,
        out_shape=jax.ShapeDtypeStruct((Cout, K), jnp.float32),
    )(U, S.reshape(1, r), Vh)


# ---------------------------------------------------------------------------
# Kernel 2: fused im2col-free 3x3 "same" conv + bias, one image per grid step.
#   x_ref : (Cin, LF)        zero-padded image, rows flattened with stride Wp,
#                            tail-padded so every tap slab stays in bounds
#   w_ref : (9, Cout, Cin)   per-tap weights, tap t = kh*3 + kw
#   b_ref : (Cout, 1)        bias (f32)
#   o_ref : (Cout, HWp_pad)  output rows flattened with Wp stride; columns
#                            >= H*Wp (and cols W..Wp-1 within each row) are
#                            garbage and get sliced off in the wrapper
# ---------------------------------------------------------------------------
def _conv3x3_kernel(x_ref, w_ref, b_ref, o_ref, *, HWp_pad, Wp):
    acc = None
    for t in range(9):                                 # fixed, fully unrolled
        dh, dw = divmod(t, 3)
        off = dh * Wp + dw                             # static element offset
        slab = x_ref[:, pl.ds(off, HWp_pad)]           # (Cin, HWp_pad) bf16
        contrib = jnp.dot(w_ref[t], slab,              # (Cout,Cin)x(Cin,HWp_pad)
                          preferred_element_type=jnp.float32)
        acc = contrib if acc is None else acc + contrib
    acc = acc + b_ref[...]                             # f32 epilogue (bias)
    o_ref[...] = acc.astype(o_ref.dtype)


def conv3x3_fused(x_flat, w_taps, bias_col, *, HWp_pad, Wp):
    """x_flat:(N,Cin,LF) bf16, w_taps:(9,Cout,Cin) bf16, bias_col:(Cout,1) f32."""
    N, Cin, LF = x_flat.shape
    T, Cout, _ = w_taps.shape
    kern = functools.partial(_conv3x3_kernel, HWp_pad=HWp_pad, Wp=Wp)

    flops = 2 * N * Cout * Cin * 9 * HWp_pad
    bytes_accessed = int(
        x_flat.size * 2 + w_taps.size * 2 + bias_col.size * 4
        + N * Cout * HWp_pad * 4
    )

    return pl.pallas_call(
        kern,
        out_shape=jax.ShapeDtypeStruct((N, Cout, HWp_pad), jnp.float32),
        grid=(N,),
        in_specs=[
            # one padded image per grid step (pipelined / double-buffered)
            pl.BlockSpec((None, Cin, LF), lambda n: (n, 0, 0)),
            # weight + bias: constant index_map -> VMEM-resident across grid
            pl.BlockSpec((T, Cout, Cin), lambda n: (0, 0, 0)),
            pl.BlockSpec((Cout, 1), lambda n: (0, 0)),
        ],
        # lane-dense (multiple-of-128) output block -> unmasked stores
        out_specs=pl.BlockSpec((None, Cout, HWp_pad), lambda n: (n, 0, 0)),
        compiler_params=pltpu.CompilerParams(
            dimension_semantics=("parallel",),        # v7x: both TCs split batch
            vmem_limit_bytes=32 * 1024 * 1024,        # explicit, safe on v5e/v6e/v7x
        ),
        cost_estimate=pl.CostEstimate(
            flops=flops, transcendentals=0, bytes_accessed=bytes_accessed
        ),
    )(x_flat, w_taps, bias_col)


# ---------------------------------------------------------------------------
# Full reduced_SVD(Conv2d) forward
# ---------------------------------------------------------------------------
@jax.jit
def reduced_svd_conv_forward(x, w_bar, bias):
    """x: (N, Cin, H, W) NCHW f32 -> (N, Cout, H, W) f32."""
    N, Cin, H, W = x.shape
    Cout = w_bar.shape[0]

    # --- _update_u_v(): weight = U @ diag(S) @ Vh of w_bar.view(Cout, -1) ---
    w_mat = w_bar.reshape(Cout, -1)
    # TODO(synk): torch.linalg.svd has no Pallas equivalent; the decomposition
    # runs in XLA (jnp.linalg.svd); only the reconstruction is a Pallas kernel.
    U, S, Vh = jnp.linalg.svd(w_mat, full_matrices=False)
    sw = svd_reconstruct(U, S, Vh)                           # Pallas kernel 1

    # per-tap weight layout (9, Cout, Cin), tap t = kh*3 + kw  (tiny tensor)
    w_taps = (
        sw.reshape(Cout, Cin, 3, 3).transpose(2, 3, 0, 1).reshape(9, Cout, Cin)
    ).astype(COMPUTE_DTYPE)

    # --- activation: 1-pixel zero halo, rows flattened (no 9x im2col) ---
    Hp, Wp = H + 2, W + 2
    HWp = H * Wp
    HWp_pad = _round_up(HWp, 128)            # lane-dense output / slab width
    max_off = 2 * Wp + 2                     # largest tap offset (dh=dw=2)
    LF = _round_up(max_off + HWp_pad, 128)   # (8,128)-aligned flat length

    xp = jnp.pad(x, ((0, 0), (0, 0), (1, 1), (1, 1)))
    x_flat = xp.reshape(N, Cin, Hp * Wp)
    x_flat = jnp.pad(
        x_flat, ((0, 0), (0, 0), (0, LF - Hp * Wp))
    ).astype(COMPUTE_DTYPE)

    out_flat = conv3x3_fused(
        x_flat, w_taps, bias.reshape(Cout, 1).astype(jnp.float32),
        HWp_pad=HWp_pad, Wp=Wp,
    )                                                        # Pallas kernel 2

    # already NCHW-ordered; drop the tail pad + 2 garbage columns per row
    out = out_flat[:, :, :HWp].reshape(N, Cout, H, Wp)[:, :, :, :W]
    return out


# ---------------------------------------------------------------------------
# Reference (plain JAX / XLA) for verification
# ---------------------------------------------------------------------------
def reference_forward(x, w_bar, bias):
    Cout = w_bar.shape[0]
    w_mat = w_bar.reshape(Cout, -1)
    U, S, Vh = jnp.linalg.svd(w_mat, full_matrices=False)
    sw = (U * S[None, :]) @ Vh
    w = sw.reshape(w_bar.shape)
    y = jax.lax.conv_general_dilated(
        x.astype(COMPUTE_DTYPE), w.astype(COMPUTE_DTYPE),
        window_strides=(1, 1), padding="SAME",
        dimension_numbers=("NCHW", "OIHW", "NCHW"),
        preferred_element_type=jnp.float32)
    return y + bias.reshape(1, Cout, 1, 1)


if __name__ == "__main__":
    key = jax.random.PRNGKey(0)
    k_x, k_w, k_b = jax.random.split(key, 3)

    N, Cin, H, W = 2, 4, 16, 16
    Cout, kh, kw = 8, 3, 3

    x = jax.random.normal(k_x, (N, Cin, H, W), jnp.float32)
    # module parameters: Conv2d weight_bar (OIHW) + bias
    w_bar = jax.random.normal(k_w, (Cout, Cin, kh, kw), jnp.float32) * 0.5
    bias = jax.random.normal(k_b, (Cout,), jnp.float32) * 0.1

    out = reduced_svd_conv_forward(x, w_bar, bias)
    out = jax.block_until_ready(out)

    ref = reference_forward(x, w_bar, bias)
    assert out.shape == (N, Cout, H, W), out.shape
    # bf16 MXU operands / f32 accumulation on both paths -> loose-ish tolerance
    assert jnp.allclose(out, ref, rtol=2e-2, atol=2e-2), float(
        jnp.max(jnp.abs(out - ref)))

    print("KERNEL_OK")
</pallas_src>

<mosaic_0001>
module attributes {stable_mosaic.version = 11 : i64} {
  func.func @_svd_reconstruct_kernel(%arg0: memref<8x8xf32, #tpu.memory_space<vmem>>, %arg1: memref<1x8xf32, #tpu.memory_space<vmem>>, %arg2: memref<8x36xf32, #tpu.memory_space<vmem>>, %arg3: memref<8x36xf32, #tpu.memory_space<vmem>>) attributes {dimension_semantics = [], scalar_prefetch = 0 : i64, scratch_operands = 0 : i64, tpu.core_type = #tpu.core_type<tc>} {
    %c0 = arith.constant 0 : index
    %c0_0 = arith.constant 0 : index
    %0 = vector.load %arg0[%c0, %c0_0] : memref<8x8xf32, #tpu.memory_space<vmem>>, vector<8x8xf32>
    %c0_1 = arith.constant 0 : index
    %c0_2 = arith.constant 0 : index
    %1 = vector.load %arg1[%c0_1, %c0_2] : memref<1x8xf32, #tpu.memory_space<vmem>>, vector<1x8xf32>
    %2 = vector.broadcast %1 : vector<1x8xf32> to vector<8x8xf32>
    %3 = arith.mulf %0, %2 : vector<8x8xf32>
    %c0_3 = arith.constant 0 : index
    %c0_4 = arith.constant 0 : index
    %4 = vector.load %arg2[%c0_3, %c0_4] : memref<8x36xf32, #tpu.memory_space<vmem>>, vector<8x36xf32>
    %cst = arith.constant dense<0.000000e+00> : vector<8x36xf32>
    %5 = tpu.matmul %3, %4, %cst {dimension_numbers = #tpu.dot_dimension_numbers<[1], [0], [0], [1], [0, 0, 1, 1], [], []>} : vector<8x8xf32>, vector<8x36xf32>, vector<8x36xf32> -> vector<8x36xf32>
    %c0_5 = arith.constant 0 : index
    %c0_6 = arith.constant 0 : index
    %6 = vector.load %arg3[%c0_5, %c0_6] : memref<8x36xf32, #tpu.memory_space<vmem>>, vector<8x36xf32>
    tpu.vector_store %arg3[%c0_5, %c0_6], %5 {strides = array<i32>} : memref<8x36xf32, #tpu.memory_space<vmem>>, vector<8x36xf32>,
    return
  }
}

module attributes {stable_mosaic.version = 11 : i64} {
  func.func @_conv3x3_kernel(%arg0: i32, %arg1: memref<1x4x512xbf16, #tpu.memory_space<vmem>>, %arg2: memref<9x8x4xbf16, #tpu.memory_space<vmem>>, %arg3: memref<8x1xf32, #tpu.memory_space<vmem>>, %arg4: memref<1x8x384xf32, #tpu.memory_space<vmem>>) attributes {dimension_semantics = [#tpu.dimension_semantics<parallel>], iteration_bounds = array<i64: 2>, scalar_prefetch = 0 : i64, scratch_operands = 0 : i64, tpu.core_type = #tpu.core_type<tc>, window_params = [{transform_indices = @transform_0, window_bounds = array<i64: 1, 4, 512>}, {pipeline_mode = #tpu.pipeline_mode<synchronous>, transform_indices = @transform_1, window_bounds = array<i64: 9, 8, 4>}, {pipeline_mode = #tpu.pipeline_mode<synchronous>, transform_indices = @transform_2, window_bounds = array<i64: 8, 1>}, {transform_indices = @transform_3, window_bounds = array<i64: 1, 8, 384>}]} {
    %c0 = arith.constant 0 : index
    %c0_0 = arith.constant 0 : index
    %c0_1 = arith.constant 0 : index
    %0 = vector.load %arg1[%c0, %c0_0, %c0_1] : memref<1x4x512xbf16, #tpu.memory_space<vmem>>, vector<1x4x384xbf16>
    %1 = vector.shape_cast %0 : vector<1x4x384xbf16> to vector<4x384xbf16>
    %c0_2 = arith.constant 0 : index
    %c0_3 = arith.constant 0 : index
    %c0_4 = arith.constant 0 : index
    %2 = vector.load %arg2[%c0_2, %c0_3, %c0_4] : memref<9x8x4xbf16, #tpu.memory_space<vmem>>, vector<1x8x4xbf16>
    %3 = vector.shape_cast %2 : vector<1x8x4xbf16> to vector<8x4xbf16>
    %cst = arith.constant dense<0.000000e+00> : vector<8x384xf32>
    %4 = tpu.matmul %3, %1, %cst {dimension_numbers = #tpu.dot_dimension_numbers<[1], [0], [0], [1], [0, 0, 1, 1], [], []>} : vector<8x4xbf16>, vector<4x384xbf16>, vector<8x384xf32> -> vector<8x384xf32>
    %c0_5 = arith.constant 0 : index
    %c0_6 = arith.constant 0 : index
    %c1 = arith.constant 1 : index
    %5 = vector.load %arg1[%c0_5, %c0_6, %c1] : memref<1x4x512xbf16, #tpu.memory_space<vmem>>, vector<1x4x384xbf16>
    %6 = vector.shape_cast %5 : vector<1x4x384xbf16> to vector<4x384xbf16>
    %c1_7 = arith.constant 1 : index
    %c0_8 = arith.constant 0 : index
    %c0_9 = arith.constant 0 : index
    %7 = vector.load %arg2[%c1_7, %c0_8, %c0_9] : memref<9x8x4xbf16, #tpu.memory_space<vmem>>, vector<1x8x4xbf16>
    %8 = vector.shape_cast %7 : vector<1x8x4xbf16> to vector<8x4xbf16>
    %cst_10 = arith.constant dense<0.000000e+00> : vector<8x384xf32>
    %9 = tpu.matmul %8, %6, %cst_10 {dimension_numbers = #tpu.dot_dimension_numbers<[1], [0], [0], [1], [0, 0, 1, 1], [], []>} : vector<8x4xbf16>, vector<4x384xbf16>, vector<8x384xf32> -> vector<8x384xf32>
    %10 = arith.addf %4, %9 : vector<8x384xf32>
    %c0_11 = arith.constant 0 : index
    %c0_12 = arith.constant 0 : index
    %c2 = arith.constant 2 : index
    %11 = vector.load %arg1[%c0_11, %c0_12, %c2] : memref<1x4x512xbf16, #tpu.memory_space<vmem>>, vector<1x4x384xbf16>
    %12 = vector.shape_cast %11 : vector<1x4x384xbf16> to vector<4x384xbf16>
    %c2_13 = arith.constant 2 : index
    %c0_14 = arith.constant 0 : index
    %c0_15 = arith.constant 0 : index
    %13 = vector.load %arg2[%c2_13, %c0_14, %c0_15] : memref<9x8x4xbf16, #tpu.memory_space<vmem>>, vector<1x8x4xbf16>
    %14 = vector.shape_cast %13 : vector<1x8x4xbf16> to vector<8x4xbf16>
    %cst_16 = arith.constant dense<0.000000e+00> : vector<8x384xf32>
    %15 = tpu.matmul %14, %12, %cst_16 {dimension_numbers = #tpu.dot_dimension_numbers<[1], [0], [0], [1], [0, 0, 1, 1], [], []>} : vector<8x4xbf16>, vector<4x384xbf16>, vector<8x384xf32> -> vector<8x384xf32>
    %16 = arith.addf %10, %15 : vector<8x384xf32>
    %c0_17 = arith.constant 0 : index
    %c0_18 = arith.constant 0 : index
    %c18 = arith.constant 18 : index
    %17 = vector.load %arg1[%c0_17, %c0_18, %c18] : memref<1x4x512xbf16, #tpu.memory_space<vmem>>, vector<1x4x384xbf16>
    %18 = vector.shape_cast %17 : vector<1x4x384xbf16> to vector<4x384xbf16>
    %c3 = arith.constant 3 : index
    %c0_19 = arith.constant 0 : index
    %c0_20 = arith.constant 0 : index
    %19 = vector.load %arg2[%c3, %c0_19, %c0_20] : memref<9x8x4xbf16, #tpu.memory_space<vmem>>, vector<1x8x4xbf16>
    %20 = vector.shape_cast %19 : vector<1x8x4xbf16> to vector<8x4xbf16>
    %cst_21 = arith.constant dense<0.000000e+00> : vector<8x384xf32>
    %21 = tpu.matmul %20, %18, %cst_21 {dimension_numbers = #tpu.dot_dimension_numbers<[1], [0], [0], [1], [0, 0, 1, 1], [], []>} : vector<8x4xbf16>, vector<4x384xbf16>, vector<8x384xf32> -> vector<8x384xf32>
    %22 = arith.addf %16, %21 : vector<8x384xf32>
    %c0_22 = arith.constant 0 : index
    %c0_23 = arith.constant 0 : index
    %c19 = arith.constant 19 : index
    %23 = vector.load %arg1[%c0_22, %c0_23, %c19] : memref<1x4x512xbf16, #tpu.memory_space<vmem>>, vector<1x4x384xbf16>
    %24 = vector.shape_cast %23 : vector<1x4x384xbf16> to vector<4x384xbf16>
    %c4 = arith.constant 4 : index
    %c0_24 = arith.constant 0 : index
    %c0_25 = arith.constant 0 : index
    %25 = vector.load %arg2[%c4, %c0_24, %c0_25] : memref<9x8x4xbf16, #tpu.memory_space<vmem>>, vector<1x8x4xbf16>
    %26 = vector.shape_cast %25 : vector<1x8x4xbf16> to vector<8x4xbf16>
    %cst_26 = arith.constant dense<0.000000e+00> : vector<8x384xf32>
    %27 = tpu.matmul %26, %24, %cst_26 {dimension_numbers = #tpu.dot_dimension_numbers<[1], [0], [0], [1], [0, 0, 1, 1], [], []>} : vector<8x4xbf16>, vector<4x384xbf16>, vector<8x384xf32> -> vector<8x384xf32>
    %28 = arith.addf %22, %27 : vector<8x384xf32>
    %c0_27 = arith.constant 0 : index
    %c0_28 = arith.constant 0 : index
    %c20 = arith.constant 20 : index
    %29 = vector.load %arg1[%c0_27, %c0_28, %c20] : memref<1x4x512xbf16, #tpu.memory_space<vmem>>, vector<1x4x384xbf16>
    %30 = vector.shape_cast %29 : vector<1x4x384xbf16> to vector<4x384xbf16>
    %c5 = arith.constant 5 : index
    %c0_29 = arith.constant 0 : index
    %c0_30 = arith.constant 0 : index
    %31 = vector.load %arg2[%c5, %c0_29, %c0_30] : memref<9x8x4xbf16, #tpu.memory_space<vmem>>, vector<1x8x4xbf16>
    %32 = vector.shape_cast %31 : vector<1x8x4xbf16> to vector<8x4xbf16>
    %cst_31 = arith.constant dense<0.000000e+00> : vector<8x384xf32>
    %33 = tpu.matmul %32, %30, %cst_31 {dimension_numbers = #tpu.dot_dimension_numbers<[1], [0], [0], [1], [0, 0, 1, 1], [], []>} : vector<8x4xbf16>, vector<4x384xbf16>, vector<8x384xf32> -> vector<8x384xf32>
    %34 = arith.addf %28, %33 : vector<8x384xf32>
    %c0_32 = arith.constant 0 : index
    %c0_33 = arith.constant 0 : index
    %c36 = arith.constant 36 : index
    %35 = vector.load %arg1[%c0_32, %c0_33, %c36] : memref<1x4x512xbf16, #tpu.memory_space<vmem>>, vector<1x4x384xbf16>
    %36 = vector.shape_cast %35 : vector<1x4x384xbf16> to vector<4x384xbf16>
    %c6 = arith.constant 6 : index
    %c0_34 = arith.constant 0 : index
    %c0_35 = arith.constant 0 : index
    %37 = vector.load %arg2[%c6, %c0_34, %c0_35] : memref<9x8x4xbf16, #tpu.memory_space<vmem>>, vector<1x8x4xbf16>
    %38 = vector.shape_cast %37 : vector<1x8x4xbf16> to vector<8x4xbf16>
    %cst_36 = arith.constant dense<0.000000e+00> : vector<8x384xf32>
    %39 = tpu.matmul %38, %36, %cst_36 {dimension_numbers = #tpu.dot_dimension_numbers<[1], [0], [0], [1], [0, 0, 1, 1], [], []>} : vector<8x4xbf16>, vector<4x384xbf16>, vector<8x384xf32> -> vector<8x384xf32>
    %40 = arith.addf %34, %39 : vector<8x384xf32>
    %c0_37 = arith.constant 0 : index
    %c0_38 = arith.constant 0 : index
    %c37 = arith.constant 37 : index
    %41 = vector.load %arg1[%c0_37, %c0_38, %c37] : memref<1x4x512xbf16, #tpu.memory_space<vmem>>, vector<1x4x384xbf16>
    %42 = vector.shape_cast %41 : vector<1x4x384xbf16> to vector<4x384xbf16>
    %c7 = arith.constant 7 : index
    %c0_39 = arith.constant 0 : index
    %c0_40 = arith.constant 0 : index
    %43 = vector.load %arg2[%c7, %c0_39, %c0_40] : memref<9x8x4xbf16, #tpu.memory_space<vmem>>, vector<1x8x4xbf16>
    %44 = vector.shape_cast %43 : vector<1x8x4xbf16> to vector<8x4xbf16>
    %cst_41 = arith.constant dense<0.000000e+00> : vector<8x384xf32>
    %45 = tpu.matmul %44, %42, %cst_41 {dimension_numbers = #tpu.dot_dimension_numbers<[1], [0], [0], [1], [0, 0, 1, 1], [], []>} : vector<8x4xbf16>, vector<4x384xbf16>, vector<8x384xf32> -> vector<8x384xf32>
    %46 = arith.addf %40, %45 : vector<8x384xf32>
    %c0_42 = arith.constant 0 : index
    %c0_43 = arith.constant 0 : index
    %c38 = arith.constant 38 : index
    %47 = vector.load %arg1[%c0_42, %c0_43, %c38] : memref<1x4x512xbf16, #tpu.memory_space<vmem>>, vector<1x4x384xbf16>
    %48 = vector.shape_cast %47 : vector<1x4x384xbf16> to vector<4x384xbf16>
    %c8 = arith.constant 8 : index
    %c0_44 = arith.constant 0 : index
    %c0_45 = arith.constant 0 : index
    %49 = vector.load %arg2[%c8, %c0_44, %c0_45] : memref<9x8x4xbf16, #tpu.memory_space<vmem>>, vector<1x8x4xbf16>
    %50 = vector.shape_cast %49 : vector<1x8x4xbf16> to vector<8x4xbf16>
    %cst_46 = arith.constant dense<0.000000e+00> : vector<8x384xf32>
    %51 = tpu.matmul %50, %48, %cst_46 {dimension_numbers = #tpu.dot_dimension_numbers<[1], [0], [0], [1], [0, 0, 1, 1], [], []>} : vector<8x4xbf16>, vector<4x384xbf16>, vector<8x384xf32> -> vector<8x384xf32>
    %52 = arith.addf %46, %51 : vector<8x384xf32>
    %c0_47 = arith.constant 0 : index
    %c0_48 = arith.constant 0 : index
    %53 = vector.load %arg3[%c0_47, %c0_48] : memref<8x1xf32, #tpu.memory_space<vmem>>, vector<8x1xf32>
    %54 = vector.broadcast %53 : vector<8x1xf32> to vector<8x384xf32>
    %55 = arith.addf %52, %54 : vector<8x384xf32>
    %c0_49 = arith.constant 0 : index
    %c0_50 = arith.constant 0 : index
    %c0_51 = arith.constant 0 : index
    %56 = vector.load %arg4[%c0_49, %c0_50, %c0_51] : memref<1x8x384xf32, #tpu.memory_space<vmem>>, vector<1x8x384xf32>
    %57 = vector.shape_cast %56 : vector<1x8x384xf32> to vector<8x384xf32>
    %58 = vector.shape_cast %55 : vector<8x384xf32> to vector<1x8x384xf32>
    tpu.vector_store %arg4[%c0_49, %c0_50, %c0_51], %58 {strides = array<i32>} : memref<1x8x384xf32, #tpu.memory_space<vmem>>, vector<1x8x384xf32>,
    return
  }
  func.func @transform_0(%arg0: i32) -> (i32, i32, i32) {
    %c0_i32 = arith.constant 0 : i32
    %c0_i32_0 = arith.constant 0 : i32
    %c0_i32_1 = arith.constant 0 : i32
    return %arg0, %c0_i32, %c0_i32_0 : i32, i32, i32
  }
  func.func @transform_1(%arg0: i32) -> (i32, i32, i32) {
    %c0_i32 = arith.constant 0 : i32
    %c0_i32_0 = arith.constant 0 : i32
    %c0_i32_1 = arith.constant 0 : i32
    %c0_i32_2 = arith.constant 0 : i32
    return %c0_i32, %c0_i32_0, %c0_i32_1 : i32, i32, i32
  }
  func.func @transform_2(%arg0: i32) -> (i32, i32) {
    %c0_i32 = arith.constant 0 : i32
    %c0_i32_0 = arith.constant 0 : i32
    %c0_i32_1 = arith.constant 0 : i32
    return %c0_i32, %c0_i32_0 : i32, i32
  }
  func.func @transform_3(%arg0: i32) -> (i32, i32, i32) {
    %c0_i32 = arith.constant 0 : i32
    %c0_i32_0 = arith.constant 0 : i32
    %c0_i32_1 = arith.constant 0 : i32
    return %arg0, %c0_i32, %c0_i32_0 : i32, i32, i32
  }
}

</mosaic_0001>

<llo_original>
// kernel: custom-call.31
$region0: #{custom-call.31}
  %s0 = inlined_call_operand.vmem [shape: f32[36,8], index: 0, kind: input, shape index: {}]
  %s1 = inlined_call_operand.vmem [shape: f32[36,8], index: 1, kind: output, shape index: {0}]
  %s2 = inlined_call_operand.vmem [shape: f32[8], index: 2, kind: output, shape index: {1}]
  %3 = xla_tuple %s1, %s2
  $region1: #{custom-call.31} parent=0
    #allocation0 [shape = 'u8[20480]{0}', space=vmem, size = 0x5000, scoped, tag = 'operand span for operand 0']
    #allocation1 [shape = 'u8[20480]{0}', space=vmem, size = 0x5000, scoped, tag = 'operand span for operand 1']
    #allocation2 [shape = 'u8[4096]{0}', space=vmem, size = 0x1000, scoped, tag = 'operand span for operand 2']
    #allocation3 [shape = 'u8[512]{0}', space=vmem, size = 0x400, scoped, tag = 'packed  for operand 2']
    #allocation4 [shape = 'f32[36,128]{1,0}', space=vmem, size = 0x5000, scoped, tag = 'scratch for Householder reflectors']
    // Predicated region
    $region2: #{custom-call.31} parent=1 // pred_check
      _
    $region3: #{custom-call.31} parent=1 // pred_check_branch
      %5 = sbr.rel (0) target = $region5
    $region4: #{custom-call.31} parent=1 // pred_region
      // Predicated region
      $region6: #{custom-call.31} parent=4 // pred_check
        _
      $region7: #{custom-call.31} parent=4 // pred_check_branch
        %7 = sbr.rel (0) target = $region9
      $region8: #{custom-call.31} parent=4 // pred_region
        // Predicated region
        $region21: #{custom-call.31} parent=8 // pred_check
          _
        $region22: #{custom-call.31} parent=8 // pred_check_branch
          %31 = sbr.rel (0) target = $region24
        $region23: #{custom-call.31} parent=8 // pred_region
          loop: start=0, step=1, limit=1
          $region25: #{custom-call.31} parent=23 // loop_pre_header
            _
          $region26: #{custom-call.31} parent=23 // loop_header
            %s33 = sphi 0, %s37
            %p34 = scmp.ge.s32.totalorder %s33, 1
            %s38 = sphi %s0, %s0
            %s39 = sphi [#allocation0], [#allocation0]
          $region27: #{custom-call.31} parent=23 // loop_header_branch
            %36 = sbr.rel (%p34) target = $region31
          $region28: #{custom-call.31} parent=23 // loop_body
            %v40 = vld [vmem:[%s38] sm:$0xff]
            %41 = vst [vmem:[%s39] sm:$0xff] %v40
            %v42 = vld [vmem:[%s38 + $0x8] sm:$0xff]
            %43 = vst [vmem:[%s39 + $0x8] sm:$0xff] %v42
            %v44 = vld [vmem:[%s38 + $0x10] sm:$0xff]
            %45 = vst [vmem:[%s39 + $0x10] sm:$0xff] %v44
            %v46 = vld [vmem:[%s38 + $0x18] sm:$0xff]
            %47 = vst [vmem:[%s39 + $0x18] sm:$0xff] %v46
            %v48 = vld [vmem:[%s38 + $0x20] sm:$0xff]
            %49 = vst [vmem:[%s39 + $0x20] sm:$0xff] %v48
          $region29: #{custom-call.31} parent=23 // loop_footer
            %s37 = sadd.s32 1, %s33
          $region30: #{custom-call.31} parent=23 // loop_footer_branch
            %32 = sbr.rel target = $region26
          $region31: #{custom-call.31} parent=23 // loop_exit
            _
        $region24: #{custom-call.31} parent=8 // pred_fallthru
          _
        // Predicated region
        $region32: #{custom-call.31} parent=8 // pred_check
          _
        $region33: #{custom-call.31} parent=8 // pred_check_branch
          %51 = sbr.rel target = $region35
        $region34: #{custom-call.31} parent=8 // pred_region
          _
        $region35: #{custom-call.31} parent=8 // pred_fallthru
          _
      $region9: #{custom-call.31} parent=4 // pred_fallthru
        _
      // Predicated region
      $region10: #{custom-call.31} parent=4 // pred_check
        _
      $region11: #{custom-call.31} parent=4 // pred_check_branch
        %9 = sbr.rel target = $region13
      $region12: #{custom-call.31} parent=4 // pred_region
        %s11 = ssub.s32 256, 1
        loop: start=0, step=1, limit=1
        $region14: #{custom-call.31} parent=12 // loop_pre_header
          _
        $region15: #{custom-call.31} parent=12 // loop_header
          %s13 = sphi 0, %s17
          %p14 = scmp.ge.s32.totalorder %s13, 1
          %s18 = sphi %s0, %s0
          %s19 = sphi [#allocation0], [#allocation0]
        $region16: #{custom-call.31} parent=12 // loop_header_branch
          %16 = sbr.rel (%p14) target = $region20
        $region17: #{custom-call.31} parent=12 // loop_body
          %v20 = vld [vmem:[%s18] sm:%s11]
          %21 = vst [vmem:[%s19] sm:%s11] %v20
          %v22 = vld [vmem:[%s18 + $0x8] sm:%s11]
          %23 = vst [vmem:[%s19 + $0x8] sm:%s11] %v22
          %v24 = vld [vmem:[%s18 + $0x10] sm:%s11]
          %25 = vst [vmem:[%s19 + $0x10] sm:%s11] %v24
          %v26 = vld [vmem:[%s18 + $0x18] sm:%s11]
          %27 = vst [vmem:[%s19 + $0x18] sm:%s11] %v26
          %v28 = vld [vmem:[%s18 + $0x20] sm:%s11]
          %29 = vst [vmem:[%s19 + $0x20] sm:%s11] %v28
        $region18: #{custom-call.31} parent=12 // loop_footer
          %s17 = sadd.s32 1, %s13
        $region19: #{custom-call.31} parent=12 // loop_footer_branch
          %12 = sbr.rel target = $region15
        $region20: #{custom-call.31} parent=12 // loop_exit
          _
      $region13: #{custom-call.31} parent=4 // pred_fallthru
        _
    $region5: #{custom-call.31} parent=1 // pred_fallthru
      _
    %52 = vnop
    %v53 = vld [vmem:[#allocation0] sm:$0xff]
    %54 = vst [vmem:[#allocation1] sm:$0xff] %v53
    %s55 = scalar_lea.vmem [#allocation1], 8
    %s56 = scalar_lea.vmem [#allocation0], 8
    %v57 = vld [vmem:[%s56] sm:$0xff]
    %58 = vst [vmem:[%s55] sm:$0xff] %v57
    %s59 = scalar_lea.vmem [#allocation1], 16
    %s60 = scalar_lea.vmem [#allocation0], 16
    %v61 = vld [vmem:[%s60] sm:$0xff]
    %62 = vst [vmem:[%s59] sm:$0xff] %v61
    %s63 = scalar_lea.vmem [#allocation1], 24
    %s64 = scalar_lea.vmem [#allocation0], 24
    %v65 = vld [vmem:[%s64] sm:$0xff]
    %66 = vst [vmem:[%s63] sm:$0xff] %v65
    %s67 = scalar_lea.vmem [#allocation1], 32
    %s68 = scalar_lea.vmem [#allocation0], 32
    %v69 = vld [vmem:[%s68] sm:$0xff]
    %70 = vst [vmem:[%s67] sm:$0xff] %v69
    %71 = vst [vmem:[#allocation2] sm:$0x1] 0.0
    loop: start=0, step=1, limit=8
    $region36: #{custom-call.31} parent=1 // loop_pre_header
      _
    $region37: #{custom-call.31} parent=1 // loop_header
      %s73 = sphi 0, %s77
      %p74 = scmp.ge.s32.totalorder %s73, 8
    $region38: #{custom-call.31} parent=1 // loop_header_branch
      %76 = sbr.rel (%p74) target = $region42
    $region39: #{custom-call.31} parent=1 // loop_body
      %v78 = vld [vmem:[#allocation1] sm:$0xff]
      %v79 = vlaneseq
      %v80 = vshrl.u32 %v79, 7
      %v82 = vstv %s73
      %vm83 = vcmp.gt.s32.totalorder %v80, %v82
      %v84 = vsel %vm83, %v78, 0.0
      %v85 = vmul.f32 %v84, %v84
      %s86 = scalar_lea.vmem [#allocation1], 8
      %v87 = vld [vmem:[%s86] sm:$0xff]
      %v88 = vlaneseq
      %v89 = vshrl.u32 %v88, 7
      %v90 = vadd.s32 %v89, 8
      %v91 = vstv %s73
      %vm92 = vcmp.gt.s32.totalorder %v90, %v91
      %v93 = vsel %vm92, %v87, 0.0
      %v94 = vmul.f32 %v93, %v93
      %v95 = vadd.f32 %v85, %v94
      %s96 = scalar_lea.vmem [#allocation1], 16
      %v97 = vld [vmem:[%s96] sm:$0xff]
      %v98 = vlaneseq
      %v99 = vshrl.u32 %v98, 7
      %v100 = vadd.s32 %v99, 16
      %v101 = vstv %s73
      %vm102 = vcmp.gt.s32.totalorder %v100, %v101
      %v103 = vsel %vm102, %v97, 0.0
      %v104 = vmul.f32 %v103, %v103
      %v105 = vadd.f32 %v95, %v104
      %s106 = scalar_lea.vmem [#allocation1], 24
      %v107 = vld [vmem:[%s106] sm:$0xff]
      %v108 = vlaneseq
      %v109 = vshrl.u32 %v108, 7
      %v110 = vadd.s32 %v109, 24
      %v111 = vstv %s73
      %vm112 = vcmp.gt.s32.totalorder %v110, %v111
      %v113 = vsel %vm112, %v107, 0.0
      %v114 = vmul.f32 %v113, %v113
      %v115 = vadd.f32 %v105, %v114
      %s116 = scalar_lea.vmem [#allocation1], 32
      %v117 = vld [vmem:[%s116] sm:$0xff]
      %v118 = vlaneseq
      %v119 = vshrl.u32 %v118, 7
      %v120 = vadd.s32 %v119, 32
      %v121 = vstv %s73
      %vm122 = vcmp.gt.s32.totalorder %v120, %v121
      %vm123 = vcmp.lt.s32.totalorder %v120, 36
      %vm124 = vmand %vm122, %vm123
      %v125 = vsel %vm124, %v117, 0.0
      %v126 = vmul.f32 %v125, %v125
      %v127 = vadd.f32 %v115, %v126
      %v128 = vrot.slane %v127, 4
      %v129 = vadd.f32 %v127, %v128
      %v130 = vrot.slane %v129, 2
      %v131 = vadd.f32 %v129, %v130
      %v132 = vrot.slane %v131, 1
      %v133 = vadd.f32 %v131, %v132
      %v134 = vrsqrt.pop %v133
      %v135 = vmul.f32 %v133, %v134
      %vm136 = vcmp.eq.f32.partialorder %v133, inf
      %v137 = vsel %vm136, %v133, %v135
      %vm138 = vcmp.eq.f32.partialorder %v133, 0.0
      %v139 = vand.u32 %v133, 2147483648
      %v140 = vsel %vm138, %v139, %v137
      %vm141 = vcmp.eq.f32.partialorder %v133, 0.0
      %s142 = sshrl.u32 %s73, 3
      %s143 = sand.u32 %s73, 7
      %s144 = smul.addr %s142, 8
      %s145 = sadd.s32 %s143, %s144
      %s146 = scalar_lea.vmem [#allocation1], %s145
      %v147 = vld [vmem:[%s146] ss:$0 sm:$0xff]
      %v148 = vand.u32 2147483647, %v147
      %v149 = vmax.f32 %v148, 0.0
      %v150 = vand.u32 2147483647, %v140
      %v151 = vmax.f32 %v149, %v150
      %v152 = vrcp.pop %v151
      %v153 = vmul.f32 %v148, %v152
      %v154 = vmul.f32 %v153, %v153
      %v155 = vrcp.pop %v151
      %v156 = vmul.f32 0.0, %v155
      %v157 = vmul.f32 %v156, %v156
      %v158 = vadd.f32 %v154, %v157
      %v159 = vrcp.pop %v151
      %v160 = vmul.f32 %v150, %v159
      %v161 = vmul.f32 %v160, %v160
      %v162 = vadd.f32 %v158, %v161
      %vm163 = vcmp.eq.f32.partialorder %v151, 0.0
      %v164 = vrsqrt.pop %v162
      %v165 = vmul.f32 %v162, %v164
      %vm166 = vcmp.eq.f32.partialorder %v162, inf
      %v167 = vsel %vm166, %v162, %v165
      %vm168 = vcmp.eq.f32.partialorder %v162, 0.0
      %v169 = vand.u32 %v162, 2147483648
      %v170 = vsel %vm168, %v169, %v167
      %v171 = vmul.f32 %v151, %v170
      %v172 = vsel %vm163, 0.0, %v171
      %vm173 = vcmp.lt.f32.partialorder %v147, 0.0
      %v174 = vxor.u32 %v172, 2147483648
      %v175 = vsel %vm173, %v172, %v174
      %v176 = vsub.f32 %v175, %v147
      %v177 = vrcp.pop %v175
      %v178 = vmul.f32 %v176, %v177
      %v179 = vsel %vm141, %v147, %v175
      %v180 = vsel %vm141, 0.0, %v178
      %v181 = vsub.f32 %v147, %v179
      %s182 = smov [#allocation1]
      %v183 = vlaneseq
      %v184 = vshrl.u32 %v183, 7
      %v185 = vmov %v184
      %v186 = vld [vmem:[%s182] sm:$0xff]
      %v188 = vstv %s73
      %vm189 = vcmp.gt.s32.totalorder %v185, %v188
      %v190 = vsel %vm189, %v186, 0.0
      %v191 = vrcp.pop %v181
      %v192 = vmul.f32 %v190, %v191
      %v193 = vsel %vm141, 0.0, %v192
      %v194 = vstv %s73
      %v195 = vlaneseq
      %v196 = vand.u32 %v195, 127
      %vm197 = vcmp.eq.s32.totalorder %v196, %v194
      %v198 = vsel %vm197, %v193, 0.0
      %199 = vadd.xlane.f32.xlu0 %v198
      %v200 = vpop.xlane.xlu0 %199
      %201 = vst [vmem:[#allocation4] sm:$0xff] %v200
      %s202 = scalar_lea.vmem %s182, 8
      %v203 = vld [vmem:[%s202] sm:$0xff]
      %v204 = vadd.s32 %v185, 8
      %v205 = vstv %s73
      %vm206 = vcmp.gt.s32.totalorder %v204, %v205
      %v207 = vsel %vm206, %v203, 0.0
      %v208 = vrcp.pop %v181
      %v209 = vmul.f32 %v207, %v208
      %v210 = vsel %vm141, 0.0, %v209
      %v211 = vstv %s73
      %v212 = vlaneseq
      %v213 = vand.u32 %v212, 127
      %vm214 = vcmp.eq.s32.totalorder %v213, %v211
      %v215 = vsel %vm214, %v210, 0.0
      %216 = vadd.xlane.f32.xlu0 %v215
      %v217 = vpop.xlane.xlu0 %216
      %s218 = scalar_lea.vmem [#allocation4], 8
      %219 = vst [vmem:[%s218] sm:$0xff] %v217
      %s220 = scalar_lea.vmem %s182, 16
      %v221 = vld [vmem:[%s220] sm:$0xff]
      %v222 = vadd.s32 %v185, 16
      %v223 = vstv %s73
      %vm224 = vcmp.gt.s32.totalorder %v222, %v223
      %v225 = vsel %vm224, %v221, 0.0
      %v226 = vrcp.pop %v181
      %v227 = vmul.f32 %v225, %v226
      %v228 = vsel %vm141, 0.0, %v227
      %v229 = vstv %s73
      %v230 = vlaneseq
      %v231 = vand.u32 %v230, 127
      %vm232 = vcmp.eq.s32.totalorder %v231, %v229
      %v233 = vsel %vm232, %v228, 0.0
      %234 = vadd.xlane.f32.xlu0 %v233
      %v235 = vpop.xlane.xlu0 %234
      %s236 = scalar_lea.vmem [#allocation4], 16
      %237 = vst [vmem:[%s236] sm:$0xff] %v235
      %s238 = scalar_lea.vmem %s182, 24
      %v239 = vld [vmem:[%s238] sm:$0xff]
      %v240 = vadd.s32 %v185, 24
      %v241 = vstv %s73
      %vm242 = vcmp.gt.s32.totalorder %v240, %v241
      %v243 = vsel %vm242, %v239, 0.0
      %v244 = vrcp.pop %v181
      %v245 = vmul.f32 %v243, %v244
      %v246 = vsel %vm141, 0.0, %v245
      %v247 = vstv %s73
      %v248 = vlaneseq
      %v249 = vand.u32 %v248, 127
      %vm250 = vcmp.eq.s32.totalorder %v249, %v247
      %v251 = vsel %vm250, %v246, 0.0
      %252 = vadd.xlane.f32.xlu0 %v251
      %v253 = vpop.xlane.xlu0 %252
      %s254 = scalar_lea.vmem [#allocation4], 24
      %255 = vst [vmem:[%s254] sm:$0xff] %v253
      %s256 = scalar_lea.vmem %s182, 32
      %v257 = vld [vmem:[%s256] sm:$0xff]
      %v258 = vadd.s32 %v185, 32
      %v259 = vstv %s73
      %vm260 = vcmp.gt.s32.totalorder %v258, %v259
      %vm261 = vcmp.lt.s32.totalorder %v258, 36
      %vm262 = vmand %vm260, %vm261
      %v263 = vsel %vm262, %v257, 0.0
      %v264 = vrcp.pop %v181
      %v265 = vmul.f32 %v263, %v264
      %v266 = vsel %vm141, 0.0, %v265
      %v267 = vstv %s73
      %v268 = vlaneseq
      %v269 = vand.u32 %v268, 127
      %vm270 = vcmp.eq.s32.totalorder %v269, %v267
      %v271 = vsel %vm270, %v266, 0.0
      %272 = vadd.xlane.f32.xlu0 %v271
      %v273 = vpop.xlane.xlu0 %272
      %s274 = scalar_lea.vmem [#allocation4], 32
      %275 = vst [vmem:[%s274] sm:$0xff] %v273
      %s276 = scalar_lea.vmem [#allocation4], %s73
      %277 = vst [vmem:[%s276] sm:$0x1] 1.0
      %v278 = vstv %s73
      %v279 = vlaneseq
      %v280 = vand.u32 %v279, 127
      %vm281 = vcmp.eq.s32.totalorder %v280, %v278
      %v282 = vsel %vm281, %v180, 0.0
      %283 = vadd.xlane.f32.xlu0 %v282
      %v284 = vpop.xlane.xlu0 %283
      %v285 = vstv %s73
      %v286 = vlaneseq
      %v287 = vand.u32 %v286, 127
      %vm288 = vcmp.eq.s32.totalorder %v287, %v285
      %v289 = vld [vmem:[#allocation2] ss:$0 sm:$0xff]
      %v290 = vsel %vm288, %v284, %v289
      %291 = vst [vmem:[#allocation2] sm:$0x1] %v290
      %s292 = smov [#allocation1]
      %s293 = smov [#allocation4]
      %v294 = vlaneseq
      %v295 = vshrl.u32 %v294, 7
      %v296 = vmov %v295
      %v298 = vld [vmem:[%s293] sm:$0xff]
      %v299 = vld [vmem:[%s292] sm:$0xff]
      %v300 = vmul.f32 %v298, %v299
      %v301 = vadd.s32 %v296, 8
      %s302 = scalar_lea.vmem %s293, 8
      %v303 = vld [vmem:[%s302] sm:$0xff]
      %s304 = scalar_lea.vmem %s292, 8
      %v305 = vld [vmem:[%s304] sm:$0xff]
      %v306 = vmul.f32 %v303, %v305
      %v307 = vadd.f32 %v300, %v306
      %v308 = vadd.s32 %v296, 16
      %s309 = scalar_lea.vmem %s293, 16
      %v310 = vld [vmem:[%s309] sm:$0xff]
      %s311 = scalar_lea.vmem %s292, 16
      %v312 = vld [vmem:[%s311] sm:$0xff]
      %v313 = vmul.f32 %v310, %v312
      %v314 = vadd.f32 %v307, %v313
      %v315 = vadd.s32 %v296, 24
      %s316 = scalar_lea.vmem %s293, 24
      %v317 = vld [vmem:[%s316] sm:$0xff]
      %s318 = scalar_lea.vmem %s292, 24
      %v319 = vld [vmem:[%s318] sm:$0xff]
      %v320 = vmul.f32 %v317, %v319
      %v321 = vadd.f32 %v314, %v320
      %v322 = vadd.s32 %v296, 32
      %s323 = scalar_lea.vmem %s293, 32
      %v324 = vld [vmem:[%s323] sm:$0xff]
      %s325 = scalar_lea.vmem %s292, 32
      %v326 = vld [vmem:[%s325] sm:$0xff]
      %v327 = vmul.f32 %v324, %v326
      %vm328 = vcmp.lt.s32.totalorder %v322, 36
      %v329 = vsel %vm328, %v327, 0.0
      %v330 = vadd.f32 %v321, %v329
      %v331 = vrot.slane %v330, 4
      %v332 = vadd.f32 %v330, %v331
      %v333 = vrot.slane %v332, 2
      %v334 = vadd.f32 %v332, %v333
      %v335 = vrot.slane %v334, 1
      %v336 = vadd.f32 %v334, %v335
      %s337 = smov %s292
      %s338 = smov %s293
      %v339 = vlaneseq
      %v340 = vshrl.u32 %v339, 7
      %v341 = vmov %v340
      %v342 = vmul.f32 %v336, %v284
      %v344 = vlaneseq
      %v345 = vand.u32 %v344, 127
      %v346 = vld [vmem:[%s338] sm:$0xff]
      %v347 = vmul.f32 %v346, %v342
      %v348 = vld [vmem:[%s337] sm:$0xff]
      %v349 = vstv %s73
      %vm350 = vcmp.gt.s32.totalorder %v345, %v349
      %v351 = vsub.f32 %v348, %v347
      %v352 = vsel %vm350, %v351, %v348
      %v353 = vstv %s73
      %v354 = vlaneseq
      %v355 = vand.u32 %v354, 127
      %vm356 = vcmp.eq.s32.totalorder %v355, %v353
      %v357 = vstv %s73
      %vm358 = vcmp.ge.s32.totalorder %v341, %v357
      %vm359 = vmand %vm356, %vm358
      %v360 = vsel %vm359, %v346, %v352
      %361 = vst [vmem:[%s337] sm:$0xff] %v360
      %v362 = vadd.s32 %v341, 8
      %v363 = vlaneseq
      %v364 = vand.u32 %v363, 127
      %s365 = scalar_lea.vmem %s338, 8
      %v366 = vld [vmem:[%s365] sm:$0xff]
      %v367 = vmul.f32 %v366, %v342
      %s368 = scalar_lea.vmem %s337, 8
      %v369 = vld [vmem:[%s368] sm:$0xff]
      %v370 = vstv %s73
      %vm371 = vcmp.gt.s32.totalorder %v364, %v370
      %v372 = vsub.f32 %v369, %v367
      %v373 = vsel %vm371, %v372, %v369
      %v374 = vstv %s73
      %v375 = vlaneseq
      %v376 = vand.u32 %v375, 127
      %vm377 = vcmp.eq.s32.totalorder %v376, %v374
      %v378 = vstv %s73
      %vm379 = vcmp.ge.s32.totalorder %v362, %v378
      %vm380 = vmand %vm377, %vm379
      %v381 = vsel %vm380, %v366, %v373
      %382 = vst [vmem:[%s368] sm:$0xff] %v381
      %v383 = vadd.s32 %v341, 16
      %v384 = vlaneseq
      %v385 = vand.u32 %v384, 127
      %s386 = scalar_lea.vmem %s338, 16
      %v387 = vld [vmem:[%s386] sm:$0xff]
      %v388 = vmul.f32 %v387, %v342
      %s389 = scalar_lea.vmem %s337, 16
      %v390 = vld [vmem:[%s389] sm:$0xff]
      %v391 = vstv %s73
      %vm392 = vcmp.gt.s32.totalorder %v385, %v391
      %v393 = vsub.f32 %v390, %v388
      %v394 = vsel %vm392, %v393, %v390
      %v395 = vstv %s73
      %v396 = vlaneseq
      %v397 = vand.u32 %v396, 127
      %vm398 = vcmp.eq.s32.totalorder %v397, %v395
      %v399 = vstv %s73
      %vm400 = vcmp.ge.s32.totalorder %v383, %v399
      %vm401 = vmand %vm398, %vm400
      %v402 = vsel %vm401, %v387, %v394
      %403 = vst [vmem:[%s389] sm:$0xff] %v402
      %v404 = vadd.s32 %v341, 24
      %v405 = vlaneseq
      %v406 = vand.u32 %v405, 127
      %s407 = scalar_lea.vmem %s338, 24
      %v408 = vld [vmem:[%s407] sm:$0xff]
      %v409 = vmul.f32 %v408, %v342
      %s410 = scalar_lea.vmem %s337, 24
      %v411 = vld [vmem:[%s410] sm:$0xff]
      %v412 = vstv %s73
      %vm413 = vcmp.gt.s32.totalorder %v406, %v412
      %v414 = vsub.f32 %v411, %v409
      %v415 = vsel %vm413, %v414, %v411
      %v416 = vstv %s73
      %v417 = vlaneseq
      %v418 = vand.u32 %v417, 127
      %vm419 = vcmp.eq.s32.totalorder %v418, %v416
      %v420 = vstv %s73
      %vm421 = vcmp.ge.s32.totalorder %v404, %v420
      %vm422 = vmand %vm419, %vm421
      %v423 = vsel %vm422, %v408, %v415
      %424 = vst [vmem:[%s410] sm:$0xff] %v423
      %v425 = vadd.s32 %v341, 32
      %v426 = vlaneseq
      %v427 = vand.u32 %v426, 127
      %s428 = scalar_lea.vmem %s338, 32
      %v429 = vld [vmem:[%s428] sm:$0xff]
      %v430 = vmul.f32 %v429, %v342
      %s431 = scalar_lea.vmem %s337, 32
      %v432 = vld [vmem:[%s431] sm:$0xff]
      %v433 = vstv %s73
      %vm434 = vcmp.gt.s32.totalorder %v427, %v433
      %v435 = vsub.f32 %v432, %v430
      %v436 = vsel %vm434, %v435, %v432
      %v437 = vstv %s73
      %v438 = vlaneseq
      %v439 = vand.u32 %v438, 127
      %vm440 = vcmp.eq.s32.totalorder %v439, %v437
      %v441 = vstv %s73
      %vm442 = vcmp.ge.s32.totalorder %v425, %v441
      %vm443 = vmand %vm440, %vm442
      %v444 = vsel %vm443, %v429, %v436
      %445 = vst [vmem:[%s431] sm:$0xff] %v444
      %s446 = scalar_lea.vmem %s337, %s73
      %v447 = vld [vmem:[%s446] ss:$0 sm:$0xff]
      %v448 = vstv %s73
      %v449 = vlaneseq
      %v450 = vand.u32 %v449, 127
      %vm451 = vcmp.eq.s32.totalorder %v450, %v448
      %v452 = vsel %vm451, %v179, %v447
      %453 = vst [vmem:[%s446] sm:$0x1] %v452
    $region40: #{custom-call.31} parent=1 // loop_footer
      %s77 = sadd.s32 1, %s73
    $region41: #{custom-call.31} parent=1 // loop_footer_branch
      %72 = sbr.rel target = $region37
    $region42: #{custom-call.31} parent=1 // loop_exit
      _
    %s455 = sshll.u32 1, 1
    %s456 = ssub.s32 %s455, 1
    %v458 = vld [vmem:[#allocation2] sm:%s456]
    %s459 = sshll.u32 1, 1
    %s460 = ssub.s32 %s459, 1
    %461 = vst [vmem:[#allocation3] sm:%s460] %v458
    // Predicated region
    $region43: #{custom-call.31} parent=1 // pred_check
      _
    $region44: #{custom-call.31} parent=1 // pred_check_branch
      %463 = sbr.rel (0) target = $region46
    $region45: #{custom-call.31} parent=1 // pred_region
      // Predicated region
      $region47: #{custom-call.31} parent=45 // pred_check
        _
      $region48: #{custom-call.31} parent=45 // pred_check_branch
        %465 = sbr.rel (0) target = $region50
      $region49: #{custom-call.31} parent=45 // pred_region
        // Predicated region
        $region62: #{custom-call.31} parent=49 // pred_check
          _
        $region63: #{custom-call.31} parent=49 // pred_check_branch
          %489 = sbr.rel (0) target = $region65
        $region64: #{custom-call.31} parent=49 // pred_region
          loop: start=0, step=1, limit=1
          $region66: #{custom-call.31} parent=64 // loop_pre_header
            _
          $region67: #{custom-call.31} parent=64 // loop_header
            %s491 = sphi 0, %s495
            %p492 = scmp.ge.s32.totalorder %s491, 1
            %s496 = sphi [#allocation1], [#allocation1]
            %s497 = sphi %s1, %s1
          $region68: #{custom-call.31} parent=64 // loop_header_branch
            %494 = sbr.rel (%p492) target = $region72
          $region69: #{custom-call.31} parent=64 // loop_body
            %v498 = vld [vmem:[%s496] sm:$0xff]
            %499 = vst [vmem:[%s497] sm:$0xff] %v498
            %v500 = vld [vmem:[%s496 + $0x8] sm:$0xff]
            %501 = vst [vmem:[%s497 + $0x8] sm:$0xff] %v500
            %v502 = vld [vmem:[%s496 + $0x10] sm:$0xff]
            %503 = vst [vmem:[%s497 + $0x10] sm:$0xff] %v502
            %v504 = vld [vmem:[%s496 + $0x18] sm:$0xff]
            %505 = vst [vmem:[%s497 + $0x18] sm:$0xff] %v504
            %v506 = vld [vmem:[%s496 + $0x20] sm:$0xff]
            %507 = vst [vmem:[%s497 + $0x20] sm:$0xff] %v506
          $region70: #{custom-call.31} parent=64 // loop_footer
            %s495 = sadd.s32 1, %s491
          $region71: #{custom-call.31} parent=64 // loop_footer_branch
            %490 = sbr.rel target = $region67
          $region72: #{custom-call.31} parent=64 // loop_exit
            _
        $region65: #{custom-call.31} parent=49 // pred_fallthru
          _
        // Predicated region
        $region73: #{custom-call.31} parent=49 // pred_check
          _
        $region74: #{custom-call.31} parent=49 // pred_check_branch
          %509 = sbr.rel target = $region76
        $region75: #{custom-call.31} parent=49 // pred_region
          _
        $region76: #{custom-call.31} parent=49 // pred_fallthru
          _
      $region50: #{custom-call.31} parent=45 // pred_fallthru
        _
      // Predicated region
      $region51: #{custom-call.31} parent=45 // pred_check
        _
      $region52: #{custom-call.31} parent=45 // pred_check_branch
        %467 = sbr.rel target = $region54
      $region53: #{custom-call.31} parent=45 // pred_region
        %s469 = ssub.s32 256, 1
        loop: start=0, step=1, limit=1
        $region55: #{custom-call.31} parent=53 // loop_pre_header
          _
        $region56: #{custom-call.31} parent=53 // loop_header
          %s471 = sphi 0, %s475
          %p472 = scmp.ge.s32.totalorder %s471, 1
          %s476 = sphi [#allocation1], [#allocation1]
          %s477 = sphi %s1, %s1
        $region57: #{custom-call.31} parent=53 // loop_header_branch
          %474 = sbr.rel (%p472) target = $region61
        $region58: #{custom-call.31} parent=53 // loop_body
          %v478 = vld [vmem:[%s476] sm:%s469]
          %479 = vst [vmem:[%s477] sm:%s469] %v478
          %v480 = vld [vmem:[%s476 + $0x8] sm:%s469]
          %481 = vst [vmem:[%s477 + $0x8] sm:%s469] %v480
          %v482 = vld [vmem:[%s476 + $0x10] sm:%s469]
          %483 = vst [vmem:[%s477 + $0x10] sm:%s469] %v482
          %v484 = vld [vmem:[%s476 + $0x18] sm:%s469]
          %485 = vst [vmem:[%s477 + $0x18] sm:%s469] %v484
          %v486 = vld [vmem:[%s476 + $0x20] sm:%s469]
          %487 = vst [vmem:[%s477 + $0x20] sm:%s469] %v486
        $region59: #{custom-call.31} parent=53 // loop_footer
          %s475 = sadd.s32 1, %s471
        $region60: #{custom-call.31} parent=53 // loop_footer_branch
          %470 = sbr.rel target = $region56
        $region61: #{custom-call.31} parent=53 // loop_exit
          _
      $region54: #{custom-call.31} parent=45 // pred_fallthru
        _
    $region46: #{custom-call.31} parent=1 // pred_fallthru
      _
    %510 = vnop
    // Predicated region
    $region77: #{custom-call.31} parent=1 // pred_check
      _
    $region78: #{custom-call.31} parent=1 // pred_check_branch
      %512 = sbr.rel (0) target = $region80
    $region79: #{custom-call.31} parent=1 // pred_region
      // Predicated region
      $region81: #{custom-call.31} parent=79 // pred_check
        _
      $region82: #{custom-call.31} parent=79 // pred_check_branch
        %514 = sbr.rel (0) target = $region84
      $region83: #{custom-call.31} parent=79 // pred_region
        // Predicated region
        $region85: #{custom-call.31} parent=83 // pred_check
          _
        $region86: #{custom-call.31} parent=83 // pred_check_branch
          %516 = sbr.rel target = $region88
        $region87: #{custom-call.31} parent=83 // pred_region
          // Predicated region
          $region100: #{custom-call.31} parent=87 // pred_check
            _
          $region101: #{custom-call.31} parent=87 // pred_check_branch
            %532 = sbr.rel (0) target = $region103
          $region102: #{custom-call.31} parent=87 // pred_region
            %s534 = ssub.s32 2, 1
            loop: start=0, step=1, limit=1
            $region104: #{custom-call.31} parent=102 // loop_pre_header
              _
            $region105: #{custom-call.31} parent=102 // loop_header
              %s536 = sphi 0, %s540
              %p537 = scmp.ge.s32.totalorder %s536, 1
              %s541 = sphi [#allocation3], [#allocation3]
              %s542 = sphi %s2, %s2
            $region106: #{custom-call.31} parent=102 // loop_header_branch
              %539 = sbr.rel (%p537) target = $region110
            $region107: #{custom-call.31} parent=102 // loop_body
              %v543 = vld [vmem:[%s541] sm:%s534]
              %544 = vst [vmem:[%s542] sm:%s534] %v543
            $region108: #{custom-call.31} parent=102 // loop_footer
              %s540 = sadd.s32 1, %s536
            $region109: #{custom-call.31} parent=102 // loop_footer_branch
              %535 = sbr.rel target = $region105
            $region110: #{custom-call.31} parent=102 // loop_exit
              _
          $region103: #{custom-call.31} parent=87 // pred_fallthru
            _
        $region88: #{custom-call.31} parent=83 // pred_fallthru
          _
        // Predicated region
        $region89: #{custom-call.31} parent=83 // pred_check
          _
        $region90: #{custom-call.31} parent=83 // pred_check_branch
          %518 = sbr.rel (0) target = $region92
        $region91: #{custom-call.31} parent=83 // pred_region
          %s520 = ssub.s32 2, 1
          loop: start=0, step=1, limit=1
          $region93: #{custom-call.31} parent=91 // loop_pre_header
            _
          $region94: #{custom-call.31} parent=91 // loop_header
            %s522 = sphi 0, %s526
            %p523 = scmp.ge.s32.totalorder %s522, 1
            %s527 = sphi [#allocation3], [#allocation3]
            %s528 = sphi %s2, %s2
          $region95: #{custom-call.31} parent=91 // loop_header_branch
            %525 = sbr.rel (%p523) target = $region99
          $region96: #{custom-call.31} parent=91 // loop_body
            %v529 = vld [vmem:[%s527] sm:%s520]
            %530 = vst [vmem:[%s528] sm:%s520] %v529
          $region97: #{custom-call.31} parent=91 // loop_footer
            %s526 = sadd.s32 1, %s522
          $region98: #{custom-call.31} parent=91 // loop_footer_branch
            %521 = sbr.rel target = $region94
          $region99: #{custom-call.31} parent=91 // loop_exit
            _
        $region92: #{custom-call.31} parent=83 // pred_fallthru
          _
      $region84: #{custom-call.31} parent=79 // pred_fallthru
        _
      %545 = vnop
    $region80: #{custom-call.31} parent=1 // pred_fallthru
      _
    // Predicated region
    $region111: #{custom-call.31} parent=1 // pred_check
      _
    $region112: #{custom-call.31} parent=1 // pred_check_branch
      %547 = sbr.rel (0) target = $region114
    $region113: #{custom-call.31} parent=1 // pred_region
      _
    $region114: #{custom-call.31} parent=1 // pred_fallthru
      _

// kernel: custom-call.33
$region0: #{custom-call.33}
  %s0 = inlined_call_operand.vmem [shape: f32[8,8], index: 0, kind: input, shape index: {}]
  %s1 = inlined_call_operand.vmem [shape: f32[8,8], index: 1, kind: output, shape index: {}]
  $region1: #{custom-call.33} parent=0
    #allocation0 [shape = 'u8[4096]{0}', space=vmem, size = 0x1000, scoped, tag = 'operand span for operand 0']
    #allocation1 [shape = 'u8[4096]{0}', space=vmem, size = 0x1000, scoped, tag = 'operand span for operand 1']
    %p3 = scmp.gt.s32.totalorder 8, 0
    // Predicated region
    $region2: #{custom-call.33} parent=1 // pred_check
      %p4 = pneg %p3
    $region3: #{custom-call.33} parent=1 // pred_check_branch
      %6 = sbr.rel (%p4) target = $region5
    $region4: #{custom-call.33} parent=1 // pred_region
      %s7 = sshra.s32 8, 3
      %p8 = scmp.gt.s32.totalorder %s7, 0
      // Predicated region
      $region6: #{custom-call.33} parent=4 // pred_check
        %p9 = pneg %p8
      $region7: #{custom-call.33} parent=4 // pred_check_branch
        %11 = sbr.rel (%p9) target = $region9
      $region8: #{custom-call.33} parent=4 // pred_region
        %s12 = ssub.s32 %s7, 1
        %s13 = smul.u32 %s12, 128
        %s14 = sshra.s32 %s13, 4
        %s15 = scalar_lea.vmem %s0, %s14
        %v16 = vld [vmem:[%s0] sm:$0xff]
        // While loop
        $region10: #{custom-call.33} parent=8 // loop_pre_header
          _
        $region11: #{custom-call.33} parent=8 // loop_header
          %s17 = sphi %s0, %s39
          %s18 = sphi [#allocation0], %s40
          %v19 = vphi %v16, %v41
          %s20 = ssub.s32 %s15, 64
          %p21 = scmp.gt.s32.totalorder %s17, %s20
        $region12: #{custom-call.33} parent=8 // loop_header_branch
          %23 = sbr.rel (%p21) target = $region16
        $region13: #{custom-call.33} parent=8 // loop_body
          %24 = vst [vmem:[%s18] sm:$0xff] %v19
          %v25 = vld [vmem:[%s17 + $0x8] sm:$0xff]
          %26 = vst [vmem:[%s18 + $0x8] sm:$0xff] %v25
          %v27 = vld [vmem:[%s17 + $0x10] sm:$0xff]
          %28 = vst [vmem:[%s18 + $0x10] sm:$0xff] %v27
          %v29 = vld [vmem:[%s17 + $0x18] sm:$0xff]
          %30 = vst [vmem:[%s18 + $0x18] sm:$0xff] %v29
          %v31 = vld [vmem:[%s17 + $0x20] sm:$0xff]
          %32 = vst [vmem:[%s18 + $0x20] sm:$0xff] %v31
          %v33 = vld [vmem:[%s17 + $0x28] sm:$0xff]
          %34 = vst [vmem:[%s18 + $0x28] sm:$0xff] %v33
          %v35 = vld [vmem:[%s17 + $0x30] sm:$0xff]
          %36 = vst [vmem:[%s18 + $0x30] sm:$0xff] %v35
          %v37 = vld [vmem:[%s17 + $0x38] sm:$0xff]
          %38 = vst [vmem:[%s18 + $0x38] sm:$0xff] %v37
        $region14: #{custom-call.33} parent=8 // loop_footer
          %s39 = scalar_lea.vmem %s17, 64
          %s40 = scalar_lea.vmem %s18, 64
          %v41 = vld [vmem:[%s17 + $0x40] sm:$0xff]
        $region15: #{custom-call.33} parent=8 // loop_footer_branch
          %42 = sbr.rel target = $region11
        $region16: #{custom-call.33} parent=8 // loop_exit
          _
        // While loop
        $region17: #{custom-call.33} parent=8 // loop_pre_header
          _
        $region18: #{custom-call.33} parent=8 // loop_header
          %s43 = sphi %s17, %s51
          %s44 = sphi %s18, %s52
          %v45 = vphi %v19, %v45
          %p46 = scmp.gt.s32.totalorder %s43, %s15
        $region19: #{custom-call.33} parent=8 // loop_header_branch
          %48 = sbr.rel (%p46) target = $region23
        $region20: #{custom-call.33} parent=8 // loop_body
          %v49 = vld [vmem:[%s43] sm:$0xff]
          %50 = vst [vmem:[%s44] sm:$0xff] %v49
        $region21: #{custom-call.33} parent=8 // loop_footer
          %s51 = scalar_lea.vmem %s43, 8
          %s52 = scalar_lea.vmem %s44, 8
        $region22: #{custom-call.33} parent=8 // loop_footer_branch
          %53 = sbr.rel target = $region18
        $region23: #{custom-call.33} parent=8 // loop_exit
          _
      $region9: #{custom-call.33} parent=4 // pred_fallthru
        _
      %s54 = sand.u32 8, 7
      %s55 = sshll.u32 1, %s54
      %s56 = ssub.s32 %s55, 1
      %s57 = smul.u32 %s7, 128
      %s58 = sshra.s32 %s57, 4
      %s59 = scalar_lea.vmem [#allocation0], %s58
      %s60 = smul.u32 %s7, 128
      %s61 = sshra.s32 %s60, 4
      %s62 = scalar_lea.vmem %s0, %s61
      %v63 = vld [vmem:[%s62] sm:%s56]
      %64 = vst [vmem:[%s59] sm:%s56] %v63
    $region5: #{custom-call.33} parent=1 // pred_fallthru
      _
    %v65 = vlaneseq
    %v66 = vand.u32 %v65, 127
    %v67 = vlaneseq
    %v68 = vshrl.u32 %v67, 7
    %vm70 = vcmp.eq.s32.totalorder %v66, %v68
    %v71 = vld [vmem:[#allocation0] sm:$0xff]
    %v72 = vlaneseq
    %v73 = vand.u32 %v72, 127
    %vm74 = vcmp.eq.s32.totalorder %v73, 0
    %v75 = vsel %vm74, %v71, 1.0
    %v76 = vsel %vm70, %v75, 0.0
    %s77 = scalar_lea.vmem [#allocation0], 1
    %v78 = vld [vmem:[%s77] ss:$0 sm:$0xff]
    %vm79 = vcmask 64512
    %v80 = vsel %vm79, %v78, 0.0
    %v81 = vlaneseq
    %v82 = vand.u32 %v81, 127
    %vm83 = vcmp.eq.s32.totalorder %v82, 1
    %v84 = vmul.f32 %v80, %v76
    %85 = vadd.xlane.f32.xlu0 %v84
    %v86 = vpop.xlane.xlu0 %85
    %v87 = vsel %vm83, %v86, %v76
    %s88 = scalar_lea.vmem [#allocation0], 2
    %v89 = vld [vmem:[%s88] ss:$0 sm:$0xff]
    %vm90 = vcmask 64512
    %v91 = vsel %vm90, %v89, 0.0
    %v92 = vlaneseq
    %v93 = vand.u32 %v92, 127
    %vm94 = vcmp.eq.s32.totalorder %v93, 2
    %v95 = vmul.f32 %v91, %v87
    %96 = vadd.xlane.f32.xlu0 %v95
    %v97 = vpop.xlane.xlu0 %96
    %v98 = vsel %vm94, %v97, %v87
    %s99 = scalar_lea.vmem [#allocation0], 3
    %v100 = vld [vmem:[%s99] ss:$0 sm:$0xff]
    %vm101 = vcmask 64512
    %v102 = vsel %vm101, %v100, 0.0
    %v103 = vlaneseq
    %v104 = vand.u32 %v103, 127
    %vm105 = vcmp.eq.s32.totalorder %v104, 3
    %v106 = vmul.f32 %v102, %v98
    %107 = vadd.xlane.f32.xlu0 %v106
    %v108 = vpop.xlane.xlu0 %107
    %v109 = vsel %vm105, %v108, %v98
    %s110 = scalar_lea.vmem [#allocation0], 4
    %v111 = vld [vmem:[%s110] ss:$0 sm:$0xff]
    %vm112 = vcmask 64512
    %v113 = vsel %vm112, %v111, 0.0
    %v114 = vlaneseq
    %v115 = vand.u32 %v114, 127
    %vm116 = vcmp.eq.s32.totalorder %v115, 4
    %v117 = vmul.f32 %v113, %v109
    %118 = vadd.xlane.f32.xlu0 %v117
    %v119 = vpop.xlane.xlu0 %118
    %v120 = vsel %vm116, %v119, %v109
    %s121 = scalar_lea.vmem [#allocation0], 5
    %v122 = vld [vmem:[%s121] ss:$0 sm:$0xff]
    %vm123 = vcmask 64512
    %v124 = vsel %vm123, %v122, 0.0
    %v125 = vlaneseq
    %v126 = vand.u32 %v125, 127
    %vm127 = vcmp.eq.s32.totalorder %v126, 5
    %v128 = vmul.f32 %v124, %v120
    %129 = vadd.xlane.f32.xlu0 %v128
    %v130 = vpop.xlane.xlu0 %129
    %v131 = vsel %vm127, %v130, %v120
    %s132 = scalar_lea.vmem [#allocation0], 6
    %v133 = vld [vmem:[%s132] ss:$0 sm:$0xff]
    %vm134 = vcmask 64512
    %v135 = vsel %vm134, %v133, 0.0
    %v136 = vlaneseq
    %v137 = vand.u32 %v136, 127
    %vm138 = vcmp.eq.s32.totalorder %v137, 6
    %v139 = vmul.f32 %v135, %v131
    %140 = vadd.xlane.f32.xlu0 %v139
    %v141 = vpop.xlane.xlu0 %140
    %v142 = vsel %vm138, %v141, %v131
    %s143 = scalar_lea.vmem [#allocation0], 7
    %v144 = vld [vmem:[%s143] ss:$0 sm:$0xff]
    %vm145 = vcmask 64512
    %v146 = vsel %vm145, %v144, 0.0
    %v147 = vlaneseq
    %v148 = vand.u32 %v147, 127
    %vm149 = vcmp.eq.s32.totalorder %v148, 7
    %v150 = vmul.f32 %v146, %v142
    %151 = vadd.xlane.f32.xlu0 %v150
    %v152 = vpop.xlane.xlu0 %151
    %v153 = vsel %vm149, %v152, %v142
    %154 = vst [vmem:[#allocation1] sm:$0xff] %v153
    %p156 = scmp.gt.s32.totalorder 8, 0
    // Predicated region
    $region24: #{custom-call.33} parent=1 // pred_check
      %p157 = pneg %p156
    $region25: #{custom-call.33} parent=1 // pred_check_branch
      %159 = sbr.rel (%p157) target = $region27
    $region26: #{custom-call.33} parent=1 // pred_region
      %s160 = sshra.s32 8, 3
      %p161 = scmp.gt.s32.totalorder %s160, 0
      // Predicated region
      $region28: #{custom-call.33} parent=26 // pred_check
        %p162 = pneg %p161
      $region29: #{custom-call.33} parent=26 // pred_check_branch
        %164 = sbr.rel (%p162) target = $region31
      $region30: #{custom-call.33} parent=26 // pred_region
        %s165 = ssub.s32 %s160, 1
        %s166 = smul.u32 %s165, 128
        %s167 = sshra.s32 %s166, 4
        %s168 = scalar_lea.vmem [#allocation1], %s167
        %v169 = vld [vmem:[#allocation1] sm:$0xff]
        // While loop
        $region32: #{custom-call.33} parent=30 // loop_pre_header
          _
        $region33: #{custom-call.33} parent=30 // loop_header
          %s170 = sphi [#allocation1], %s192
          %s171 = sphi %s1, %s193
          %v172 = vphi %v169, %v194
          %s173 = ssub.s32 %s168, 64
          %p174 = scmp.gt.s32.totalorder %s170, %s173
        $region34: #{custom-call.33} parent=30 // loop_header_branch
          %176 = sbr.rel (%p174) target = $region38
        $region35: #{custom-call.33} parent=30 // loop_body
          %177 = vst [vmem:[%s171] sm:$0xff] %v172
          %v178 = vld [vmem:[%s170 + $0x8] sm:$0xff]
          %179 = vst [vmem:[%s171 + $0x8] sm:$0xff] %v178
          %v180 = vld [vmem:[%s170 + $0x10] sm:$0xff]
          %181 = vst [vmem:[%s171 + $0x10] sm:$0xff] %v180
          %v182 = vld [vmem:[%s170 + $0x18] sm:$0xff]
          %183 = vst [vmem:[%s171 + $0x18] sm:$0xff] %v182
          %v184 = vld [vmem:[%s170 + $0x20] sm:$0xff]
          %185 = vst [vmem:[%s171 + $0x20] sm:$0xff] %v184
          %v186 = vld [vmem:[%s170 + $0x28] sm:$0xff]
          %187 = vst [vmem:[%s171 + $0x28] sm:$0xff] %v186
          %v188 = vld [vmem:[%s170 + $0x30] sm:$0xff]
          %189 = vst [vmem:[%s171 + $0x30] sm:$0xff] %v188
          %v190 = vld [vmem:[%s170 + $0x38] sm:$0xff]
          %191 = vst [vmem:[%s171 + $0x38] sm:$0xff] %v190
        $region36: #{custom-call.33} parent=30 // loop_footer
          %s192 = scalar_lea.vmem %s170, 64
          %s193 = scalar_lea.vmem %s171, 64
          %v194 = vld [vmem:[%s170 + $0x40] sm:$0xff]
        $region37: #{custom-call.33} parent=30 // loop_footer_branch
          %195 = sbr.rel target = $region33
        $region38: #{custom-call.33} parent=30 // loop_exit
          _
        // While loop
        $region39: #{custom-call.33} parent=30 // loop_pre_header
          _
        $region40: #{custom-call.33} parent=30 // loop_header
          %s196 = sphi %s170, %s204
          %s197 = sphi %s171, %s205
          %v198 = vphi %v172, %v198
          %p199 = scmp.gt.s32.totalorder %s196, %s168
        $region41: #{custom-call.33} parent=30 // loop_header_branch
          %201 = sbr.rel (%p199) target = $region45
        $region42: #{custom-call.33} parent=30 // loop_body
          %v202 = vld [vmem:[%s196] sm:$0xff]
          %203 = vst [vmem:[%s197] sm:$0xff] %v202
        $region43: #{custom-call.33} parent=30 // loop_footer
          %s204 = scalar_lea.vmem %s196, 8
          %s205 = scalar_lea.vmem %s197, 8
        $region44: #{custom-call.33} parent=30 // loop_footer_branch
          %206 = sbr.rel target = $region40
        $region45: #{custom-call.33} parent=30 // loop_exit
          _
      $region31: #{custom-call.33} parent=26 // pred_fallthru
        _
      %s207 = sand.u32 8, 7
      %s208 = sshll.u32 1, %s207
      %s209 = ssub.s32 %s208, 1
      %s210 = smul.u32 %s160, 128
      %s211 = sshra.s32 %s210, 4
      %s212 = scalar_lea.vmem %s1, %s211
      %s213 = smul.u32 %s160, 128
      %s214 = sshra.s32 %s213, 4
      %s215 = scalar_lea.vmem [#allocation1], %s214
      %v216 = vld [vmem:[%s215] sm:%s209]
      %217 = vst [vmem:[%s212] sm:%s209] %v216
    $region27: #{custom-call.33} parent=1 // pred_fallthru
      _

// kernel: custom-call.72
$region0: #{custom-call.72}
  %s0 = inlined_call_operand.vmem [shape: f32[16,8], index: 0, kind: input, shape index: {}]
  %s1 = inlined_call_operand.vmem [shape: f32[16,8], index: 1, kind: output, shape index: {0}]
  %s2 = inlined_call_operand.vmem [shape: f32[8], index: 2, kind: output, shape index: {1}]
  %3 = xla_tuple %s1, %s2
  $region1: #{custom-call.72} parent=0
    #allocation0 [shape = 'u8[8192]{0}', space=vmem, size = 0x2000, scoped, tag = 'operand span for operand 0']
    #allocation1 [shape = 'u8[8192]{0}', space=vmem, size = 0x2000, scoped, tag = 'operand span for operand 1']
    #allocation2 [shape = 'u8[4096]{0}', space=vmem, size = 0x1000, scoped, tag = 'operand span for operand 2']
    #allocation3 [shape = 'u8[512]{0}', space=vmem, size = 0x400, scoped, tag = 'packed  for operand 2']
    #allocation4 [shape = 'f32[16,128]{1,0}', space=vmem, size = 0x2000, scoped, tag = 'scratch for Householder reflectors']
    // Predicated region
    $region2: #{custom-call.72} parent=1 // pred_check
      _
    $region3: #{custom-call.72} parent=1 // pred_check_branch
      %5 = sbr.rel (0) target = $region5
    $region4: #{custom-call.72} parent=1 // pred_region
      // Predicated region
      $region6: #{custom-call.72} parent=4 // pred_check
        _
      $region7: #{custom-call.72} parent=4 // pred_check_branch
        %7 = sbr.rel (0) target = $region9
      $region8: #{custom-call.72} parent=4 // pred_region
        // Predicated region
        $region21: #{custom-call.72} parent=8 // pred_check
          _
        $region22: #{custom-call.72} parent=8 // pred_check_branch
          %25 = sbr.rel (0) target = $region24
        $region23: #{custom-call.72} parent=8 // pred_region
          loop: start=0, step=1, limit=1
          $region25: #{custom-call.72} parent=23 // loop_pre_header
            _
          $region26: #{custom-call.72} parent=23 // loop_header
            %s27 = sphi 0, %s31
            %p28 = scmp.ge.s32.totalorder %s27, 1
            %s32 = sphi %s0, %s0
            %s33 = sphi [#allocation0], [#allocation0]
          $region27: #{custom-call.72} parent=23 // loop_header_branch
            %30 = sbr.rel (%p28) target = $region31
          $region28: #{custom-call.72} parent=23 // loop_body
            %v34 = vld [vmem:[%s32] sm:$0xff]
            %35 = vst [vmem:[%s33] sm:$0xff] %v34
            %v36 = vld [vmem:[%s32 + $0x8] sm:$0xff]
            %37 = vst [vmem:[%s33 + $0x8] sm:$0xff] %v36
          $region29: #{custom-call.72} parent=23 // loop_footer
            %s31 = sadd.s32 1, %s27
          $region30: #{custom-call.72} parent=23 // loop_footer_branch
            %26 = sbr.rel target = $region26
          $region31: #{custom-call.72} parent=23 // loop_exit
            _
        $region24: #{custom-call.72} parent=8 // pred_fallthru
          _
        // Predicated region
        $region32: #{custom-call.72} parent=8 // pred_check
          _
        $region33: #{custom-call.72} parent=8 // pred_check_branch
          %39 = sbr.rel target = $region35
        $region34: #{custom-call.72} parent=8 // pred_region
          _
        $region35: #{custom-call.72} parent=8 // pred_fallthru
          _
      $region9: #{custom-call.72} parent=4 // pred_fallthru
        _
      // Predicated region
      $region10: #{custom-call.72} parent=4 // pred_check
        _
      $region11: #{custom-call.72} parent=4 // pred_check_branch
        %9 = sbr.rel target = $region13
      $region12: #{custom-call.72} parent=4 // pred_region
        %s11 = ssub.s32 256, 1
        loop: start=0, step=1, limit=1
        $region14: #{custom-call.72} parent=12 // loop_pre_header
          _
        $region15: #{custom-call.72} parent=12 // loop_header
          %s13 = sphi 0, %s17
          %p14 = scmp.ge.s32.totalorder %s13, 1
          %s18 = sphi %s0, %s0
          %s19 = sphi [#allocation0], [#allocation0]
        $region16: #{custom-call.72} parent=12 // loop_header_branch
          %16 = sbr.rel (%p14) target = $region20
        $region17: #{custom-call.72} parent=12 // loop_body
          %v20 = vld [vmem:[%s18] sm:%s11]
          %21 = vst [vmem:[%s19] sm:%s11] %v20
          %v22 = vld [vmem:[%s18 + $0x8] sm:%s11]
          %23 = vst [vmem:[%s19 + $0x8] sm:%s11] %v22
        $region18: #{custom-call.72} parent=12 // loop_footer
          %s17 = sadd.s32 1, %s13
        $region19: #{custom-call.72} parent=12 // loop_footer_branch
          %12 = sbr.rel target = $region15
        $region20: #{custom-call.72} parent=12 // loop_exit
          _
      $region13: #{custom-call.72} parent=4 // pred_fallthru
        _
    $region5: #{custom-call.72} parent=1 // pred_fallthru
      _
    %40 = vnop
    %v41 = vld [vmem:[#allocation0] sm:$0xff]
    %42 = vst [vmem:[#allocation1] sm:$0xff] %v41
    %s43 = scalar_lea.vmem [#allocation1], 8
    %s44 = scalar_lea.vmem [#allocation0], 8
    %v45 = vld [vmem:[%s44] sm:$0xff]
    %46 = vst [vmem:[%s43] sm:$0xff] %v45
    %47 = vst [vmem:[#allocation2] sm:$0x1] 0.0
    loop: start=0, step=1, limit=8
    $region36: #{custom-call.72} parent=1 // loop_pre_header
      _
    $region37: #{custom-call.72} parent=1 // loop_header
      %s49 = sphi 0, %s53
      %p50 = scmp.ge.s32.totalorder %s49, 8
    $region38: #{custom-call.72} parent=1 // loop_header_branch
      %52 = sbr.rel (%p50) target = $region42
    $region39: #{custom-call.72} parent=1 // loop_body
      %v54 = vld [vmem:[#allocation1] sm:$0xff]
      %v55 = vlaneseq
      %v56 = vshrl.u32 %v55, 7
      %v58 = vstv %s49
      %vm59 = vcmp.gt.s32.totalorder %v56, %v58
      %v60 = vsel %vm59, %v54, 0.0
      %v61 = vmul.f32 %v60, %v60
      %s62 = scalar_lea.vmem [#allocation1], 8
      %v63 = vld [vmem:[%s62] sm:$0xff]
      %v64 = vlaneseq
      %v65 = vshrl.u32 %v64, 7
      %v66 = vadd.s32 %v65, 8
      %v67 = vstv %s49
      %vm68 = vcmp.gt.s32.totalorder %v66, %v67
      %vm69 = vcmp.lt.s32.totalorder %v66, 16
      %vm70 = vmand %vm68, %vm69
      %v71 = vsel %vm70, %v63, 0.0
      %v72 = vmul.f32 %v71, %v71
      %v73 = vadd.f32 %v61, %v72
      %v74 = vrot.slane %v73, 4
      %v75 = vadd.f32 %v73, %v74
      %v76 = vrot.slane %v75, 2
      %v77 = vadd.f32 %v75, %v76
      %v78 = vrot.slane %v77, 1
      %v79 = vadd.f32 %v77, %v78
      %v80 = vrsqrt.pop %v79
      %v81 = vmul.f32 %v79, %v80
      %vm82 = vcmp.eq.f32.partialorder %v79, inf
      %v83 = vsel %vm82, %v79, %v81
      %vm84 = vcmp.eq.f32.partialorder %v79, 0.0
      %v85 = vand.u32 %v79, 2147483648
      %v86 = vsel %vm84, %v85, %v83
      %vm87 = vcmp.eq.f32.partialorder %v79, 0.0
      %s88 = sshrl.u32 %s49, 3
      %s89 = sand.u32 %s49, 7
      %s90 = smul.addr %s88, 8
      %s91 = sadd.s32 %s89, %s90
      %s92 = scalar_lea.vmem [#allocation1], %s91
      %v93 = vld [vmem:[%s92] ss:$0 sm:$0xff]
      %v94 = vand.u32 2147483647, %v93
      %v95 = vmax.f32 %v94, 0.0
      %v96 = vand.u32 2147483647, %v86
      %v97 = vmax.f32 %v95, %v96
      %v98 = vrcp.pop %v97
      %v99 = vmul.f32 %v94, %v98
      %v100 = vmul.f32 %v99, %v99
      %v101 = vrcp.pop %v97
      %v102 = vmul.f32 0.0, %v101
      %v103 = vmul.f32 %v102, %v102
      %v104 = vadd.f32 %v100, %v103
      %v105 = vrcp.pop %v97
      %v106 = vmul.f32 %v96, %v105
      %v107 = vmul.f32 %v106, %v106
      %v108 = vadd.f32 %v104, %v107
      %vm109 = vcmp.eq.f32.partialorder %v97, 0.0
      %v110 = vrsqrt.pop %v108
      %v111 = vmul.f32 %v108, %v110
      %vm112 = vcmp.eq.f32.partialorder %v108, inf
      %v113 = vsel %vm112, %v108, %v111
      %vm114 = vcmp.eq.f32.partialorder %v108, 0.0
      %v115 = vand.u32 %v108, 2147483648
      %v116 = vsel %vm114, %v115, %v113
      %v117 = vmul.f32 %v97, %v116
      %v118 = vsel %vm109, 0.0, %v117
      %vm119 = vcmp.lt.f32.partialorder %v93, 0.0
      %v120 = vxor.u32 %v118, 2147483648
      %v121 = vsel %vm119, %v118, %v120
      %v122 = vsub.f32 %v121, %v93
      %v123 = vrcp.pop %v121
      %v124 = vmul.f32 %v122, %v123
      %v125 = vsel %vm87, %v93, %v121
      %v126 = vsel %vm87, 0.0, %v124
      %v127 = vsub.f32 %v93, %v125
      %s128 = smov [#allocation1]
      %v129 = vlaneseq
      %v130 = vshrl.u32 %v129, 7
      %v131 = vmov %v130
      %v132 = vld [vmem:[%s128] sm:$0xff]
      %v134 = vstv %s49
      %vm135 = vcmp.gt.s32.totalorder %v131, %v134
      %v136 = vsel %vm135, %v132, 0.0
      %v137 = vrcp.pop %v127
      %v138 = vmul.f32 %v136, %v137
      %v139 = vsel %vm87, 0.0, %v138
      %v140 = vstv %s49
      %v141 = vlaneseq
      %v142 = vand.u32 %v141, 127
      %vm143 = vcmp.eq.s32.totalorder %v142, %v140
      %v144 = vsel %vm143, %v139, 0.0
      %145 = vadd.xlane.f32.xlu0 %v144
      %v146 = vpop.xlane.xlu0 %145
      %147 = vst [vmem:[#allocation4] sm:$0xff] %v146
      %s148 = scalar_lea.vmem %s128, 8
      %v149 = vld [vmem:[%s148] sm:$0xff]
      %v150 = vadd.s32 %v131, 8
      %v151 = vstv %s49
      %vm152 = vcmp.gt.s32.totalorder %v150, %v151
      %vm153 = vcmp.lt.s32.totalorder %v150, 16
      %vm154 = vmand %vm152, %vm153
      %v155 = vsel %vm154, %v149, 0.0
      %v156 = vrcp.pop %v127
      %v157 = vmul.f32 %v155, %v156
      %v158 = vsel %vm87, 0.0, %v157
      %v159 = vstv %s49
      %v160 = vlaneseq
      %v161 = vand.u32 %v160, 127
      %vm162 = vcmp.eq.s32.totalorder %v161, %v159
      %v163 = vsel %vm162, %v158, 0.0
      %164 = vadd.xlane.f32.xlu0 %v163
      %v165 = vpop.xlane.xlu0 %164
      %s166 = scalar_lea.vmem [#allocation4], 8
      %167 = vst [vmem:[%s166] sm:$0xff] %v165
      %s168 = scalar_lea.vmem [#allocation4], %s49
      %169 = vst [vmem:[%s168] sm:$0x1] 1.0
      %v170 = vstv %s49
      %v171 = vlaneseq
      %v172 = vand.u32 %v171, 127
      %vm173 = vcmp.eq.s32.totalorder %v172, %v170
      %v174 = vsel %vm173, %v126, 0.0
      %175 = vadd.xlane.f32.xlu0 %v174
      %v176 = vpop.xlane.xlu0 %175
      %v177 = vstv %s49
      %v178 = vlaneseq
      %v179 = vand.u32 %v178, 127
      %vm180 = vcmp.eq.s32.totalorder %v179, %v177
      %v181 = vld [vmem:[#allocation2] ss:$0 sm:$0xff]
      %v182 = vsel %vm180, %v176, %v181
      %183 = vst [vmem:[#allocation2] sm:$0x1] %v182
      %s184 = smov [#allocation1]
      %s185 = smov [#allocation4]
      %v186 = vlaneseq
      %v187 = vshrl.u32 %v186, 7
      %v188 = vmov %v187
      %v190 = vld [vmem:[%s185] sm:$0xff]
      %v191 = vld [vmem:[%s184] sm:$0xff]
      %v192 = vmul.f32 %v190, %v191
      %v193 = vadd.s32 %v188, 8
      %s194 = scalar_lea.vmem %s185, 8
      %v195 = vld [vmem:[%s194] sm:$0xff]
      %s196 = scalar_lea.vmem %s184, 8
      %v197 = vld [vmem:[%s196] sm:$0xff]
      %v198 = vmul.f32 %v195, %v197
      %vm199 = vcmp.lt.s32.totalorder %v193, 16
      %v200 = vsel %vm199, %v198, 0.0
      %v201 = vadd.f32 %v192, %v200
      %v202 = vrot.slane %v201, 4
      %v203 = vadd.f32 %v201, %v202
      %v204 = vrot.slane %v203, 2
      %v205 = vadd.f32 %v203, %v204
      %v206 = vrot.slane %v205, 1
      %v207 = vadd.f32 %v205, %v206
      %s208 = smov %s184
      %s209 = smov %s185
      %v210 = vlaneseq
      %v211 = vshrl.u32 %v210, 7
      %v212 = vmov %v211
      %v213 = vmul.f32 %v207, %v176
      %v215 = vlaneseq
      %v216 = vand.u32 %v215, 127
      %v217 = vld [vmem:[%s209] sm:$0xff]
      %v218 = vmul.f32 %v217, %v213
      %v219 = vld [vmem:[%s208] sm:$0xff]
      %v220 = vstv %s49
      %vm221 = vcmp.gt.s32.totalorder %v216, %v220
      %v222 = vsub.f32 %v219, %v218
      %v223 = vsel %vm221, %v222, %v219
      %v224 = vstv %s49
      %v225 = vlaneseq
      %v226 = vand.u32 %v225, 127
      %vm227 = vcmp.eq.s32.totalorder %v226, %v224
      %v228 = vstv %s49
      %vm229 = vcmp.ge.s32.totalorder %v212, %v228
      %vm230 = vmand %vm227, %vm229
      %v231 = vsel %vm230, %v217, %v223
      %232 = vst [vmem:[%s208] sm:$0xff] %v231
      %v233 = vadd.s32 %v212, 8
      %v234 = vlaneseq
      %v235 = vand.u32 %v234, 127
      %s236 = scalar_lea.vmem %s209, 8
      %v237 = vld [vmem:[%s236] sm:$0xff]
      %v238 = vmul.f32 %v237, %v213
      %s239 = scalar_lea.vmem %s208, 8
      %v240 = vld [vmem:[%s239] sm:$0xff]
      %v241 = vstv %s49
      %vm242 = vcmp.gt.s32.totalorder %v235, %v241
      %v243 = vsub.f32 %v240, %v238
      %v244 = vsel %vm242, %v243, %v240
      %v245 = vstv %s49
      %v246 = vlaneseq
      %v247 = vand.u32 %v246, 127
      %vm248 = vcmp.eq.s32.totalorder %v247, %v245
      %v249 = vstv %s49
      %vm250 = vcmp.ge.s32.totalorder %v233, %v249
      %vm251 = vmand %vm248, %vm250
      %v252 = vsel %vm251, %v237, %v244
      %253 = vst [vmem:[%s239] sm:$0xff] %v252
      %s254 = scalar_lea.vmem %s208, %s49
      %v255 = vld [vmem:[%s254] ss:$0 sm:$0xff]
      %v256 = vstv %s49
      %v257 = vlaneseq
      %v258 = vand.u32 %v257, 127
      %vm259 = vcmp.eq.s32.totalorder %v258, %v256
      %v260 = vsel %vm259, %v125, %v255
      %261 = vst [vmem:[%s254] sm:$0x1] %v260
    $region40: #{custom-call.72} parent=1 // loop_footer
      %s53 = sadd.s32 1, %s49
    $region41: #{custom-call.72} parent=1 // loop_footer_branch
      %48 = sbr.rel target = $region37
    $region42: #{custom-call.72} parent=1 // loop_exit
      _
    %s263 = sshll.u32 1, 1
    %s264 = ssub.s32 %s263, 1
    %v266 = vld [vmem:[#allocation2] sm:%s264]
    %s267 = sshll.u32 1, 1
    %s268 = ssub.s32 %s267, 1
    %269 = vst [vmem:[#allocation3] sm:%s268] %v266
    // Predicated region
    $region43: #{custom-call.72} parent=1 // pred_check
      _
    $region44: #{custom-call.72} parent=1 // pred_check_branch
      %271 = sbr.rel (0) target = $region46
    $region45: #{custom-call.72} parent=1 // pred_region
      // Predicated region
      $region47: #{custom-call.72} parent=45 // pred_check
        _
      $region48: #{custom-call.72} parent=45 // pred_check_branch
        %273 = sbr.rel (0) target = $region50
      $region49: #{custom-call.72} parent=45 // pred_region
        // Predicated region
        $region62: #{custom-call.72} parent=49 // pred_check
          _
        $region63: #{custom-call.72} parent=49 // pred_check_branch
          %291 = sbr.rel (0) target = $region65
        $region64: #{custom-call.72} parent=49 // pred_region
          loop: start=0, step=1, limit=1
          $region66: #{custom-call.72} parent=64 // loop_pre_header
            _
          $region67: #{custom-call.72} parent=64 // loop_header
            %s293 = sphi 0, %s297
            %p294 = scmp.ge.s32.totalorder %s293, 1
            %s298 = sphi [#allocation1], [#allocation1]
            %s299 = sphi %s1, %s1
          $region68: #{custom-call.72} parent=64 // loop_header_branch
            %296 = sbr.rel (%p294) target = $region72
          $region69: #{custom-call.72} parent=64 // loop_body
            %v300 = vld [vmem:[%s298] sm:$0xff]
            %301 = vst [vmem:[%s299] sm:$0xff] %v300
            %v302 = vld [vmem:[%s298 + $0x8] sm:$0xff]
            %303 = vst [vmem:[%s299 + $0x8] sm:$0xff] %v302
          $region70: #{custom-call.72} parent=64 // loop_footer
            %s297 = sadd.s32 1, %s293
          $region71: #{custom-call.72} parent=64 // loop_footer_branch
            %292 = sbr.rel target = $region67
          $region72: #{custom-call.72} parent=64 // loop_exit
            _
        $region65: #{custom-call.72} parent=49 // pred_fallthru
          _
        // Predicated region
        $region73: #{custom-call.72} parent=49 // pred_check
          _
        $region74: #{custom-call.72} parent=49 // pred_check_branch
          %305 = sbr.rel target = $region76
        $region75: #{custom-call.72} parent=49 // pred_region
          _
        $region76: #{custom-call.72} parent=49 // pred_fallthru
          _
      $region50: #{custom-call.72} parent=45 // pred_fallthru
        _
      // Predicated region
      $region51: #{custom-call.72} parent=45 // pred_check
        _
      $region52: #{custom-call.72} parent=45 // pred_check_branch
        %275 = sbr.rel target = $region54
      $region53: #{custom-call.72} parent=45 // pred_region
        %s277 = ssub.s32 256, 1
        loop: start=0, step=1, limit=1
        $region55: #{custom-call.72} parent=53 // loop_pre_header
          _
        $region56: #{custom-call.72} parent=53 // loop_header
          %s279 = sphi 0, %s283
          %p280 = scmp.ge.s32.totalorder %s279, 1
          %s284 = sphi [#allocation1], [#allocation1]
          %s285 = sphi %s1, %s1
        $region57: #{custom-call.72} parent=53 // loop_header_branch
          %282 = sbr.rel (%p280) target = $region61
        $region58: #{custom-call.72} parent=53 // loop_body
          %v286 = vld [vmem:[%s284] sm:%s277]
          %287 = vst [vmem:[%s285] sm:%s277] %v286
          %v288 = vld [vmem:[%s284 + $0x8] sm:%s277]
          %289 = vst [vmem:[%s285 + $0x8] sm:%s277] %v288
        $region59: #{custom-call.72} parent=53 // loop_footer
          %s283 = sadd.s32 1, %s279
        $region60: #{custom-call.72} parent=53 // loop_footer_branch
          %278 = sbr.rel target = $region56
        $region61: #{custom-call.72} parent=53 // loop_exit
          _
      $region54: #{custom-call.72} parent=45 // pred_fallthru
        _
    $region46: #{custom-call.72} parent=1 // pred_fallthru
      _
    %306 = vnop
    // Predicated region
    $region77: #{custom-call.72} parent=1 // pred_check
      _
    $region78: #{custom-call.72} parent=1 // pred_check_branch
      %308 = sbr.rel (0) target = $region80
    $region79: #{custom-call.72} parent=1 // pred_region
      // Predicated region
      $region81: #{custom-call.72} parent=79 // pred_check
        _
      $region82: #{custom-call.72} parent=79 // pred_check_branch
        %310 = sbr.rel (0) target = $region84
      $region83: #{custom-call.72} parent=79 // pred_region
        // Predicated region
        $region85: #{custom-call.72} parent=83 // pred_check
          _
        $region86: #{custom-call.72} parent=83 // pred_check_branch
          %312 = sbr.rel target = $region88
        $region87: #{custom-call.72} parent=83 // pred_region
          // Predicated region
          $region100: #{custom-call.72} parent=87 // pred_check
            _
          $region101: #{custom-call.72} parent=87 // pred_check_branch
            %328 = sbr.rel (0) target = $region103
          $region102: #{custom-call.72} parent=87 // pred_region
            %s330 = ssub.s32 2, 1
            loop: start=0, step=1, limit=1
            $region104: #{custom-call.72} parent=102 // loop_pre_header
              _
            $region105: #{custom-call.72} parent=102 // loop_header
              %s332 = sphi 0, %s336
              %p333 = scmp.ge.s32.totalorder %s332, 1
              %s337 = sphi [#allocation3], [#allocation3]
              %s338 = sphi %s2, %s2
            $region106: #{custom-call.72} parent=102 // loop_header_branch
              %335 = sbr.rel (%p333) target = $region110
            $region107: #{custom-call.72} parent=102 // loop_body
              %v339 = vld [vmem:[%s337] sm:%s330]
              %340 = vst [vmem:[%s338] sm:%s330] %v339
            $region108: #{custom-call.72} parent=102 // loop_footer
              %s336 = sadd.s32 1, %s332
            $region109: #{custom-call.72} parent=102 // loop_footer_branch
              %331 = sbr.rel target = $region105
            $region110: #{custom-call.72} parent=102 // loop_exit
              _
          $region103: #{custom-call.72} parent=87 // pred_fallthru
            _
        $region88: #{custom-call.72} parent=83 // pred_fallthru
          _
        // Predicated region
        $region89: #{custom-call.72} parent=83 // pred_check
          _
        $region90: #{custom-call.72} parent=83 // pred_check_branch
          %314 = sbr.rel (0) target = $region92
        $region91: #{custom-call.72} parent=83 // pred_region
          %s316 = ssub.s32 2, 1
          loop: start=0, step=1, limit=1
          $region93: #{custom-call.72} parent=91 // loop_pre_header
            _
          $region94: #{custom-call.72} parent=91 // loop_header
            %s318 = sphi 0, %s322
            %p319 = scmp.ge.s32.totalorder %s318, 1
            %s323 = sphi [#allocation3], [#allocation3]
            %s324 = sphi %s2, %s2
          $region95: #{custom-call.72} parent=91 // loop_header_branch
            %321 = sbr.rel (%p319) target = $region99
          $region96: #{custom-call.72} parent=91 // loop_body
            %v325 = vld [vmem:[%s323] sm:%s316]
            %326 = vst [vmem:[%s324] sm:%s316] %v325
          $region97: #{custom-call.72} parent=91 // loop_footer
            %s322 = sadd.s32 1, %s318
          $region98: #{custom-call.72} parent=91 // loop_footer_branch
            %317 = sbr.rel target = $region94
          $region99: #{custom-call.72} parent=91 // loop_exit
            _
        $region92: #{custom-call.72} parent=83 // pred_fallthru
          _
      $region84: #{custom-call.72} parent=79 // pred_fallthru
        _
      %341 = vnop
    $region80: #{custom-call.72} parent=1 // pred_fallthru
      _
    // Predicated region
    $region111: #{custom-call.72} parent=1 // pred_check
      _
    $region112: #{custom-call.72} parent=1 // pred_check_branch
      %343 = sbr.rel (0) target = $region114
    $region113: #{custom-call.72} parent=1 // pred_region
      _
    $region114: #{custom-call.72} parent=1 // pred_fallthru
      _

// kernel: custom-call.70
$region0: #{custom-call.70}
  %s0 = inlined_call_operand.vmem [shape: f32[8,8], index: 0, kind: input, shape index: {}]
  %s1 = inlined_call_operand.vmem [shape: f32[8,8], index: 1, kind: output, shape index: {}]
  $region1: #{custom-call.70} parent=0
    #allocation0 [shape = 'u8[4096]{0}', space=vmem, size = 0x1000, scoped, tag = 'operand span for operand 0']
    #allocation1 [shape = 'u8[4096]{0}', space=vmem, size = 0x1000, scoped, tag = 'operand span for operand 1']
    // Predicated region
    $region2: #{custom-call.70} parent=1 // pred_check
      _
    $region3: #{custom-call.70} parent=1 // pred_check_branch
      %3 = sbr.rel (0) target = $region5
    $region4: #{custom-call.70} parent=1 // pred_region
      // Predicated region
      $region6: #{custom-call.70} parent=4 // pred_check
        _
      $region7: #{custom-call.70} parent=4 // pred_check_branch
        %5 = sbr.rel (0) target = $region9
      $region8: #{custom-call.70} parent=4 // pred_region
        // Predicated region
        $region21: #{custom-call.70} parent=8 // pred_check
          _
        $region22: #{custom-call.70} parent=8 // pred_check_branch
          %21 = sbr.rel (0) target = $region24
        $region23: #{custom-call.70} parent=8 // pred_region
          loop: start=0, step=1, limit=1
          $region25: #{custom-call.70} parent=23 // loop_pre_header
            _
          $region26: #{custom-call.70} parent=23 // loop_header
            %s23 = sphi 0, %s27
            %p24 = scmp.ge.s32.totalorder %s23, 1
            %s28 = sphi %s0, %s0
            %s29 = sphi [#allocation0], [#allocation0]
          $region27: #{custom-call.70} parent=23 // loop_header_branch
            %26 = sbr.rel (%p24) target = $region31
          $region28: #{custom-call.70} parent=23 // loop_body
            %v30 = vld [vmem:[%s28] sm:$0xff]
            %31 = vst [vmem:[%s29] sm:$0xff] %v30
          $region29: #{custom-call.70} parent=23 // loop_footer
            %s27 = sadd.s32 1, %s23
          $region30: #{custom-call.70} parent=23 // loop_footer_branch
            %22 = sbr.rel target = $region26
          $region31: #{custom-call.70} parent=23 // loop_exit
            _
        $region24: #{custom-call.70} parent=8 // pred_fallthru
          _
        // Predicated region
        $region32: #{custom-call.70} parent=8 // pred_check
          _
        $region33: #{custom-call.70} parent=8 // pred_check_branch
          %33 = sbr.rel target = $region35
        $region34: #{custom-call.70} parent=8 // pred_region
          _
        $region35: #{custom-call.70} parent=8 // pred_fallthru
          _
      $region9: #{custom-call.70} parent=4 // pred_fallthru
        _
      // Predicated region
      $region10: #{custom-call.70} parent=4 // pred_check
        _
      $region11: #{custom-call.70} parent=4 // pred_check_branch
        %7 = sbr.rel target = $region13
      $region12: #{custom-call.70} parent=4 // pred_region
        %s9 = ssub.s32 256, 1
        loop: start=0, step=1, limit=1
        $region14: #{custom-call.70} parent=12 // loop_pre_header
          _
        $region15: #{custom-call.70} parent=12 // loop_header
          %s11 = sphi 0, %s15
          %p12 = scmp.ge.s32.totalorder %s11, 1
          %s16 = sphi %s0, %s0
          %s17 = sphi [#allocation0], [#allocation0]
        $region16: #{custom-call.70} parent=12 // loop_header_branch
          %14 = sbr.rel (%p12) target = $region20
        $region17: #{custom-call.70} parent=12 // loop_body
          %v18 = vld [vmem:[%s16] sm:%s9]
          %19 = vst [vmem:[%s17] sm:%s9] %v18
        $region18: #{custom-call.70} parent=12 // loop_footer
          %s15 = sadd.s32 1, %s11
        $region19: #{custom-call.70} parent=12 // loop_footer_branch
          %10 = sbr.rel target = $region15
        $region20: #{custom-call.70} parent=12 // loop_exit
          _
      $region13: #{custom-call.70} parent=4 // pred_fallthru
        _
    $region5: #{custom-call.70} parent=1 // pred_fallthru
      _
    %34 = vnop
    %35 = vst [vmem:[#allocation1] sm:$0xff] 0.0
    %vm36 = vcmask 7168
    %v37 = vld [vmem:[#allocation1] ss:$0 sm:$0xff]
    %v38 = vld [vmem:[#allocation0] ss:$0 sm:$0xff]
    %v39 = vmul.f32 %v37, %v37
    %40 = vadd.xlane.f32.xlu0 %v39
    %v41 = vpop.xlane.xlu0 %40
    %v42 = vsub.f32 %v38, %v41
    %v43 = vrsqrt.pop %v42
    %v44 = vld [vmem:[#allocation0] sm:$0xff]
    %v45 = vld [vmem:[#allocation1] sm:$0xff]
    %v46 = vmul.f32 %v45, %v37
    %47 = vadd.xlane.f32.xlu0 %v46
    %v48 = vpop.xlane.xlu0 %47
    %v49 = vsub.f32 %v44, %v48
    %v50 = vmul.f32 %v49, %v43
    %v51 = vsel %vm36, %v50, 0.0
    %v52 = vadd.f32 %v45, %v51
    %53 = vst [vmem:[#allocation1] sm:$0xff] %v52
    %vm54 = vcmask 15368
    %s55 = scalar_lea.vmem [#allocation1], 1
    %v56 = vld [vmem:[%s55] ss:$0 sm:$0xff]
    %s57 = scalar_lea.vmem [#allocation0], 1
    %v58 = vld [vmem:[%s57] ss:$0 sm:$0xff]
    %v59 = vmul.f32 %v56, %v56
    %60 = vadd.xlane.f32.xlu0 %v59
    %v61 = vpop.xlane.xlu0 %60
    %v62 = vsub.f32 %v58, %v61
    %v63 = vrsqrt.pop %v62
    %v64 = vld [vmem:[#allocation0] sm:$0xff]
    %v65 = vld [vmem:[#allocation1] sm:$0xff]
    %v66 = vmul.f32 %v65, %v56
    %67 = vadd.xlane.f32.xlu0 %v66
    %v68 = vpop.xlane.xlu0 %67
    %v69 = vsub.f32 %v64, %v68
    %v70 = vmul.f32 %v69, %v63
    %vm71 = vcmask 1047553
    %vm72 = vmand %vm54, %vm71
    %v73 = vsel %vm72, %v70, 0.0
    %v74 = vadd.f32 %v65, %v73
    %75 = vst [vmem:[#allocation1] sm:$0xff] %v74
    %vm76 = vcmask 23568
    %s77 = scalar_lea.vmem [#allocation1], 2
    %v78 = vld [vmem:[%s77] ss:$0 sm:$0xff]
    %s79 = scalar_lea.vmem [#allocation0], 2
    %v80 = vld [vmem:[%s79] ss:$0 sm:$0xff]
    %v81 = vmul.f32 %v78, %v78
    %82 = vadd.xlane.f32.xlu0 %v81
    %v83 = vpop.xlane.xlu0 %82
    %v84 = vsub.f32 %v80, %v83
    %v85 = vrsqrt.pop %v84
    %v86 = vld [vmem:[#allocation0] sm:$0xff]
    %v87 = vld [vmem:[#allocation1] sm:$0xff]
    %v88 = vmul.f32 %v87, %v78
    %89 = vadd.xlane.f32.xlu0 %v88
    %v90 = vpop.xlane.xlu0 %89
    %v91 = vsub.f32 %v86, %v90
    %v92 = vmul.f32 %v91, %v85
    %vm93 = vcmask 1047554
    %vm94 = vmand %vm76, %vm93
    %v95 = vsel %vm94, %v92, 0.0
    %v96 = vadd.f32 %v87, %v95
    %97 = vst [vmem:[#allocation1] sm:$0xff] %v96
    %vm98 = vcmask 31768
    %s99 = scalar_lea.vmem [#allocation1], 3
    %v100 = vld [vmem:[%s99] ss:$0 sm:$0xff]
    %s101 = scalar_lea.vmem [#allocation0], 3
    %v102 = vld [vmem:[%s101] ss:$0 sm:$0xff]
    %v103 = vmul.f32 %v100, %v100
    %104 = vadd.xlane.f32.xlu0 %v103
    %v105 = vpop.xlane.xlu0 %104
    %v106 = vsub.f32 %v102, %v105
    %v107 = vrsqrt.pop %v106
    %v108 = vld [vmem:[#allocation0] sm:$0xff]
    %v109 = vld [vmem:[#allocation1] sm:$0xff]
    %v110 = vmul.f32 %v109, %v100
    %111 = vadd.xlane.f32.xlu0 %v110
    %v112 = vpop.xlane.xlu0 %111
    %v113 = vsub.f32 %v108, %v112
    %v114 = vmul.f32 %v113, %v107
    %vm115 = vcmask 1047555
    %vm116 = vmand %vm98, %vm115
    %v117 = vsel %vm116, %v114, 0.0
    %v118 = vadd.f32 %v109, %v117
    %119 = vst [vmem:[#allocation1] sm:$0xff] %v118
    %vm120 = vcmask 39968
    %s121 = scalar_lea.vmem [#allocation1], 4
    %v122 = vld [vmem:[%s121] ss:$0 sm:$0xff]
    %s123 = scalar_lea.vmem [#allocation0], 4
    %v124 = vld [vmem:[%s123] ss:$0 sm:$0xff]
    %v125 = vmul.f32 %v122, %v122
    %126 = vadd.xlane.f32.xlu0 %v125
    %v127 = vpop.xlane.xlu0 %126
    %v128 = vsub.f32 %v124, %v127
    %v129 = vrsqrt.pop %v128
    %v130 = vld [vmem:[#allocation0] sm:$0xff]
    %v131 = vld [vmem:[#allocation1] sm:$0xff]
    %v132 = vmul.f32 %v131, %v122
    %133 = vadd.xlane.f32.xlu0 %v132
    %v134 = vpop.xlane.xlu0 %133
    %v135 = vsub.f32 %v130, %v134
    %v136 = vmul.f32 %v135, %v129
    %vm137 = vcmask 1047556
    %vm138 = vmand %vm120, %vm137
    %v139 = vsel %vm138, %v136, 0.0
    %v140 = vadd.f32 %v131, %v139
    %141 = vst [vmem:[#allocation1] sm:$0xff] %v140
    %vm142 = vcmask 48168
    %s143 = scalar_lea.vmem [#allocation1], 5
    %v144 = vld [vmem:[%s143] ss:$0 sm:$0xff]
    %s145 = scalar_lea.vmem [#allocation0], 5
    %v146 = vld [vmem:[%s145] ss:$0 sm:$0xff]
    %v147 = vmul.f32 %v144, %v144
    %148 = vadd.xlane.f32.xlu0 %v147
    %v149 = vpop.xlane.xlu0 %148
    %v150 = vsub.f32 %v146, %v149
    %v151 = vrsqrt.pop %v150
    %v152 = vld [vmem:[#allocation0] sm:$0xff]
    %v153 = vld [vmem:[#allocation1] sm:$0xff]
    %v154 = vmul.f32 %v153, %v144
    %155 = vadd.xlane.f32.xlu0 %v154
    %v156 = vpop.xlane.xlu0 %155
    %v157 = vsub.f32 %v152, %v156
    %v158 = vmul.f32 %v157, %v151
    %vm159 = vcmask 1047557
    %vm160 = vmand %vm142, %vm159
    %v161 = vsel %vm160, %v158, 0.0
    %v162 = vadd.f32 %v153, %v161
    %163 = vst [vmem:[#allocation1] sm:$0xff] %v162
    %vm164 = vcmask 56368
    %s165 = scalar_lea.vmem [#allocation1], 6
    %v166 = vld [vmem:[%s165] ss:$0 sm:$0xff]
    %s167 = scalar_lea.vmem [#allocation0], 6
    %v168 = vld [vmem:[%s167] ss:$0 sm:$0xff]
    %v169 = vmul.f32 %v166, %v166
    %170 = vadd.xlane.f32.xlu0 %v169
    %v171 = vpop.xlane.xlu0 %170
    %v172 = vsub.f32 %v168, %v171
    %v173 = vrsqrt.pop %v172
    %v174 = vld [vmem:[#allocation0] sm:$0xff]
    %v175 = vld [vmem:[#allocation1] sm:$0xff]
    %v176 = vmul.f32 %v175, %v166
    %177 = vadd.xlane.f32.xlu0 %v176
    %v178 = vpop.xlane.xlu0 %177
    %v179 = vsub.f32 %v174, %v178
    %v180 = vmul.f32 %v179, %v173
    %vm181 = vcmask 1047558
    %vm182 = vmand %vm164, %vm181
    %v183 = vsel %vm182, %v180, 0.0
    %v184 = vadd.f32 %v175, %v183
    %185 = vst [vmem:[#allocation1] sm:$0xff] %v184
    %vm186 = vcmask 64568
    %s187 = scalar_lea.vmem [#allocation1], 7
    %v188 = vld [vmem:[%s187] ss:$0 sm:$0xff]
    %s189 = scalar_lea.vmem [#allocation0], 7
    %v190 = vld [vmem:[%s189] ss:$0 sm:$0xff]
    %v191 = vmul.f32 %v188, %v188
    %192 = vadd.xlane.f32.xlu0 %v191
    %v193 = vpop.xlane.xlu0 %192
    %v194 = vsub.f32 %v190, %v193
    %v195 = vrsqrt.pop %v194
    %v196 = vld [vmem:[#allocation0] sm:$0xff]
    %v197 = vld [vmem:[#allocation1] sm:$0xff]
    %v198 = vmul.f32 %v197, %v188
    %199 = vadd.xlane.f32.xlu0 %v198
    %v200 = vpop.xlane.xlu0 %199
    %v201 = vsub.f32 %v196, %v200
    %v202 = vmul.f32 %v201, %v195
    %vm203 = vcmask 1047559
    %vm204 = vmand %vm186, %vm203
    %v205 = vsel %vm204, %v202, 0.0
    %v206 = vadd.f32 %v197, %v205
    %207 = vst [vmem:[#allocation1] sm:$0xff] %v206
    // Predicated region
    $region36: #{custom-call.70} parent=1 // pred_check
      _
    $region37: #{custom-call.70} parent=1 // pred_check_branch
      %209 = sbr.rel (0) target = $region39
    $region38: #{custom-call.70} parent=1 // pred_region
      // Predicated region
      $region40: #{custom-call.70} parent=38 // pred_check
        _
      $region41: #{custom-call.70} parent=38 // pred_check_branch
        %211 = sbr.rel (0) target = $region43
      $region42: #{custom-call.70} parent=38 // pred_region
        // Predicated region
        $region55: #{custom-call.70} parent=42 // pred_check
          _
        $region56: #{custom-call.70} parent=42 // pred_check_branch
          %227 = sbr.rel (0) target = $region58
        $region57: #{custom-call.70} parent=42 // pred_region
          loop: start=0, step=1, limit=1
          $region59: #{custom-call.70} parent=57 // loop_pre_header
            _
          $region60: #{custom-call.70} parent=57 // loop_header
            %s229 = sphi 0, %s233
            %p230 = scmp.ge.s32.totalorder %s229, 1
            %s234 = sphi [#allocation1], [#allocation1]
            %s235 = sphi %s1, %s1
          $region61: #{custom-call.70} parent=57 // loop_header_branch
            %232 = sbr.rel (%p230) target = $region65
          $region62: #{custom-call.70} parent=57 // loop_body
            %v236 = vld [vmem:[%s234] sm:$0xff]
            %237 = vst [vmem:[%s235] sm:$0xff] %v236
          $region63: #{custom-call.70} parent=57 // loop_footer
            %s233 = sadd.s32 1, %s229
          $region64: #{custom-call.70} parent=57 // loop_footer_branch
            %228 = sbr.rel target = $region60
          $region65: #{custom-call.70} parent=57 // loop_exit
            _
        $region58: #{custom-call.70} parent=42 // pred_fallthru
          _
        // Predicated region
        $region66: #{custom-call.70} parent=42 // pred_check
          _
        $region67: #{custom-call.70} parent=42 // pred_check_branch
          %239 = sbr.rel target = $region69
        $region68: #{custom-call.70} parent=42 // pred_region
          _
        $region69: #{custom-call.70} parent=42 // pred_fallthru
          _
      $region43: #{custom-call.70} parent=38 // pred_fallthru
        _
      // Predicated region
      $region44: #{custom-call.70} parent=38 // pred_check
        _
      $region45: #{custom-call.70} parent=38 // pred_check_branch
        %213 = sbr.rel target = $region47
      $region46: #{custom-call.70} parent=38 // pred_region
        %s215 = ssub.s32 256, 1
        loop: start=0, step=1, limit=1
        $region48: #{custom-call.70} parent=46 // loop_pre_header
          _
        $region49: #{custom-call.70} parent=46 // loop_header
          %s217 = sphi 0, %s221
          %p218 = scmp.ge.s32.totalorder %s217, 1
          %s222 = sphi [#allocation1], [#allocation1]
          %s223 = sphi %s1, %s1
        $region50: #{custom-call.70} parent=46 // loop_header_branch
          %220 = sbr.rel (%p218) target = $region54
        $region51: #{custom-call.70} parent=46 // loop_body
          %v224 = vld [vmem:[%s222] sm:%s215]
          %225 = vst [vmem:[%s223] sm:%s215] %v224
        $region52: #{custom-call.70} parent=46 // loop_footer
          %s221 = sadd.s32 1, %s217
        $region53: #{custom-call.70} parent=46 // loop_footer_branch
          %216 = sbr.rel target = $region49
        $region54: #{custom-call.70} parent=46 // loop_exit
          _
      $region47: #{custom-call.70} parent=38 // pred_fallthru
        _
    $region39: #{custom-call.70} parent=1 // pred_fallthru
      _
    %240 = vnop

// kernel: custom-call.71
$region0: #{custom-call.71}
  %s0 = inlined_call_operand.vmem [shape: f32[1,8,8], index: 0, kind: input, shape index: {}]
  %s1 = inlined_call_operand.vmem [shape: f32[1,8,8], index: 1, kind: output, shape index: {}]
  $region1: #{custom-call.71} parent=0
    #allocation0 [shape = 'u8[4096]{0}', space=vmem, size = 0x1000, scoped, tag = 'operand span for operand 0']
    #allocation1 [shape = 'u8[4096]{0}', space=vmem, size = 0x1000, scoped, tag = 'operand span for operand 1']
    #allocation2 [shape = 'f32[8,8]{1,0}', space=vmem, size = 0x1000, scoped, tag = 'rescaled input a']
    // Predicated region
    $region2: #{custom-call.71} parent=1 // pred_check
      _
    $region3: #{custom-call.71} parent=1 // pred_check_branch
      %3 = sbr.rel (0) target = $region5
    $region4: #{custom-call.71} parent=1 // pred_region
      // Predicated region
      $region6: #{custom-call.71} parent=4 // pred_check
        _
      $region7: #{custom-call.71} parent=4 // pred_check_branch
        %5 = sbr.rel (0) target = $region9
      $region8: #{custom-call.71} parent=4 // pred_region
        // Predicated region
        $region21: #{custom-call.71} parent=8 // pred_check
          _
        $region22: #{custom-call.71} parent=8 // pred_check_branch
          %21 = sbr.rel (0) target = $region24
        $region23: #{custom-call.71} parent=8 // pred_region
          loop: start=0, step=1, limit=1
          $region25: #{custom-call.71} parent=23 // loop_pre_header
            _
          $region26: #{custom-call.71} parent=23 // loop_header
            %s23 = sphi 0, %s27
            %p24 = scmp.ge.s32.totalorder %s23, 1
            %s28 = sphi %s0, %s0
            %s29 = sphi [#allocation0], [#allocation0]
          $region27: #{custom-call.71} parent=23 // loop_header_branch
            %26 = sbr.rel (%p24) target = $region31
          $region28: #{custom-call.71} parent=23 // loop_body
            %v30 = vld [vmem:[%s28] sm:$0xff]
            %31 = vst [vmem:[%s29] sm:$0xff] %v30
          $region29: #{custom-call.71} parent=23 // loop_footer
            %s27 = sadd.s32 1, %s23
          $region30: #{custom-call.71} parent=23 // loop_footer_branch
            %22 = sbr.rel target = $region26
          $region31: #{custom-call.71} parent=23 // loop_exit
            _
        $region24: #{custom-call.71} parent=8 // pred_fallthru
          _
        // Predicated region
        $region32: #{custom-call.71} parent=8 // pred_check
          _
        $region33: #{custom-call.71} parent=8 // pred_check_branch
          %33 = sbr.rel target = $region35
        $region34: #{custom-call.71} parent=8 // pred_region
          _
        $region35: #{custom-call.71} parent=8 // pred_fallthru
          _
      $region9: #{custom-call.71} parent=4 // pred_fallthru
        _
      // Predicated region
      $region10: #{custom-call.71} parent=4 // pred_check
        _
      $region11: #{custom-call.71} parent=4 // pred_check_branch
        %7 = sbr.rel target = $region13
      $region12: #{custom-call.71} parent=4 // pred_region
        %s9 = ssub.s32 256, 1
        loop: start=0, step=1, limit=1
        $region14: #{custom-call.71} parent=12 // loop_pre_header
          _
        $region15: #{custom-call.71} parent=12 // loop_header
          %s11 = sphi 0, %s15
          %p12 = scmp.ge.s32.totalorder %s11, 1
          %s16 = sphi %s0, %s0
          %s17 = sphi [#allocation0], [#allocation0]
        $region16: #{custom-call.71} parent=12 // loop_header_branch
          %14 = sbr.rel (%p12) target = $region20
        $region17: #{custom-call.71} parent=12 // loop_body
          %v18 = vld [vmem:[%s16] sm:%s9]
          %19 = vst [vmem:[%s17] sm:%s9] %v18
        $region18: #{custom-call.71} parent=12 // loop_footer
          %s15 = sadd.s32 1, %s11
        $region19: #{custom-call.71} parent=12 // loop_footer_branch
          %10 = sbr.rel target = $region15
        $region20: #{custom-call.71} parent=12 // loop_exit
          _
      $region13: #{custom-call.71} parent=4 // pred_fallthru
        _
    $region5: #{custom-call.71} parent=1 // pred_fallthru
      _
    %34 = vnop
    %v35 = vlaneseq
    %v36 = vand.u32 %v35, 127
    %vm37 = vcmp.lt.s32.totalorder %v36, 8
    %v38 = vlaneseq
    %v39 = vshrl.u32 %v38, 7
    %vm41 = vcmp.eq.s32.totalorder %v39, %v36
    %v42 = vld [vmem:[#allocation0] sm:$0xff]
    %v43 = vsel %vm41, %v42, 0.0
    %44 = vadd.xlane.f32.xlu0 %v43
    %v45 = vpop.xlane.xlu0 %44
    %vm46 = vcmp.ge.s32.totalorder %v39, %v36
    %vm47 = vmand %vm46, %vm37
    %v48 = vsel %vm47, %v42, 0.0
    %v49 = vrcp.pop %v45
    %v50 = vmul.f32 %v48, %v49
    %51 = vst [vmem:[#allocation2] sm:$0xff] %v50
    %v52 = vlaneseq
    %v53 = vand.u32 %v52, 127
    %v54 = vlaneseq
    %v55 = vshrl.u32 %v54, 7
    %vm57 = vcmp.eq.s32.totalorder %v53, %v55
    %v58 = vlaneseq
    %v59 = vand.u32 %v58, 127
    %vm60 = vcmp.eq.s32.totalorder %v59, 0
    %v61 = vsel %vm60, 1.0, -1.0
    %v62 = vsel %vm57, %v61, 0.0
    %s63 = scalar_lea.vmem [#allocation2], 1
    %v64 = vld [vmem:[%s63] ss:$0 sm:$0xff]
    %v65 = vxor.u32 %v64, 2147483648
    %v66 = vlaneseq
    %v67 = vand.u32 %v66, 127
    %vm68 = vcmp.eq.s32.totalorder %v67, 1
    %v69 = vmul.f32 %v65, %v62
    %70 = vadd.xlane.f32.xlu0 %v69
    %v71 = vpop.xlane.xlu0 %70
    %v72 = vsel %vm68, %v71, %v62
    %s73 = scalar_lea.vmem [#allocation2], 2
    %v74 = vld [vmem:[%s73] ss:$0 sm:$0xff]
    %v75 = vxor.u32 %v74, 2147483648
    %v76 = vlaneseq
    %v77 = vand.u32 %v76, 127
    %vm78 = vcmp.eq.s32.totalorder %v77, 2
    %v79 = vmul.f32 %v75, %v72
    %80 = vadd.xlane.f32.xlu0 %v79
    %v81 = vpop.xlane.xlu0 %80
    %v82 = vsel %vm78, %v81, %v72
    %s83 = scalar_lea.vmem [#allocation2], 3
    %v84 = vld [vmem:[%s83] ss:$0 sm:$0xff]
    %v85 = vxor.u32 %v84, 2147483648
    %v86 = vlaneseq
    %v87 = vand.u32 %v86, 127
    %vm88 = vcmp.eq.s32.totalorder %v87, 3
    %v89 = vmul.f32 %v85, %v82
    %90 = vadd.xlane.f32.xlu0 %v89
    %v91 = vpop.xlane.xlu0 %90
    %v92 = vsel %vm88, %v91, %v82
    %s93 = scalar_lea.vmem [#allocation2], 4
    %v94 = vld [vmem:[%s93] ss:$0 sm:$0xff]
    %v95 = vxor.u32 %v94, 2147483648
    %v96 = vlaneseq
    %v97 = vand.u32 %v96, 127
    %vm98 = vcmp.eq.s32.totalorder %v97, 4
    %v99 = vmul.f32 %v95, %v92
    %100 = vadd.xlane.f32.xlu0 %v99
    %v101 = vpop.xlane.xlu0 %100
    %v102 = vsel %vm98, %v101, %v92
    %s103 = scalar_lea.vmem [#allocation2], 5
    %v104 = vld [vmem:[%s103] ss:$0 sm:$0xff]
    %v105 = vxor.u32 %v104, 2147483648
    %v106 = vlaneseq
    %v107 = vand.u32 %v106, 127
    %vm108 = vcmp.eq.s32.totalorder %v107, 5
    %v109 = vmul.f32 %v105, %v102
    %110 = vadd.xlane.f32.xlu0 %v109
    %v111 = vpop.xlane.xlu0 %110
    %v112 = vsel %vm108, %v111, %v102
    %s113 = scalar_lea.vmem [#allocation2], 6
    %v114 = vld [vmem:[%s113] ss:$0 sm:$0xff]
    %v115 = vxor.u32 %v114, 2147483648
    %v116 = vlaneseq
    %v117 = vand.u32 %v116, 127
    %vm118 = vcmp.eq.s32.totalorder %v117, 6
    %v119 = vmul.f32 %v115, %v112
    %120 = vadd.xlane.f32.xlu0 %v119
    %v121 = vpop.xlane.xlu0 %120
    %v122 = vsel %vm118, %v121, %v112
    %s123 = scalar_lea.vmem [#allocation2], 7
    %v124 = vld [vmem:[%s123] ss:$0 sm:$0xff]
    %v125 = vxor.u32 %v124, 2147483648
    %v126 = vlaneseq
    %v127 = vand.u32 %v126, 127
    %vm128 = vcmp.eq.s32.totalorder %v127, 7
    %v129 = vmul.f32 %v125, %v122
    %130 = vadd.xlane.f32.xlu0 %v129
    %v131 = vpop.xlane.xlu0 %130
    %v132 = vsel %vm128, %v131, %v122
    %v133 = vrcp.pop %v45
    %v134 = vmul.f32 %v132, %v133
    %vm135 = vweird.f32 %v45
    %v136 = vsel %vm135, %v132, %v134
    %137 = vst [vmem:[#allocation1] sm:$0xff] %v136
    // Predicated region
    $region36: #{custom-call.71} parent=1 // pred_check
      _
    $region37: #{custom-call.71} parent=1 // pred_check_branch
      %139 = sbr.rel (0) target = $region39
    $region38: #{custom-call.71} parent=1 // pred_region
      // Predicated region
      $region40: #{custom-call.71} parent=38 // pred_check
        _
      $region41: #{custom-call.71} parent=38 // pred_check_branch
        %141 = sbr.rel (0) target = $region43
      $region42: #{custom-call.71} parent=38 // pred_region
        // Predicated region
        $region55: #{custom-call.71} parent=42 // pred_check
          _
        $region56: #{custom-call.71} parent=42 // pred_check_branch
          %157 = sbr.rel (0) target = $region58
        $region57: #{custom-call.71} parent=42 // pred_region
          loop: start=0, step=1, limit=1
          $region59: #{custom-call.71} parent=57 // loop_pre_header
            _
          $region60: #{custom-call.71} parent=57 // loop_header
            %s159 = sphi 0, %s163
            %p160 = scmp.ge.s32.totalorder %s159, 1
            %s164 = sphi [#allocation1], [#allocation1]
            %s165 = sphi %s1, %s1
          $region61: #{custom-call.71} parent=57 // loop_header_branch
            %162 = sbr.rel (%p160) target = $region65
          $region62: #{custom-call.71} parent=57 // loop_body
            %v166 = vld [vmem:[%s164] sm:$0xff]
            %167 = vst [vmem:[%s165] sm:$0xff] %v166
          $region63: #{custom-call.71} parent=57 // loop_footer
            %s163 = sadd.s32 1, %s159
          $region64: #{custom-call.71} parent=57 // loop_footer_branch
            %158 = sbr.rel target = $region60
          $region65: #{custom-call.71} parent=57 // loop_exit
            _
        $region58: #{custom-call.71} parent=42 // pred_fallthru
          _
        // Predicated region
        $region66: #{custom-call.71} parent=42 // pred_check
          _
        $region67: #{custom-call.71} parent=42 // pred_check_branch
          %169 = sbr.rel target = $region69
        $region68: #{custom-call.71} parent=42 // pred_region
          _
        $region69: #{custom-call.71} parent=42 // pred_fallthru
          _
      $region43: #{custom-call.71} parent=38 // pred_fallthru
        _
      // Predicated region
      $region44: #{custom-call.71} parent=38 // pred_check
        _
      $region45: #{custom-call.71} parent=38 // pred_check_branch
        %143 = sbr.rel target = $region47
      $region46: #{custom-call.71} parent=38 // pred_region
        %s145 = ssub.s32 256, 1
        loop: start=0, step=1, limit=1
        $region48: #{custom-call.71} parent=46 // loop_pre_header
          _
        $region49: #{custom-call.71} parent=46 // loop_header
          %s147 = sphi 0, %s151
          %p148 = scmp.ge.s32.totalorder %s147, 1
          %s152 = sphi [#allocation1], [#allocation1]
          %s153 = sphi %s1, %s1
        $region50: #{custom-call.71} parent=46 // loop_header_branch
          %150 = sbr.rel (%p148) target = $region54
        $region51: #{custom-call.71} parent=46 // loop_body
          %v154 = vld [vmem:[%s152] sm:%s145]
          %155 = vst [vmem:[%s153] sm:%s145] %v154
        $region52: #{custom-call.71} parent=46 // loop_footer
          %s151 = sadd.s32 1, %s147
        $region53: #{custom-call.71} parent=46 // loop_footer_branch
          %146 = sbr.rel target = $region49
        $region54: #{custom-call.71} parent=46 // loop_exit
          _
      $region47: #{custom-call.71} parent=38 // pred_fallthru
        _
    $region39: #{custom-call.71} parent=1 // pred_fallthru
      _
    %170 = vnop

// kernel: custom-call.34
$region0: #{custom-call.34}
  %s0 = inlined_call_operand.vmem [shape: f32[4,4], index: 0, kind: input, shape index: {}]
  %s1 = inlined_call_operand.vmem [shape: f32[4,4], index: 1, kind: input, shape index: {}]
  %s2 = inlined_call_operand.vmem [shape: f32[4,4], index: 2, kind: input, shape index: {}]
  %s3 = inlined_call_operand.vmem [shape: f32[4,4], index: 3, kind: input, shape index: {}]
  %s4 = inlined_call_operand.vmem [shape: f32[4], index: 4, kind: output, shape index: {0}]
  %s5 = inlined_call_operand.vmem [shape: f32[4], index: 5, kind: output, shape index: {1}]
  %s6 = inlined_call_operand.vmem [shape: f32[4,4], index: 6, kind: output, shape index: {2}]
  %s7 = inlined_call_operand.vmem [shape: f32[4,4], index: 7, kind: output, shape index: {3}]
  %s8 = inlined_call_operand.vmem [shape: f32[4,4], index: 8, kind: output, shape index: {4}]
  %s9 = inlined_call_operand.vmem [shape: f32[4,4], index: 9, kind: output, shape index: {5}]
  %10 = xla_tuple %s4, %s5, %s6, %s7, %s8, %s9
  $region1: #{custom-call.34} parent=0
    #allocation0 [shape = 'u8[4096]{0}', space=vmem, size = 0x1000, scoped, tag = 'operand span for operand 0']
    #allocation1 [shape = 'u8[2048]{0}', space=vmem, size = 0x800, scoped, tag = 'packed  for operand 0']
    #allocation2 [shape = 'u8[4096]{0}', space=vmem, size = 0x1000, scoped, tag = 'operand span for operand 1']
    #allocation3 [shape = 'u8[2048]{0}', space=vmem, size = 0x800, scoped, tag = 'packed  for operand 1']
    #allocation4 [shape = 'u8[4096]{0}', space=vmem, size = 0x1000, scoped, tag = 'operand span for operand 2']
    #allocation5 [shape = 'u8[2048]{0}', space=vmem, size = 0x800, scoped, tag = 'packed  for operand 2']
    #allocation6 [shape = 'u8[4096]{0}', space=vmem, size = 0x1000, scoped, tag = 'operand span for operand 3']
    #allocation7 [shape = 'u8[2048]{0}', space=vmem, size = 0x800, scoped, tag = 'packed  for operand 3']
    #allocation8 [shape = 'u8[4096]{0}', space=vmem, size = 0x1000, scoped, tag = 'operand span for operand 4']
    #allocation9 [shape = 'u8[512]{0}', space=vmem, size = 0x400, scoped, tag = 'packed  for operand 4']
    #allocation10 [shape = 'u8[4096]{0}', space=vmem, size = 0x1000, scoped, tag = 'operand span for operand 5']
    #allocation11 [shape = 'u8[512]{0}', space=vmem, size = 0x400, scoped, tag = 'packed  for operand 5']
    #allocation12 [shape = 'u8[4096]{0}', space=vmem, size = 0x1000, scoped, tag = 'operand span for operand 6']
    #allocation13 [shape = 'u8[2048]{0}', space=vmem, size = 0x800, scoped, tag = 'packed  for operand 6']
    #allocation14 [shape = 'u8[4096]{0}', space=vmem, size = 0x1000, scoped, tag = 'operand span for operand 7']
    #allocation15 [shape = 'u8[2048]{0}', space=vmem, size = 0x800, scoped, tag = 'packed  for operand 7']
    #allocation16 [shape = 'u8[4096]{0}', space=vmem, size = 0x1000, scoped, tag = 'operand span for operand 8']
    #allocation17 [shape = 'u8[2048]{0}', space=vmem, size = 0x800, scoped, tag = 'packed  for operand 8']
    #allocation18 [shape = 'u8[4096]{0}', space=vmem, size = 0x1000, scoped, tag = 'operand span for operand 9']
    #allocation19 [shape = 'u8[2048]{0}', space=vmem, size = 0x800, scoped, tag = 'packed  for operand 9']
    #allocation20 [shape = 'f32[4,4]{1,0}', space=vmem, size = 0x1000, scoped, tag = 'a top-left matrix']
    #allocation21 [shape = 'f32[4,4]{1,0}', space=vmem, size = 0x1000, scoped, tag = 'a top-right matrix']
    #allocation22 [shape = 'f32[4,4]{1,0}', space=vmem, size = 0x1000, scoped, tag = 'a bottom-left matrix']
    #allocation23 [shape = 'f32[4,4]{1,0}', space=vmem, size = 0x1000, scoped, tag = 'a bottom-right matrix']
    %p12 = scmp.gt.s32.totalorder 4, 0
    // Predicated region
    $region2: #{custom-call.34} parent=1 // pred_check
      %p13 = pneg %p12
    $region3: #{custom-call.34} parent=1 // pred_check_branch
      %15 = sbr.rel (%p13) target = $region5
    $region4: #{custom-call.34} parent=1 // pred_region
      %s16 = sshra.s32 4, 3
      %p17 = scmp.gt.s32.totalorder %s16, 0
      // Predicated region
      $region6: #{custom-call.34} parent=4 // pred_check
        %p18 = pneg %p17
      $region7: #{custom-call.34} parent=4 // pred_check_branch
        %20 = sbr.rel (%p18) target = $region9
      $region8: #{custom-call.34} parent=4 // pred_region
        %s21 = ssub.s32 %s16, 1
        %s22 = smul.u32 %s21, 128
        %s23 = sshra.s32 %s22, 4
        %s24 = scalar_lea.vmem %s0, %s23
        %v25 = vld [vmem:[%s0] sm:$0xff]
        // While loop
        $region10: #{custom-call.34} parent=8 // loop_pre_header
          _
        $region11: #{custom-call.34} parent=8 // loop_header
          %s26 = sphi %s0, %s48
          %s27 = sphi [#allocation1], %s49
          %v28 = vphi %v25, %v50
          %s29 = ssub.s32 %s24, 64
          %p30 = scmp.gt.s32.totalorder %s26, %s29
        $region12: #{custom-call.34} parent=8 // loop_header_branch
          %32 = sbr.rel (%p30) target = $region16
        $region13: #{custom-call.34} parent=8 // loop_body
          %33 = vst [vmem:[%s27] sm:$0xff] %v28
          %v34 = vld [vmem:[%s26 + $0x8] sm:$0xff]
          %35 = vst [vmem:[%s27 + $0x8] sm:$0xff] %v34
          %v36 = vld [vmem:[%s26 + $0x10] sm:$0xff]
          %37 = vst [vmem:[%s27 + $0x10] sm:$0xff] %v36
          %v38 = vld [vmem:[%s26 + $0x18] sm:$0xff]
          %39 = vst [vmem:[%s27 + $0x18] sm:$0xff] %v38
          %v40 = vld [vmem:[%s26 + $0x20] sm:$0xff]
          %41 = vst [vmem:[%s27 + $0x20] sm:$0xff] %v40
          %v42 = vld [vmem:[%s26 + $0x28] sm:$0xff]
          %43 = vst [vmem:[%s27 + $0x28] sm:$0xff] %v42
          %v44 = vld [vmem:[%s26 + $0x30] sm:$0xff]
          %45 = vst [vmem:[%s27 + $0x30] sm:$0xff] %v44
          %v46 = vld [vmem:[%s26 + $0x38] sm:$0xff]
          %47 = vst [vmem:[%s27 + $0x38] sm:$0xff] %v46
        $region14: #{custom-call.34} parent=8 // loop_footer
          %s48 = scalar_lea.vmem %s26, 64
          %s49 = scalar_lea.vmem %s27, 64
          %v50 = vld [vmem:[%s26 + $0x40] sm:$0xff]
        $region15: #{custom-call.34} parent=8 // loop_footer_branch
          %51 = sbr.rel target = $region11
        $region16: #{custom-call.34} parent=8 // loop_exit
          _
        // While loop
        $region17: #{custom-call.34} parent=8 // loop_pre_header
          _
        $region18: #{custom-call.34} parent=8 // loop_header
          %s52 = sphi %s26, %s60
          %s53 = sphi %s27, %s61
          %v54 = vphi %v28, %v54
          %p55 = scmp.gt.s32.totalorder %s52, %s24
        $region19: #{custom-call.34} parent=8 // loop_header_branch
          %57 = sbr.rel (%p55) target = $region23
        $region20: #{custom-call.34} parent=8 // loop_body
          %v58 = vld [vmem:[%s52] sm:$0xff]
          %59 = vst [vmem:[%s53] sm:$0xff] %v58
        $region21: #{custom-call.34} parent=8 // loop_footer
          %s60 = scalar_lea.vmem %s52, 8
          %s61 = scalar_lea.vmem %s53, 8
        $region22: #{custom-call.34} parent=8 // loop_footer_branch
          %62 = sbr.rel target = $region18
        $region23: #{custom-call.34} parent=8 // loop_exit
          _
      $region9: #{custom-call.34} parent=4 // pred_fallthru
        _
      %s63 = sand.u32 4, 7
      %s64 = sshll.u32 1, %s63
      %s65 = ssub.s32 %s64, 1
      %s66 = smul.u32 %s16, 128
      %s67 = sshra.s32 %s66, 4
      %s68 = scalar_lea.vmem [#allocation1], %s67
      %s69 = smul.u32 %s16, 128
      %s70 = sshra.s32 %s69, 4
      %s71 = scalar_lea.vmem %s0, %s70
      %v72 = vld [vmem:[%s71] sm:%s65]
      %73 = vst [vmem:[%s68] sm:%s65] %v72
    $region5: #{custom-call.34} parent=1 // pred_fallthru
      _
    %p75 = scmp.gt.s32.totalorder 4, 0
    // Predicated region
    $region24: #{custom-call.34} parent=1 // pred_check
      %p76 = pneg %p75
    $region25: #{custom-call.34} parent=1 // pred_check_branch
      %78 = sbr.rel (%p76) target = $region27
    $region26: #{custom-call.34} parent=1 // pred_region
      %s79 = sshra.s32 4, 3
      %p80 = scmp.gt.s32.totalorder %s79, 0
      // Predicated region
      $region28: #{custom-call.34} parent=26 // pred_check
        %p81 = pneg %p80
      $region29: #{custom-call.34} parent=26 // pred_check_branch
        %83 = sbr.rel (%p81) target = $region31
      $region30: #{custom-call.34} parent=26 // pred_region
        %s84 = ssub.s32 %s79, 1
        %s85 = smul.u32 %s84, 128
        %s86 = sshra.s32 %s85, 4
        %s87 = scalar_lea.vmem %s1, %s86
        %v88 = vld [vmem:[%s1] sm:$0xff]
        // While loop
        $region32: #{custom-call.34} parent=30 // loop_pre_header
          _
        $region33: #{custom-call.34} parent=30 // loop_header
          %s89 = sphi %s1, %s111
          %s90 = sphi [#allocation3], %s112
          %v91 = vphi %v88, %v113
          %s92 = ssub.s32 %s87, 64
          %p93 = scmp.gt.s32.totalorder %s89, %s92
        $region34: #{custom-call.34} parent=30 // loop_header_branch
          %95 = sbr.rel (%p93) target = $region38
        $region35: #{custom-call.34} parent=30 // loop_body
          %96 = vst [vmem:[%s90] sm:$0xff] %v91
          %v97 = vld [vmem:[%s89 + $0x8] sm:$0xff]
          %98 = vst [vmem:[%s90 + $0x8] sm:$0xff] %v97
          %v99 = vld [vmem:[%s89 + $0x10] sm:$0xff]
          %100 = vst [vmem:[%s90 + $0x10] sm:$0xff] %v99
          %v101 = vld [vmem:[%s89 + $0x18] sm:$0xff]
          %102 = vst [vmem:[%s90 + $0x18] sm:$0xff] %v101
          %v103 = vld [vmem:[%s89 + $0x20] sm:$0xff]
          %104 = vst [vmem:[%s90 + $0x20] sm:$0xff] %v103
          %v105 = vld [vmem:[%s89 + $0x28] sm:$0xff]
          %106 = vst [vmem:[%s90 + $0x28] sm:$0xff] %v105
          %v107 = vld [vmem:[%s89 + $0x30] sm:$0xff]
          %108 = vst [vmem:[%s90 + $0x30] sm:$0xff] %v107
          %v109 = vld [vmem:[%s89 + $0x38] sm:$0xff]
          %110 = vst [vmem:[%s90 + $0x38] sm:$0xff] %v109
        $region36: #{custom-call.34} parent=30 // loop_footer
          %s111 = scalar_lea.vmem %s89, 64
          %s112 = scalar_lea.vmem %s90, 64
          %v113 = vld [vmem:[%s89 + $0x40] sm:$0xff]
        $region37: #{custom-call.34} parent=30 // loop_footer_branch
          %114 = sbr.rel target = $region33
        $region38: #{custom-call.34} parent=30 // loop_exit
          _
        // While loop
        $region39: #{custom-call.34} parent=30 // loop_pre_header
          _
        $region40: #{custom-call.34} parent=30 // loop_header
          %s115 = sphi %s89, %s123
          %s116 = sphi %s90, %s124
          %v117 = vphi %v91, %v117
          %p118 = scmp.gt.s32.totalorder %s115, %s87
        $region41: #{custom-call.34} parent=30 // loop_header_branch
          %120 = sbr.rel (%p118) target = $region45
        $region42: #{custom-call.34} parent=30 // loop_body
          %v121 = vld [vmem:[%s115] sm:$0xff]
          %122 = vst [vmem:[%s116] sm:$0xff] %v121
        $region43: #{custom-call.34} parent=30 // loop_footer
          %s123 = scalar_lea.vmem %s115, 8
          %s124 = scalar_lea.vmem %s116, 8
        $region44: #{custom-call.34} parent=30 // loop_footer_branch
          %125 = sbr.rel target = $region40
        $region45: #{custom-call.34} parent=30 // loop_exit
          _
      $region31: #{custom-call.34} parent=26 // pred_fallthru
        _
      %s126 = sand.u32 4, 7
      %s127 = sshll.u32 1, %s126
      %s128 = ssub.s32 %s127, 1
      %s129 = smul.u32 %s79, 128
      %s130 = sshra.s32 %s129, 4
      %s131 = scalar_lea.vmem [#allocation3], %s130
      %s132 = smul.u32 %s79, 128
      %s133 = sshra.s32 %s132, 4
      %s134 = scalar_lea.vmem %s1, %s133
      %v135 = vld [vmem:[%s134] sm:%s128]
      %136 = vst [vmem:[%s131] sm:%s128] %v135
    $region27: #{custom-call.34} parent=1 // pred_fallthru
      _
    %p138 = scmp.gt.s32.totalorder 4, 0
    // Predicated region
    $region46: #{custom-call.34} parent=1 // pred_check
      %p139 = pneg %p138
    $region47: #{custom-call.34} parent=1 // pred_check_branch
      %141 = sbr.rel (%p139) target = $region49
    $region48: #{custom-call.34} parent=1 // pred_region
      %s142 = sshra.s32 4, 3
      %p143 = scmp.gt.s32.totalorder %s142, 0
      // Predicated region
      $region50: #{custom-call.34} parent=48 // pred_check
        %p144 = pneg %p143
      $region51: #{custom-call.34} parent=48 // pred_check_branch
        %146 = sbr.rel (%p144) target = $region53
      $region52: #{custom-call.34} parent=48 // pred_region
        %s147 = ssub.s32 %s142, 1
        %s148 = smul.u32 %s147, 128
        %s149 = sshra.s32 %s148, 4
        %s150 = scalar_lea.vmem %s2, %s149
        %v151 = vld [vmem:[%s2] sm:$0xff]
        // While loop
        $region54: #{custom-call.34} parent=52 // loop_pre_header
          _
        $region55: #{custom-call.34} parent=52 // loop_header
          %s152 = sphi %s2, %s174
          %s153 = sphi [#allocation5], %s175
          %v154 = vphi %v151, %v176
          %s155 = ssub.s32 %s150, 64
          %p156 = scmp.gt.s32.totalorder %s152, %s155
        $region56: #{custom-call.34} parent=52 // loop_header_branch
          %158 = sbr.rel (%p156) target = $region60
        $region57: #{custom-call.34} parent=52 // loop_body
          %159 = vst [vmem:[%s153] sm:$0xff] %v154
          %v160 = vld [vmem:[%s152 + $0x8] sm:$0xff]
          %161 = vst [vmem:[%s153 + $0x8] sm:$0xff] %v160
          %v162 = vld [vmem:[%s152 + $0x10] sm:$0xff]
          %163 = vst [vmem:[%s153 + $0x10] sm:$0xff] %v162
          %v164 = vld [vmem:[%s152 + $0x18] sm:$0xff]
          %165 = vst [vmem:[%s153 + $0x18] sm:$0xff] %v164
          %v166 = vld [vmem:[%s152 + $0x20] sm:$0xff]
          %167 = vst [vmem:[%s153 + $0x20] sm:$0xff] %v166
          %v168 = vld [vmem:[%s152 + $0x28] sm:$0xff]
          %169 = vst [vmem:[%s153 + $0x28] sm:$0xff] %v168
          %v170 = vld [vmem:[%s152 + $0x30] sm:$0xff]
          %171 = vst [vmem:[%s153 + $0x30] sm:$0xff] %v170
          %v172 = vld [vmem:[%s152 + $0x38] sm:$0xff]
          %173 = vst [vmem:[%s153 + $0x38] sm:$0xff] %v172
        $region58: #{custom-call.34} parent=52 // loop_footer
          %s174 = scalar_lea.vmem %s152, 64
          %s175 = scalar_lea.vmem %s153, 64
          %v176 = vld [vmem:[%s152 + $0x40] sm:$0xff]
        $region59: #{custom-call.34} parent=52 // loop_footer_branch
          %177 = sbr.rel target = $region55
        $region60: #{custom-call.34} parent=52 // loop_exit
          _
        // While loop
        $region61: #{custom-call.34} parent=52 // loop_pre_header
          _
        $region62: #{custom-call.34} parent=52 // loop_header
          %s178 = sphi %s152, %s186
          %s179 = sphi %s153, %s187
          %v180 = vphi %v154, %v180
          %p181 = scmp.gt.s32.totalorder %s178, %s150
        $region63: #{custom-call.34} parent=52 // loop_header_branch
          %183 = sbr.rel (%p181) target = $region67
        $region64: #{custom-call.34} parent=52 // loop_body
          %v184 = vld [vmem:[%s178] sm:$0xff]
          %185 = vst [vmem:[%s179] sm:$0xff] %v184
        $region65: #{custom-call.34} parent=52 // loop_footer
          %s186 = scalar_lea.vmem %s178, 8
          %s187 = scalar_lea.vmem %s179, 8
        $region66: #{custom-call.34} parent=52 // loop_footer_branch
          %188 = sbr.rel target = $region62
        $region67: #{custom-call.34} parent=52 // loop_exit
          _
      $region53: #{custom-call.34} parent=48 // pred_fallthru
        _
      %s189 = sand.u32 4, 7
      %s190 = sshll.u32 1, %s189
      %s191 = ssub.s32 %s190, 1
      %s192 = smul.u32 %s142, 128
      %s193 = sshra.s32 %s192, 4
      %s194 = scalar_lea.vmem [#allocation5], %s193
      %s195 = smul.u32 %s142, 128
      %s196 = sshra.s32 %s195, 4
      %s197 = scalar_lea.vmem %s2, %s196
      %v198 = vld [vmem:[%s197] sm:%s191]
      %199 = vst [vmem:[%s194] sm:%s191] %v198
    $region49: #{custom-call.34} parent=1 // pred_fallthru
      _
    %p201 = scmp.gt.s32.totalorder 4, 0
    // Predicated region
    $region68: #{custom-call.34} parent=1 // pred_check
      %p202 = pneg %p201
    $region69: #{custom-call.34} parent=1 // pred_check_branch
      %204 = sbr.rel (%p202) target = $region71
    $region70: #{custom-call.34} parent=1 // pred_region
      %s205 = sshra.s32 4, 3
      %p206 = scmp.gt.s32.totalorder %s205, 0
      // Predicated region
      $region72: #{custom-call.34} parent=70 // pred_check
        %p207 = pneg %p206
      $region73: #{custom-call.34} parent=70 // pred_check_branch
        %209 = sbr.rel (%p207) target = $region75
      $region74: #{custom-call.34} parent=70 // pred_region
        %s210 = ssub.s32 %s205, 1
        %s211 = smul.u32 %s210, 128
        %s212 = sshra.s32 %s211, 4
        %s213 = scalar_lea.vmem %s3, %s212
        %v214 = vld [vmem:[%s3] sm:$0xff]
        // While loop
        $region76: #{custom-call.34} parent=74 // loop_pre_header
          _
        $region77: #{custom-call.34} parent=74 // loop_header
          %s215 = sphi %s3, %s237
          %s216 = sphi [#allocation7], %s238
          %v217 = vphi %v214, %v239
          %s218 = ssub.s32 %s213, 64
          %p219 = scmp.gt.s32.totalorder %s215, %s218
        $region78: #{custom-call.34} parent=74 // loop_header_branch
          %221 = sbr.rel (%p219) target = $region82
        $region79: #{custom-call.34} parent=74 // loop_body
          %222 = vst [vmem:[%s216] sm:$0xff] %v217
          %v223 = vld [vmem:[%s215 + $0x8] sm:$0xff]
          %224 = vst [vmem:[%s216 + $0x8] sm:$0xff] %v223
          %v225 = vld [vmem:[%s215 + $0x10] sm:$0xff]
          %226 = vst [vmem:[%s216 + $0x10] sm:$0xff] %v225
          %v227 = vld [vmem:[%s215 + $0x18] sm:$0xff]
          %228 = vst [vmem:[%s216 + $0x18] sm:$0xff] %v227
          %v229 = vld [vmem:[%s215 + $0x20] sm:$0xff]
          %230 = vst [vmem:[%s216 + $0x20] sm:$0xff] %v229
          %v231 = vld [vmem:[%s215 + $0x28] sm:$0xff]
          %232 = vst [vmem:[%s216 + $0x28] sm:$0xff] %v231
          %v233 = vld [vmem:[%s215 + $0x30] sm:$0xff]
          %234 = vst [vmem:[%s216 + $0x30] sm:$0xff] %v233
          %v235 = vld [vmem:[%s215 + $0x38] sm:$0xff]
          %236 = vst [vmem:[%s216 + $0x38] sm:$0xff] %v235
        $region80: #{custom-call.34} parent=74 // loop_footer
          %s237 = scalar_lea.vmem %s215, 64
          %s238 = scalar_lea.vmem %s216, 64
          %v239 = vld [vmem:[%s215 + $0x40] sm:$0xff]
        $region81: #{custom-call.34} parent=74 // loop_footer_branch
          %240 = sbr.rel target = $region77
        $region82: #{custom-call.34} parent=74 // loop_exit
          _
        // While loop
        $region83: #{custom-call.34} parent=74 // loop_pre_header
          _
        $region84: #{custom-call.34} parent=74 // loop_header
          %s241 = sphi %s215, %s249
          %s242 = sphi %s216, %s250
          %v243 = vphi %v217, %v243
          %p244 = scmp.gt.s32.totalorder %s241, %s213
        $region85: #{custom-call.34} parent=74 // loop_header_branch
          %246 = sbr.rel (%p244) target = $region89
        $region86: #{custom-call.34} parent=74 // loop_body
          %v247 = vld [vmem:[%s241] sm:$0xff]
          %248 = vst [vmem:[%s242] sm:$0xff] %v247
        $region87: #{custom-call.34} parent=74 // loop_footer
          %s249 = scalar_lea.vmem %s241, 8
          %s250 = scalar_lea.vmem %s242, 8
        $region88: #{custom-call.34} parent=74 // loop_footer_branch
          %251 = sbr.rel target = $region84
        $region89: #{custom-call.34} parent=74 // loop_exit
          _
      $region75: #{custom-call.34} parent=70 // pred_fallthru
        _
      %s252 = sand.u32 4, 7
      %s253 = sshll.u32 1, %s252
      %s254 = ssub.s32 %s253, 1
      %s255 = smul.u32 %s205, 128
      %s256 = sshra.s32 %s255, 4
      %s257 = scalar_lea.vmem [#allocation7], %s256
      %s258 = smul.u32 %s205, 128
      %s259 = sshra.s32 %s258, 4
      %s260 = scalar_lea.vmem %s3, %s259
      %v261 = vld [vmem:[%s260] sm:%s254]
      %262 = vst [vmem:[%s257] sm:%s254] %v261
    $region71: #{custom-call.34} parent=1 // pred_fallthru
      _
    %s264 = sshll.u32 1, 4
    %s265 = ssub.s32 %s264, 1
    %v266 = vld [vmem:[#allocation1] sm:%s265]
    %267 = vst [vmem:[#allocation0] sm:%s265] %v266
    %s269 = sshll.u32 1, 4
    %s270 = ssub.s32 %s269, 1
    %v271 = vld [vmem:[#allocation3] sm:%s270]
    %272 = vst [vmem:[#allocation2] sm:%s270] %v271
    %s274 = sshll.u32 1, 4
    %s275 = ssub.s32 %s274, 1
    %v276 = vld [vmem:[#allocation5] sm:%s275]
    %277 = vst [vmem:[#allocation4] sm:%s275] %v276
    %s279 = sshll.u32 1, 4
    %s280 = ssub.s32 %s279, 1
    %v281 = vld [vmem:[#allocation7] sm:%s280]
    %282 = vst [vmem:[#allocation6] sm:%s280] %v281
    %s283 = smov [#allocation20]
    %v284 = vld [vmem:[#allocation0] sm:$0xff]
    %285 = vst [vmem:[%s283] sm:$0xff] %v284
    %s286 = smov [#allocation21]
    %v287 = vld [vmem:[#allocation2] sm:$0xff]
    %288 = vst [vmem:[%s286] sm:$0xff] %v287
    %s289 = smov [#allocation22]
    %v290 = vld [vmem:[#allocation4] sm:$0xff]
    %291 = vst [vmem:[%s289] sm:$0xff] %v290
    %s292 = smov [#allocation23]
    %v293 = vld [vmem:[#allocation6] sm:$0xff]
    %294 = vst [vmem:[%s292] sm:$0xff] %v293
    %295 = vst [vmem:[#allocation12] sm:$0xff] 0.0
    %296 = vst [vmem:[#allocation14] sm:$0xff] 0.0
    %297 = vst [vmem:[#allocation16] sm:$0xff] 0.0
    %298 = vst [vmem:[#allocation18] sm:$0xff] 0.0
    %s299 = smov [#allocation12]
    %v300 = vlaneseq
    %v301 = vand.u32 %v300, 127
    %v302 = vmov %v301
    %v303 = vlaneseq
    %v304 = vshrl.u32 %v303, 7
    %v305 = vmov %v304
    %v306 = vld [vmem:[%s299] sm:$0xf]
    %vm309 = vcmp.eq.s32.totalorder %v305, %v302
    %v310 = vsel %vm309, 1.0, %v306
    %311 = vst [vmem:[%s299] sm:$0xf] %v310
    %s312 = smov [#allocation18]
    %v313 = vlaneseq
    %v314 = vand.u32 %v313, 127
    %v315 = vmov %v314
    %v316 = vlaneseq
    %v317 = vshrl.u32 %v316, 7
    %v318 = vmov %v317
    %v319 = vld [vmem:[%s312] sm:$0xf]
    %vm322 = vcmp.eq.s32.totalorder %v318, %v315
    %v323 = vsel %vm322, 1.0, %v319
    %324 = vst [vmem:[%s312] sm:$0xf] %v323
    // While loop
    $region90: #{custom-call.34} parent=1 // loop_pre_header
      _
    $region91: #{custom-call.34} parent=1 // loop_header
      %s326 = sphi 0, %s868
      %v327 = vlaneseq
      %v328 = vand.u32 %v327, 127
      %v329 = vmov %v328
      %v330 = vlaneseq
      %v331 = vshrl.u32 %v330, 7
      %v332 = vmov %v331
      %s333 = smov [#allocation20]
      %v334 = vlaneseq
      %v335 = vand.u32 %v334, 127
      %vm336 = vcmp.ge.s32.totalorder %v335, 0
      %vm337 = vcmp.lt.s32.totalorder %v335, 4
      %vm338 = vmand %vm336, %vm337
      %v339 = vld [vmem:[%s333] sm:$0xf]
      %v340 = vsel %vm338, %v339, 0.0
      %v341 = vmul.f32 %v340, %v340
      %vm344 = vcmp.eq.s32.totalorder %v332, %v329
      %v345 = vsel %vm344, 0.0, %v341
      %v346 = vlaneseq
      %v347 = vand.u32 %v346, 127
      %v348 = vmov %v347
      %v349 = vlaneseq
      %v350 = vshrl.u32 %v349, 7
      %v351 = vmov %v350
      %s352 = smov [#allocation21]
      %v353 = vlaneseq
      %v354 = vand.u32 %v353, 127
      %vm355 = vcmp.ge.s32.totalorder %v354, 0
      %vm356 = vcmp.lt.s32.totalorder %v354, 4
      %vm357 = vmand %vm355, %vm356
      %v358 = vld [vmem:[%s352] sm:$0xf]
      %v359 = vsel %vm357, %v358, 0.0
      %v360 = vmul.f32 %v359, %v359
      %v361 = vadd.f32 %v345, %v360
      %v362 = vadd.f32 %v341, %v360
      %v363 = vlaneseq
      %v364 = vand.u32 %v363, 127
      %v365 = vmov %v364
      %v366 = vlaneseq
      %v367 = vshrl.u32 %v366, 7
      %v368 = vmov %v367
      %s369 = smov [#allocation22]
      %v370 = vlaneseq
      %v371 = vand.u32 %v370, 127
      %vm372 = vcmp.ge.s32.totalorder %v371, 0
      %vm373 = vcmp.lt.s32.totalorder %v371, 4
      %vm374 = vmand %vm372, %vm373
      %v375 = vld [vmem:[%s369] sm:$0xf]
      %v376 = vsel %vm374, %v375, 0.0
      %v377 = vmul.f32 %v376, %v376
      %v378 = vadd.f32 %v361, %v377
      %v379 = vadd.f32 %v362, %v377
      %v380 = vlaneseq
      %v381 = vand.u32 %v380, 127
      %v382 = vmov %v381
      %v383 = vlaneseq
      %v384 = vshrl.u32 %v383, 7
      %v385 = vmov %v384
      %s386 = smov [#allocation23]
      %v387 = vlaneseq
      %v388 = vand.u32 %v387, 127
      %vm389 = vcmp.ge.s32.totalorder %v388, 0
      %vm390 = vcmp.lt.s32.totalorder %v388, 4
      %vm391 = vmand %vm389, %vm390
      %v392 = vld [vmem:[%s386] sm:$0xf]
      %v393 = vsel %vm391, %v392, 0.0
      %v394 = vmul.f32 %v393, %v393
      %vm397 = vcmp.eq.s32.totalorder %v385, %v382
      %v398 = vsel %vm397, 0.0, %v394
      %v399 = vadd.f32 %v378, %v398
      %v400 = vadd.f32 %v379, %v394
      %401 = vadd.xlane.f32.xlu0 %v400
      %v402 = vpop.xlane.xlu0 %401
      %v403 = vrot.slane %v402, 4
      %v404 = vadd.f32 %v402, %v403
      %v405 = vrot.slane %v404, 2
      %v406 = vadd.f32 %v404, %v405
      %v407 = vrot.slane %v406, 1
      %v408 = vadd.f32 %v406, %v407
      %409 = vadd.xlane.f32.xlu0 %v399
      %v410 = vpop.xlane.xlu0 %409
      %v411 = vrot.slane %v410, 4
      %v412 = vadd.f32 %v410, %v411
      %v413 = vrot.slane %v412, 2
      %v414 = vadd.f32 %v412, %v413
      %v415 = vrot.slane %v414, 1
      %v416 = vadd.f32 %v414, %v415
      %s417 = vtos %v416
      %s418 = vtos %v408
      %s419 = smul.f32 1e-10, %s418
      %p420 = scmp.le.f32.partialorder %s417, %s419
      %p421 = scmp.ge.s32.totalorder %s326, 15
      %p422 = por %p420, %p421
    $region92: #{custom-call.34} parent=1 // loop_header_branch
      %870 = sbr.rel (%p422) target = $region96
    $region93: #{custom-call.34} parent=1 // loop_body
      loop: start=0, step=1, limit=7
      $region97: #{custom-call.34} parent=93 // loop_pre_header
        _
      $region98: #{custom-call.34} parent=93 // loop_header
        %s424 = sphi 0, %s428
        %p425 = scmp.ge.s32.totalorder %s424, 7
      $region99: #{custom-call.34} parent=93 // loop_header_branch
        %427 = sbr.rel (%p425) target = $region103
      $region100: #{custom-call.34} parent=93 // loop_body
        #allocation24 [shape = 'f32[1024]{0}', space=vmem, size = 0x1000, scoped, tag = 'a_tl_diag vmem']
        #allocation25 [shape = 'f32[1024]{0}', space=vmem, size = 0x1000, scoped, tag = 'a_tr_diag vmem']
        #allocation26 [shape = 'f32[1024]{0}', space=vmem, size = 0x1000, scoped, tag = 'a_br_diag vmem']
        #allocation27 [shape = 'f32[1024]{0}', space=vmem, size = 0x1000, scoped, tag = 'rt1 vmem']
        #allocation28 [shape = 'f32[1024]{0}', space=vmem, size = 0x1000, scoped, tag = 'rt2 vmem']
        #allocation29 [shape = 'f32[1024]{0}', space=vmem, size = 0x1000, scoped, tag = 'c vmem']
        #allocation30 [shape = 'f32[1024]{0}', space=vmem, size = 0x1000, scoped, tag = 's vmem']
        #allocation31 [shape = 'f32[4096]{0}', space=vmem, size = 0x4000, scoped, tag = 'c broadcast']
        #allocation32 [shape = 'f32[4096]{0}', space=vmem, size = 0x4000, scoped, tag = 's broadcast']
        %s429 = smov [#allocation20]
        %s430 = smov [#allocation24]
        %v431 = vlaneseq
        %v432 = vand.u32 %v431, 127
        %v433 = vmov %v432
        %v434 = vlaneseq
        %v435 = vshrl.u32 %v434, 7
        %v436 = vmov %v435
        %v437 = vld [vmem:[%s429] sm:$0xf]
        %vm440 = vcmp.eq.s32.totalorder %v436, %v433
        %v441 = vsel %vm440, %v437, 0.0
        %v442 = vrot.slane %v441, 4
        %v443 = vadd.f32 %v441, %v442
        %v444 = vrot.slane %v443, 2
        %v445 = vadd.f32 %v443, %v444
        %v446 = vrot.slane %v445, 1
        %v447 = vadd.f32 %v445, %v446
        %448 = vst [vmem:[%s430] sm:$0x1] %v447
        %s449 = smov [#allocation21]
        %s450 = smov [#allocation25]
        %v451 = vlaneseq
        %v452 = vand.u32 %v451, 127
        %v453 = vmov %v452
        %v454 = vlaneseq
        %v455 = vshrl.u32 %v454, 7
        %v456 = vmov %v455
        %v457 = vld [vmem:[%s449] sm:$0xf]
        %vm460 = vcmp.eq.s32.totalorder %v456, %v453
        %v461 = vsel %vm460, %v457, 0.0
        %v462 = vrot.slane %v461, 4
        %v463 = vadd.f32 %v461, %v462
        %v464 = vrot.slane %v463, 2
        %v465 = vadd.f32 %v463, %v464
        %v466 = vrot.slane %v465, 1
        %v467 = vadd.f32 %v465, %v466
        %468 = vst [vmem:[%s450] sm:$0x1] %v467
        %s469 = smov [#allocation23]
        %s470 = smov [#allocation26]
        %v471 = vlaneseq
        %v472 = vand.u32 %v471, 127
        %v473 = vmov %v472
        %v474 = vlaneseq
        %v475 = vshrl.u32 %v474, 7
        %v476 = vmov %v475
        %v477 = vld [vmem:[%s469] sm:$0xf]
        %vm480 = vcmp.eq.s32.totalorder %v476, %v473
        %v481 = vsel %vm480, %v477, 0.0
        %v482 = vrot.slane %v481, 4
        %v483 = vadd.f32 %v481, %v482
        %v484 = vrot.slane %v483, 2
        %v485 = vadd.f32 %v483, %v484
        %v486 = vrot.slane %v485, 1
        %v487 = vadd.f32 %v485, %v486
        %488 = vst [vmem:[%s470] sm:$0x1] %v487
        %s489 = smov [#allocation29]
        %s490 = smov [#allocation30]
        %s491 = smov [#allocation24]
        %v492 = vld [vmem:[%s491] sm:$0xff]
        %s493 = smov [#allocation25]
        %v494 = vld [vmem:[%s493] sm:$0xff]
        %s495 = smov [#allocation26]
        %v496 = vld [vmem:[%s495] sm:$0xff]
        %v497 = vsub.f32 %v496, %v492
        %v498 = vmul.f32 2.0, %v494
        %v499 = vrcp.pop %v498
        %v500 = vmul.f32 %v497, %v499
        %vm501 = vcmp.ge.f32.partialorder %v500, 0.0
        %v502 = vmul.f32 %v500, %v500
        %v503 = vadd.f32 1.0, %v502
        %v504 = vrsqrt.pop %v503
        %v505 = vmul.f32 %v503, %v504
        %vm506 = vcmp.eq.f32.partialorder %v503, inf
        %v507 = vsel %vm506, %v503, %v505
        %vm508 = vcmp.eq.f32.partialorder %v503, 0.0
        %v509 = vand.u32 %v503, 2147483648
        %v510 = vsel %vm508, %v509, %v507
        %v511 = vxor.u32 %v510, 2147483648
        %v512 = vsel %vm501, %v510, %v511
        %v513 = vadd.f32 %v500, %v512
        %v514 = vrcp.pop %v513
        %v515 = vand.u32 2147483647, %v492
        %v516 = vand.u32 2147483647, %v494
        %v517 = vand.u32 2147483647, %v496
        %v518 = vmin.f32 %v515, %v517
        %v519 = vmul.f32 1.1920929e-08, %v518
        %vm520 = vcmp.le.f32.partialorder %v516, %v519
        %v521 = vsel %vm520, 0.0, %v514
        %v522 = vmul.f32 %v521, %v521
        %v523 = vadd.f32 1.0, %v522
        %v524 = vrsqrt.pop %v523
        %v525 = vmul.f32 %v521, %v524
        %v526 = vmul.f32 %v521, %v494
        %v527 = vsub.f32 %v492, %v526
        %v528 = vmul.f32 %v521, %v494
        %v529 = vadd.f32 %v496, %v528
        %s530 = smov [#allocation27]
        %531 = vst [vmem:[%s530] sm:$0xff] %v527
        %s532 = smov [#allocation28]
        %533 = vst [vmem:[%s532] sm:$0xff] %v529
        %s534 = smov %s489
        %535 = vst [vmem:[%s534] sm:$0xff] %v524
        %s536 = smov %s490
        %537 = vst [vmem:[%s536] sm:$0xff] %v525
        %s538 = smov [#allocation29]
        %v539 = vld [vmem:[%s538] ss:$0 sm:$0xff]
        %v540 = vlaneseq
        %v541 = vand.u32 %v540, 127
        %v542 = vmov %v541
        %v543 = vlaneseq
        %v544 = vshrl.u32 %v543, 7
        %v545 = vmov %v544
        %vm547 = vcmp.eq.s32.totalorder %v545, %v542
        %v548 = vsel %vm547, %v539, 0.0
        %549 = vadd.xlane.f32.xlu0 %v548
        %v550 = vpop.xlane.xlu0 %549
        %s551 = smov [#allocation31]
        %552 = vst [vmem:[%s551] sm:$0xff] %v550
        %s553 = smov [#allocation30]
        %v554 = vld [vmem:[%s553] ss:$0 sm:$0xff]
        %v555 = vlaneseq
        %v556 = vand.u32 %v555, 127
        %v557 = vmov %v556
        %v558 = vlaneseq
        %v559 = vshrl.u32 %v558, 7
        %v560 = vmov %v559
        %vm562 = vcmp.eq.s32.totalorder %v560, %v557
        %v563 = vsel %vm562, %v554, 0.0
        %564 = vadd.xlane.f32.xlu0 %v563
        %v565 = vpop.xlane.xlu0 %564
        %s566 = smov [#allocation32]
        %567 = vst [vmem:[%s566] sm:$0xff] %v565
        %s568 = smov [#allocation31]
        %v569 = vld [vmem:[%s568] sm:$0xff]
        %s570 = smov [#allocation32]
        %v571 = vld [vmem:[%s570] sm:$0xff]
        %s572 = smov [#allocation20]
        %s573 = smov [#allocation21]
        %s574 = smov [#allocation22]
        %s575 = smov [#allocation23]
        %v576 = vld [vmem:[%s572] sm:$0xf]
        %v577 = vld [vmem:[%s573] sm:$0xf]
        %v578 = vld [vmem:[%s574] sm:$0xf]
        %v579 = vld [vmem:[%s575] sm:$0xf]
        %v580 = vmul.f32 %v569, %v576
        %v581 = vmul.f32 %v571, %v578
        %v582 = vsub.f32 %v580, %v581
        %v583 = vmul.f32 %v569, %v577
        %v584 = vmul.f32 %v571, %v579
        %v585 = vsub.f32 %v583, %v584
        %v586 = vmul.f32 %v571, %v576
        %v587 = vmul.f32 %v569, %v578
        %v588 = vadd.f32 %v586, %v587
        %v589 = vmul.f32 %v571, %v577
        %v590 = vmul.f32 %v569, %v579
        %v591 = vadd.f32 %v589, %v590
        %592 = vst [vmem:[%s572] sm:$0xf] %v582
        %593 = vst [vmem:[%s573] sm:$0xf] %v585
        %594 = vst [vmem:[%s574] sm:$0xf] %v588
        %595 = vst [vmem:[%s575] sm:$0xf] %v591
        %s596 = smov [#allocation29]
        %v597 = vld [vmem:[%s596] ss:$0 sm:$0xff]
        %s598 = smov [#allocation30]
        %v599 = vld [vmem:[%s598] ss:$0 sm:$0xff]
        %s600 = smov [#allocation20]
        %s601 = smov [#allocation21]
        %s602 = smov [#allocation22]
        %s603 = smov [#allocation23]
        %v604 = vld [vmem:[%s600] sm:$0xf]
        %v605 = vld [vmem:[%s601] sm:$0xf]
        %v606 = vld [vmem:[%s602] sm:$0xf]
        %v607 = vld [vmem:[%s603] sm:$0xf]
        %v608 = vmul.f32 %v597, %v604
        %v609 = vmul.f32 %v599, %v605
        %v610 = vsub.f32 %v608, %v609
        %v611 = vmul.f32 %v599, %v604
        %v612 = vmul.f32 %v597, %v605
        %v613 = vadd.f32 %v611, %v612
        %v614 = vmul.f32 %v597, %v606
        %v615 = vmul.f32 %v599, %v607
        %v616 = vsub.f32 %v614, %v615
        %v617 = vmul.f32 %v599, %v606
        %v618 = vmul.f32 %v597, %v607
        %v619 = vadd.f32 %v617, %v618
        %620 = vst [vmem:[%s600] sm:$0xf] %v610
        %621 = vst [vmem:[%s601] sm:$0xf] %v613
        %622 = vst [vmem:[%s602] sm:$0xf] %v616
        %623 = vst [vmem:[%s603] sm:$0xf] %v619
        %s624 = smov [#allocation20]
        %s625 = smov [#allocation27]
        %v626 = vlaneseq
        %v627 = vand.u32 %v626, 127
        %v628 = vmov %v627
        %v629 = vlaneseq
        %v630 = vshrl.u32 %v629, 7
        %v631 = vmov %v630
        %v632 = vld [vmem:[%s625] ss:$0 sm:$0xff]
        %v633 = vld [vmem:[%s624] sm:$0xf]
        %vm636 = vcmp.eq.s32.totalorder %v631, %v628
        %v637 = vsel %vm636, %v632, %v633
        %638 = vst [vmem:[%s624] sm:$0xf] %v637
        %s639 = smov [#allocation21]
        %v640 = vlaneseq
        %v641 = vand.u32 %v640, 127
        %v642 = vmov %v641
        %v643 = vlaneseq
        %v644 = vshrl.u32 %v643, 7
        %v645 = vmov %v644
        %v646 = vld [vmem:[%s639] sm:$0xf]
        %vm649 = vcmp.eq.s32.totalorder %v645, %v642
        %v650 = vsel %vm649, 0.0, %v646
        %651 = vst [vmem:[%s639] sm:$0xf] %v650
        %s652 = smov [#allocation22]
        %v653 = vlaneseq
        %v654 = vand.u32 %v653, 127
        %v655 = vmov %v654
        %v656 = vlaneseq
        %v657 = vshrl.u32 %v656, 7
        %v658 = vmov %v657
        %v659 = vld [vmem:[%s652] sm:$0xf]
        %vm662 = vcmp.eq.s32.totalorder %v658, %v655
        %v663 = vsel %vm662, 0.0, %v659
        %664 = vst [vmem:[%s652] sm:$0xf] %v663
        %s665 = smov [#allocation23]
        %s666 = smov [#allocation28]
        %v667 = vlaneseq
        %v668 = vand.u32 %v667, 127
        %v669 = vmov %v668
        %v670 = vlaneseq
        %v671 = vshrl.u32 %v670, 7
        %v672 = vmov %v671
        %v673 = vld [vmem:[%s666] ss:$0 sm:$0xff]
        %v674 = vld [vmem:[%s665] sm:$0xf]
        %vm677 = vcmp.eq.s32.totalorder %v672, %v669
        %v678 = vsel %vm677, %v673, %v674
        %679 = vst [vmem:[%s665] sm:$0xf] %v678
        %s680 = smov [#allocation20]
        %s681 = smov [#allocation21]
        %v682 = vld [vmem:[%s681] sm:$0xf]
        %683 = vrot.lane.b32.xlu0 %v682, 1
        %v684 = vpop.permute.xlu0 %683
        %v685 = vld [vmem:[%s680] sm:$0xf]
        %v686 = vld [vmem:[%s680] sm:$0xf]
        %687 = vrot.lane.b32.xlu0 %v686, 1
        %v688 = vpop.permute.xlu0 %687
        %v689 = vlaneseq
        %v690 = vand.u32 %v689, 127
        %vm691 = vcmp.eq.s32.totalorder %v690, 0
        %v692 = vsel %vm691, %v686, %v688
        %v693 = vlaneseq
        %v694 = vand.u32 %v693, 127
        %vm695 = vcmp.eq.s32.totalorder %v694, 1
        %v696 = vsel %vm695, %v684, %v692
        %v697 = vlaneseq
        %v698 = vand.u32 %v697, 127
        %vm699 = vcmp.ge.s32.totalorder %v698, 0
        %vm700 = vcmp.lt.s32.totalorder %v698, 4
        %vm701 = vmand %vm699, %vm700
        %v702 = vsel %vm701, %v696, 0.0
        %v703 = vld [vmem:[%s681] sm:$0xf]
        %704 = vrot.lane.b32.xlu0 %v703, 127
        %v705 = vpop.permute.xlu0 %704
        %v706 = vlaneseq
        %v707 = vand.u32 %v706, 127
        %vm708 = vcmp.eq.s32.totalorder %v707, 3
        %v709 = vsel %vm708, %v685, %v705
        %710 = vst [vmem:[%s680] sm:$0xf] %v702
        %711 = vst [vmem:[%s681] sm:$0xf] %v709
        %s712 = smov [#allocation22]
        %s713 = smov [#allocation23]
        %v714 = vld [vmem:[%s713] sm:$0xf]
        %715 = vrot.lane.b32.xlu0 %v714, 1
        %v716 = vpop.permute.xlu0 %715
        %v717 = vld [vmem:[%s712] sm:$0xf]
        %v718 = vld [vmem:[%s712] sm:$0xf]
        %719 = vrot.lane.b32.xlu0 %v718, 1
        %v720 = vpop.permute.xlu0 %719
        %v721 = vlaneseq
        %v722 = vand.u32 %v721, 127
        %vm723 = vcmp.eq.s32.totalorder %v722, 0
        %v724 = vsel %vm723, %v718, %v720
        %v725 = vlaneseq
        %v726 = vand.u32 %v725, 127
        %vm727 = vcmp.eq.s32.totalorder %v726, 1
        %v728 = vsel %vm727, %v716, %v724
        %v729 = vlaneseq
        %v730 = vand.u32 %v729, 127
        %vm731 = vcmp.ge.s32.totalorder %v730, 0
        %vm732 = vcmp.lt.s32.totalorder %v730, 4
        %vm733 = vmand %vm731, %vm732
        %v734 = vsel %vm733, %v728, 0.0
        %v735 = vld [vmem:[%s713] sm:$0xf]
        %736 = vrot.lane.b32.xlu0 %v735, 127
        %v737 = vpop.permute.xlu0 %736
        %v738 = vlaneseq
        %v739 = vand.u32 %v738, 127
        %vm740 = vcmp.eq.s32.totalorder %v739, 3
        %v741 = vsel %vm740, %v717, %v737
        %742 = vst [vmem:[%s712] sm:$0xf] %v734
        %743 = vst [vmem:[%s713] sm:$0xf] %v741
        %s744 = smov [#allocation20]
        %s745 = smov [#allocation22]
        %v746 = vld [vmem:[%s744] ss:$0 sm:$0xff]
        %s748 = scalar_lea.vmem %s744, 4294967295
        %v749 = vld [vmem:[%s748] sm:$0xe]
        %v750 = vlaneseq
        %v751 = vshrl.u32 %v750, 7
        %vm752 = vcmp.eq.s32.totalorder %v751, 0
        %v753 = vsel %vm752, %v746, %v749
        %s754 = scalar_lea.vmem %s744, 3
        %v755 = vld [vmem:[%s754] ss:$0 sm:$0xff]
        %756 = vst [vmem:[%s744] sm:$0xf] %v753
        %v757 = vld [vmem:[%s745] ss:$0 sm:$0xff]
        %s758 = scalar_lea.vmem %s744, 1
        %759 = vst [vmem:[%s758] sm:$0x1] %v757
        %s760 = scalar_lea.vmem %s745, 1
        %v761 = vld [vmem:[%s760] sm:$0x7]
        %v762 = vlaneseq
        %v763 = vshrl.u32 %v762, 7
        %vm764 = vcmp.eq.s32.totalorder %v763, 3
        %v765 = vsel %vm764, %v755, %v761
        %v766 = vld [vmem:[%s745] ss:$0 sm:$0xff]
        %767 = vst [vmem:[%s745] sm:$0xf] %v765
        %s768 = smov [#allocation21]
        %s769 = smov [#allocation23]
        %v770 = vld [vmem:[%s768] ss:$0 sm:$0xff]
        %s772 = scalar_lea.vmem %s768, 4294967295
        %v773 = vld [vmem:[%s772] sm:$0xe]
        %v774 = vlaneseq
        %v775 = vshrl.u32 %v774, 7
        %vm776 = vcmp.eq.s32.totalorder %v775, 0
        %v777 = vsel %vm776, %v770, %v773
        %s778 = scalar_lea.vmem %s768, 3
        %v779 = vld [vmem:[%s778] ss:$0 sm:$0xff]
        %780 = vst [vmem:[%s768] sm:$0xf] %v777
        %v781 = vld [vmem:[%s769] ss:$0 sm:$0xff]
        %s782 = scalar_lea.vmem %s768, 1
        %783 = vst [vmem:[%s782] sm:$0x1] %v781
        %s784 = scalar_lea.vmem %s769, 1
        %v785 = vld [vmem:[%s784] sm:$0x7]
        %v786 = vlaneseq
        %v787 = vshrl.u32 %v786, 7
        %vm788 = vcmp.eq.s32.totalorder %v787, 3
        %v789 = vsel %vm788, %v779, %v785
        %v790 = vld [vmem:[%s769] ss:$0 sm:$0xff]
        %791 = vst [vmem:[%s769] sm:$0xf] %v789
        %s792 = smov [#allocation31]
        %v793 = vld [vmem:[%s792] sm:$0xff]
        %s794 = smov [#allocation32]
        %v795 = vld [vmem:[%s794] sm:$0xff]
        %s796 = smov [#allocation12]
        %s797 = smov [#allocation14]
        %s798 = smov [#allocation16]
        %s799 = smov [#allocation18]
        %v800 = vld [vmem:[%s796] sm:$0xf]
        %v801 = vld [vmem:[%s797] sm:$0xf]
        %v802 = vld [vmem:[%s798] sm:$0xf]
        %v803 = vld [vmem:[%s799] sm:$0xf]
        %v804 = vmul.f32 %v793, %v800
        %v805 = vmul.f32 %v795, %v802
        %v806 = vsub.f32 %v804, %v805
        %v807 = vmul.f32 %v793, %v801
        %v808 = vmul.f32 %v795, %v803
        %v809 = vsub.f32 %v807, %v808
        %v810 = vmul.f32 %v795, %v800
        %v811 = vmul.f32 %v793, %v802
        %v812 = vadd.f32 %v810, %v811
        %v813 = vmul.f32 %v795, %v801
        %v814 = vmul.f32 %v793, %v803
        %v815 = vadd.f32 %v813, %v814
        %816 = vst [vmem:[%s796] sm:$0xf] %v806
        %817 = vst [vmem:[%s797] sm:$0xf] %v809
        %818 = vst [vmem:[%s798] sm:$0xf] %v812
        %819 = vst [vmem:[%s799] sm:$0xf] %v815
        %s820 = smov [#allocation12]
        %s821 = smov [#allocation16]
        %v822 = vld [vmem:[%s820] ss:$0 sm:$0xff]
        %s824 = scalar_lea.vmem %s820, 4294967295
        %v825 = vld [vmem:[%s824] sm:$0xe]
        %v826 = vlaneseq
        %v827 = vshrl.u32 %v826, 7
        %vm828 = vcmp.eq.s32.totalorder %v827, 0
        %v829 = vsel %vm828, %v822, %v825
        %s830 = scalar_lea.vmem %s820, 3
        %v831 = vld [vmem:[%s830] ss:$0 sm:$0xff]
        %832 = vst [vmem:[%s820] sm:$0xf] %v829
        %v833 = vld [vmem:[%s821] ss:$0 sm:$0xff]
        %s834 = scalar_lea.vmem %s820, 1
        %835 = vst [vmem:[%s834] sm:$0x1] %v833
        %s836 = scalar_lea.vmem %s821, 1
        %v837 = vld [vmem:[%s836] sm:$0x7]
        %v838 = vlaneseq
        %v839 = vshrl.u32 %v838, 7
        %vm840 = vcmp.eq.s32.totalorder %v839, 3
        %v841 = vsel %vm840, %v831, %v837
        %v842 = vld [vmem:[%s821] ss:$0 sm:$0xff]
        %843 = vst [vmem:[%s821] sm:$0xf] %v841
        %s844 = smov [#allocation14]
        %s845 = smov [#allocation18]
        %v846 = vld [vmem:[%s844] ss:$0 sm:$0xff]
        %s848 = scalar_lea.vmem %s844, 4294967295
        %v849 = vld [vmem:[%s848] sm:$0xe]
        %v850 = vlaneseq
        %v851 = vshrl.u32 %v850, 7
        %vm852 = vcmp.eq.s32.totalorder %v851, 0
        %v853 = vsel %vm852, %v846, %v849
        %s854 = scalar_lea.vmem %s844, 3
        %v855 = vld [vmem:[%s854] ss:$0 sm:$0xff]
        %856 = vst [vmem:[%s844] sm:$0xf] %v853
        %v857 = vld [vmem:[%s845] ss:$0 sm:$0xff]
        %s858 = scalar_lea.vmem %s844, 1
        %859 = vst [vmem:[%s858] sm:$0x1] %v857
        %s860 = scalar_lea.vmem %s845, 1
        %v861 = vld [vmem:[%s860] sm:$0x7]
        %v862 = vlaneseq
        %v863 = vshrl.u32 %v862, 7
        %vm864 = vcmp.eq.s32.totalorder %v863, 3
        %v865 = vsel %vm864, %v855, %v861
        %v866 = vld [vmem:[%s845] ss:$0 sm:$0xff]
        %867 = vst [vmem:[%s845] sm:$0xf] %v865
      $region101: #{custom-call.34} parent=93 // loop_footer
        %s428 = sadd.s32 1, %s424
      $region102: #{custom-call.34} parent=93 // loop_footer_branch
        %423 = sbr.rel target = $region98
      $region103: #{custom-call.34} parent=93 // loop_exit
        _
      %s868 = sadd.s32 %s326, 1
    $region94: #{custom-call.34} parent=1 // loop_footer
      _
    $region95: #{custom-call.34} parent=1 // loop_footer_branch
      %325 = sbr.rel target = $region91
    $region96: #{custom-call.34} parent=1 // loop_exit
      _
    %s871 = smov [#allocation20]
    %s872 = smov [#allocation8]
    %v873 = vlaneseq
    %v874 = vand.u32 %v873, 127
    %v875 = vmov %v874
    %v876 = vlaneseq
    %v877 = vshrl.u32 %v876, 7
    %v878 = vmov %v877
    %v879 = vld [vmem:[%s871] sm:$0xf]
    %vm882 = vcmp.eq.s32.totalorder %v878, %v875
    %v883 = vsel %vm882, %v879, 0.0
    %v884 = vrot.slane %v883, 4
    %v885 = vadd.f32 %v883, %v884
    %v886 = vrot.slane %v885, 2
    %v887 = vadd.f32 %v885, %v886
    %v888 = vrot.slane %v887, 1
    %v889 = vadd.f32 %v887, %v888
    %890 = vst [vmem:[%s872] sm:$0x1] %v889
    %s891 = smov [#allocation23]
    %s892 = smov [#allocation10]
    %v893 = vlaneseq
    %v894 = vand.u32 %v893, 127
    %v895 = vmov %v894
    %v896 = vlaneseq
    %v897 = vshrl.u32 %v896, 7
    %v898 = vmov %v897
    %v899 = vld [vmem:[%s891] sm:$0xf]
    %vm902 = vcmp.eq.s32.totalorder %v898, %v895
    %v903 = vsel %vm902, %v899, 0.0
    %v904 = vrot.slane %v903, 4
    %v905 = vadd.f32 %v903, %v904
    %v906 = vrot.slane %v905, 2
    %v907 = vadd.f32 %v905, %v906
    %v908 = vrot.slane %v907, 1
    %v909 = vadd.f32 %v907, %v908
    %910 = vst [vmem:[%s892] sm:$0x1] %v909
    %s912 = sshll.u32 1, 1
    %s913 = ssub.s32 %s912, 1
    %v915 = vld [vmem:[#allocation8] sm:%s913]
    %s916 = sshll.u32 1, 1
    %s917 = ssub.s32 %s916, 1
    %918 = vst [vmem:[#allocation9] sm:%s917] %v915
    %s920 = sshll.u32 1, 1
    %s921 = ssub.s32 %s920, 1
    %v923 = vld [vmem:[#allocation10] sm:%s921]
    %s924 = sshll.u32 1, 1
    %s925 = ssub.s32 %s924, 1
    %926 = vst [vmem:[#allocation11] sm:%s925] %v923
    %s928 = sshll.u32 1, 4
    %s929 = ssub.s32 %s928, 1
    %v931 = vld [vmem:[#allocation12] sm:%s929]
    %s932 = sshll.u32 1, 4
    %s933 = ssub.s32 %s932, 1
    %934 = vst [vmem:[#allocation13] sm:%s933] %v931
    %s936 = sshll.u32 1, 4
    %s937 = ssub.s32 %s936, 1
    %v939 = vld [vmem:[#allocation14] sm:%s937]
    %s940 = sshll.u32 1, 4
    %s941 = ssub.s32 %s940, 1
    %942 = vst [vmem:[#allocation15] sm:%s941] %v939
    %s944 = sshll.u32 1, 4
    %s945 = ssub.s32 %s944, 1
    %v947 = vld [vmem:[#allocation16] sm:%s945]
    %s948 = sshll.u32 1, 4
    %s949 = ssub.s32 %s948, 1
    %950 = vst [vmem:[#allocation17] sm:%s949] %v947
    %s952 = sshll.u32 1, 4
    %s953 = ssub.s32 %s952, 1
    %v955 = vld [vmem:[#allocation18] sm:%s953]
    %s956 = sshll.u32 1, 4
    %s957 = ssub.s32 %s956, 1
    %958 = vst [vmem:[#allocation19] sm:%s957] %v955
    // Predicated region
    $region104: #{custom-call.34} parent=1 // pred_check
      _
    $region105: #{custom-call.34} parent=1 // pred_check_branch
      %960 = sbr.rel (0) target = $region107
    $region106: #{custom-call.34} parent=1 // pred_region
      %p962 = scmp.gt.s32.totalorder 1, 0
      // Predicated region
      $region108: #{custom-call.34} parent=106 // pred_check
        %p963 = pneg %p962
      $region109: #{custom-call.34} parent=106 // pred_check_branch
        %965 = sbr.rel (%p963) target = $region111
      $region110: #{custom-call.34} parent=106 // pred_region
        %s966 = sshra.s32 1, 3
        %p967 = scmp.gt.s32.totalorder %s966, 0
        // Predicated region
        $region112: #{custom-call.34} parent=110 // pred_check
          %p968 = pneg %p967
        $region113: #{custom-call.34} parent=110 // pred_check_branch
          %970 = sbr.rel (%p968) target = $region115
        $region114: #{custom-call.34} parent=110 // pred_region
          %s971 = ssub.s32 %s966, 1
          %s972 = smul.u32 %s971, 128
          %s973 = sshra.s32 %s972, 4
          %s974 = scalar_lea.vmem [#allocation9], %s973
          %v975 = vld [vmem:[#allocation9] sm:$0xff]
          // While loop
          $region116: #{custom-call.34} parent=114 // loop_pre_header
            _
          $region117: #{custom-call.34} parent=114 // loop_header
            %s976 = sphi [#allocation9], %s998
            %s977 = sphi %s4, %s999
            %v978 = vphi %v975, %v1000
            %s979 = ssub.s32 %s974, 64
            %p980 = scmp.gt.s32.totalorder %s976, %s979
          $region118: #{custom-call.34} parent=114 // loop_header_branch
            %982 = sbr.rel (%p980) target = $region122
          $region119: #{custom-call.34} parent=114 // loop_body
            %983 = vst [vmem:[%s977] sm:$0xff] %v978
            %v984 = vld [vmem:[%s976 + $0x8] sm:$0xff]
            %985 = vst [vmem:[%s977 + $0x8] sm:$0xff] %v984
            %v986 = vld [vmem:[%s976 + $0x10] sm:$0xff]
            %987 = vst [vmem:[%s977 + $0x10] sm:$0xff] %v986
            %v988 = vld [vmem:[%s976 + $0x18] sm:$0xff]
            %989 = vst [vmem:[%s977 + $0x18] sm:$0xff] %v988
            %v990 = vld [vmem:[%s976 + $0x20] sm:$0xff]
            %991 = vst [vmem:[%s977 + $0x20] sm:$0xff] %v990
            %v992 = vld [vmem:[%s976 + $0x28] sm:$0xff]
            %993 = vst [vmem:[%s977 + $0x28] sm:$0xff] %v992
            %v994 = vld [vmem:[%s976 + $0x30] sm:$0xff]
            %995 = vst [vmem:[%s977 + $0x30] sm:$0xff] %v994
            %v996 = vld [vmem:[%s976 + $0x38] sm:$0xff]
            %997 = vst [vmem:[%s977 + $0x38] sm:$0xff] %v996
          $region120: #{custom-call.34} parent=114 // loop_footer
            %s998 = scalar_lea.vmem %s976, 64
            %s999 = scalar_lea.vmem %s977, 64
            %v1000 = vld [vmem:[%s976 + $0x40] sm:$0xff]
          $region121: #{custom-call.34} parent=114 // loop_footer_branch
            %1001 = sbr.rel target = $region117
          $region122: #{custom-call.34} parent=114 // loop_exit
            _
          // While loop
          $region123: #{custom-call.34} parent=114 // loop_pre_header
            _
          $region124: #{custom-call.34} parent=114 // loop_header
            %s1002 = sphi %s976, %s1010
            %s1003 = sphi %s977, %s1011
            %v1004 = vphi %v978, %v1004
            %p1005 = scmp.gt.s32.totalorder %s1002, %s974
          $region125: #{custom-call.34} parent=114 // loop_header_branch
            %1007 = sbr.rel (%p1005) target = $region129
          $region126: #{custom-call.34} parent=114 // loop_body
            %v1008 = vld [vmem:[%s1002] sm:$0xff]
            %1009 = vst [vmem:[%s1003] sm:$0xff] %v1008
          $region127: #{custom-call.34} parent=114 // loop_footer
            %s1010 = scalar_lea.vmem %s1002, 8
            %s1011 = scalar_lea.vmem %s1003, 8
          $region128: #{custom-call.34} parent=114 // loop_footer_branch
            %1012 = sbr.rel target = $region124
          $region129: #{custom-call.34} parent=114 // loop_exit
            _
        $region115: #{custom-call.34} parent=110 // pred_fallthru
          _
        %s1013 = sand.u32 1, 7
        %s1014 = sshll.u32 1, %s1013
        %s1015 = ssub.s32 %s1014, 1
        %s1016 = smul.u32 %s966, 128
        %s1017 = sshra.s32 %s1016, 4
        %s1018 = scalar_lea.vmem %s4, %s1017
        %s1019 = smul.u32 %s966, 128
        %s1020 = sshra.s32 %s1019, 4
        %s1021 = scalar_lea.vmem [#allocation9], %s1020
        %v1022 = vld [vmem:[%s1021] sm:%s1015]
        %1023 = vst [vmem:[%s1018] sm:%s1015] %v1022
      $region111: #{custom-call.34} parent=106 // pred_fallthru
        _
    $region107: #{custom-call.34} parent=1 // pred_fallthru
      _
    // Predicated region
    $region130: #{custom-call.34} parent=1 // pred_check
      _
    $region131: #{custom-call.34} parent=1 // pred_check_branch
      %1025 = sbr.rel (0) target = $region133
    $region132: #{custom-call.34} parent=1 // pred_region
      %p1027 = scmp.gt.s32.totalorder 1, 0
      // Predicated region
      $region134: #{custom-call.34} parent=132 // pred_check
        %p1028 = pneg %p1027
      $region135: #{custom-call.34} parent=132 // pred_check_branch
        %1030 = sbr.rel (%p1028) target = $region137
      $region136: #{custom-call.34} parent=132 // pred_region
        %s1031 = sshra.s32 1, 3
        %p1032 = scmp.gt.s32.totalorder %s1031, 0
        // Predicated region
        $region138: #{custom-call.34} parent=136 // pred_check
          %p1033 = pneg %p1032
        $region139: #{custom-call.34} parent=136 // pred_check_branch
          %1035 = sbr.rel (%p1033) target = $region141
        $region140: #{custom-call.34} parent=136 // pred_region
          %s1036 = ssub.s32 %s1031, 1
          %s1037 = smul.u32 %s1036, 128
          %s1038 = sshra.s32 %s1037, 4
          %s1039 = scalar_lea.vmem [#allocation11], %s1038
          %v1040 = vld [vmem:[#allocation11] sm:$0xff]
          // While loop
          $region142: #{custom-call.34} parent=140 // loop_pre_header
            _
          $region143: #{custom-call.34} parent=140 // loop_header
            %s1041 = sphi [#allocation11], %s1063
            %s1042 = sphi %s5, %s1064
            %v1043 = vphi %v1040, %v1065
            %s1044 = ssub.s32 %s1039, 64
            %p1045 = scmp.gt.s32.totalorder %s1041, %s1044
          $region144: #{custom-call.34} parent=140 // loop_header_branch
            %1047 = sbr.rel (%p1045) target = $region148
          $region145: #{custom-call.34} parent=140 // loop_body
            %1048 = vst [vmem:[%s1042] sm:$0xff] %v1043
            %v1049 = vld [vmem:[%s1041 + $0x8] sm:$0xff]
            %1050 = vst [vmem:[%s1042 + $0x8] sm:$0xff] %v1049
            %v1051 = vld [vmem:[%s1041 + $0x10] sm:$0xff]
            %1052 = vst [vmem:[%s1042 + $0x10] sm:$0xff] %v1051
            %v1053 = vld [vmem:[%s1041 + $0x18] sm:$0xff]
            %1054 = vst [vmem:[%s1042 + $0x18] sm:$0xff] %v1053
            %v1055 = vld [vmem:[%s1041 + $0x20] sm:$0xff]
            %1056 = vst [vmem:[%s1042 + $0x20] sm:$0xff] %v1055
            %v1057 = vld [vmem:[%s1041 + $0x28] sm:$0xff]
            %1058 = vst [vmem:[%s1042 + $0x28] sm:$0xff] %v1057
            %v1059 = vld [vmem:[%s1041 + $0x30] sm:$0xff]
            %1060 = vst [vmem:[%s1042 + $0x30] sm:$0xff] %v1059
            %v1061 = vld [vmem:[%s1041 + $0x38] sm:$0xff]
            %1062 = vst [vmem:[%s1042 + $0x38] sm:$0xff] %v1061
          $region146: #{custom-call.34} parent=140 // loop_footer
            %s1063 = scalar_lea.vmem %s1041, 64
            %s1064 = scalar_lea.vmem %s1042, 64
            %v1065 = vld [vmem:[%s1041 + $0x40] sm:$0xff]
          $region147: #{custom-call.34} parent=140 // loop_footer_branch
            %1066 = sbr.rel target = $region143
          $region148: #{custom-call.34} parent=140 // loop_exit
            _
          // While loop
          $region149: #{custom-call.34} parent=140 // loop_pre_header
            _
          $region150: #{custom-call.34} parent=140 // loop_header
            %s1067 = sphi %s1041, %s1075
            %s1068 = sphi %s1042, %s1076
            %v1069 = vphi %v1043, %v1069
            %p1070 = scmp.gt.s32.totalorder %s1067, %s1039
          $region151: #{custom-call.34} parent=140 // loop_header_branch
            %1072 = sbr.rel (%p1070) target = $region155
          $region152: #{custom-call.34} parent=140 // loop_body
            %v1073 = vld [vmem:[%s1067] sm:$0xff]
            %1074 = vst [vmem:[%s1068] sm:$0xff] %v1073
          $region153: #{custom-call.34} parent=140 // loop_footer
            %s1075 = scalar_lea.vmem %s1067, 8
            %s1076 = scalar_lea.vmem %s1068, 8
          $region154: #{custom-call.34} parent=140 // loop_footer_branch
            %1077 = sbr.rel target = $region150
          $region155: #{custom-call.34} parent=140 // loop_exit
            _
        $region141: #{custom-call.34} parent=136 // pred_fallthru
          _
        %s1078 = sand.u32 1, 7
        %s1079 = sshll.u32 1, %s1078
        %s1080 = ssub.s32 %s1079, 1
        %s1081 = smul.u32 %s1031, 128
        %s1082 = sshra.s32 %s1081, 4
        %s1083 = scalar_lea.vmem %s5, %s1082
        %s1084 = smul.u32 %s1031, 128
        %s1085 = sshra.s32 %s1084, 4
        %s1086 = scalar_lea.vmem [#allocation11], %s1085
        %v1087 = vld [vmem:[%s1086] sm:%s1080]
        %1088 = vst [vmem:[%s1083] sm:%s1080] %v1087
      $region137: #{custom-call.34} parent=132 // pred_fallthru
        _
    $region133: #{custom-call.34} parent=1 // pred_fallthru
      _
    %p1090 = scmp.gt.s32.totalorder 4, 0
    // Predicated region
    $region156: #{custom-call.34} parent=1 // pred_check
      %p1091 = pneg %p1090
    $region157: #{custom-call.34} parent=1 // pred_check_branch
      %1093 = sbr.rel (%p1091) target = $region159
    $region158: #{custom-call.34} parent=1 // pred_region
      %s1094 = sshra.s32 4, 3
      %p1095 = scmp.gt.s32.totalorder %s1094, 0
      // Predicated region
      $region160: #{custom-call.34} parent=158 // pred_check
        %p1096 = pneg %p1095
      $region161: #{custom-call.34} parent=158 // pred_check_branch
        %1098 = sbr.rel (%p1096) target = $region163
      $region162: #{custom-call.34} parent=158 // pred_region
        %s1099 = ssub.s32 %s1094, 1
        %s1100 = smul.u32 %s1099, 128
        %s1101 = sshra.s32 %s1100, 4
        %s1102 = scalar_lea.vmem [#allocation13], %s1101
        %v1103 = vld [vmem:[#allocation13] sm:$0xff]
        // While loop
        $region164: #{custom-call.34} parent=162 // loop_pre_header
          _
        $region165: #{custom-call.34} parent=162 // loop_header
          %s1104 = sphi [#allocation13], %s1126
          %s1105 = sphi %s6, %s1127
          %v1106 = vphi %v1103, %v1128
          %s1107 = ssub.s32 %s1102, 64
          %p1108 = scmp.gt.s32.totalorder %s1104, %s1107
        $region166: #{custom-call.34} parent=162 // loop_header_branch
          %1110 = sbr.rel (%p1108) target = $region170
        $region167: #{custom-call.34} parent=162 // loop_body
          %1111 = vst [vmem:[%s1105] sm:$0xff] %v1106
          %v1112 = vld [vmem:[%s1104 + $0x8] sm:$0xff]
          %1113 = vst [vmem:[%s1105 + $0x8] sm:$0xff] %v1112
          %v1114 = vld [vmem:[%s1104 + $0x10] sm:$0xff]
          %1115 = vst [vmem:[%s1105 + $0x10] sm:$0xff] %v1114
          %v1116 = vld [vmem:[%s1104 + $0x18] sm:$0xff]
          %1117 = vst [vmem:[%s1105 + $0x18] sm:$0xff] %v1116
          %v1118 = vld [vmem:[%s1104 + $0x20] sm:$0xff]
          %1119 = vst [vmem:[%s1105 + $0x20] sm:$0xff] %v1118
          %v1120 = vld [vmem:[%s1104 + $0x28] sm:$0xff]
          %1121 = vst [vmem:[%s1105 + $0x28] sm:$0xff] %v1120
          %v1122 = vld [vmem:[%s1104 + $0x30] sm:$0xff]
          %1123 = vst [vmem:[%s1105 + $0x30] sm:$0xff] %v1122
          %v1124 = vld [vmem:[%s1104 + $0x38] sm:$0xff]
          %1125 = vst [vmem:[%s1105 + $0x38] sm:$0xff] %v1124
        $region168: #{custom-call.34} parent=162 // loop_footer
          %s1126 = scalar_lea.vmem %s1104, 64
          %s1127 = scalar_lea.vmem %s1105, 64
          %v1128 = vld [vmem:[%s1104 + $0x40] sm:$0xff]
        $region169: #{custom-call.34} parent=162 // loop_footer_branch
          %1129 = sbr.rel target = $region165
        $region170: #{custom-call.34} parent=162 // loop_exit
          _
        // While loop
        $region171: #{custom-call.34} parent=162 // loop_pre_header
          _
        $region172: #{custom-call.34} parent=162 // loop_header
          %s1130 = sphi %s1104, %s1138
          %s1131 = sphi %s1105, %s1139
          %v1132 = vphi %v1106, %v1132
          %p1133 = scmp.gt.s32.totalorder %s1130, %s1102
        $region173: #{custom-call.34} parent=162 // loop_header_branch
          %1135 = sbr.rel (%p1133) target = $region177
        $region174: #{custom-call.34} parent=162 // loop_body
          %v1136 = vld [vmem:[%s1130] sm:$0xff]
          %1137 = vst [vmem:[%s1131] sm:$0xff] %v1136
        $region175: #{custom-call.34} parent=162 // loop_footer
          %s1138 = scalar_lea.vmem %s1130, 8
          %s1139 = scalar_lea.vmem %s1131, 8
        $region176: #{custom-call.34} parent=162 // loop_footer_branch
          %1140 = sbr.rel target = $region172
        $region177: #{custom-call.34} parent=162 // loop_exit
          _
      $region163: #{custom-call.34} parent=158 // pred_fallthru
        _
      %s1141 = sand.u32 4, 7
      %s1142 = sshll.u32 1, %s1141
      %s1143 = ssub.s32 %s1142, 1
      %s1144 = smul.u32 %s1094, 128
      %s1145 = sshra.s32 %s1144, 4
      %s1146 = scalar_lea.vmem %s6, %s1145
      %s1147 = smul.u32 %s1094, 128
      %s1148 = sshra.s32 %s1147, 4
      %s1149 = scalar_lea.vmem [#allocation13], %s1148
      %v1150 = vld [vmem:[%s1149] sm:%s1143]
      %1151 = vst [vmem:[%s1146] sm:%s1143] %v1150
    $region159: #{custom-call.34} parent=1 // pred_fallthru
      _
    %p1153 = scmp.gt.s32.totalorder 4, 0
    // Predicated region
    $region178: #{custom-call.34} parent=1 // pred_check
      %p1154 = pneg %p1153
    $region179: #{custom-call.34} parent=1 // pred_check_branch
      %1156 = sbr.rel (%p1154) target = $region181
    $region180: #{custom-call.34} parent=1 // pred_region
      %s1157 = sshra.s32 4, 3
      %p1158 = scmp.gt.s32.totalorder %s1157, 0
      // Predicated region
      $region182: #{custom-call.34} parent=180 // pred_check
        %p1159 = pneg %p1158
      $region183: #{custom-call.34} parent=180 // pred_check_branch
        %1161 = sbr.rel (%p1159) target = $region185
      $region184: #{custom-call.34} parent=180 // pred_region
        %s1162 = ssub.s32 %s1157, 1
        %s1163 = smul.u32 %s1162, 128
        %s1164 = sshra.s32 %s1163, 4
        %s1165 = scalar_lea.vmem [#allocation15], %s1164
        %v1166 = vld [vmem:[#allocation15] sm:$0xff]
        // While loop
        $region186: #{custom-call.34} parent=184 // loop_pre_header
          _
        $region187: #{custom-call.34} parent=184 // loop_header
          %s1167 = sphi [#allocation15], %s1189
          %s1168 = sphi %s7, %s1190
          %v1169 = vphi %v1166, %v1191
          %s1170 = ssub.s32 %s1165, 64
          %p1171 = scmp.gt.s32.totalorder %s1167, %s1170
        $region188: #{custom-call.34} parent=184 // loop_header_branch
          %1173 = sbr.rel (%p1171) target = $region192
        $region189: #{custom-call.34} parent=184 // loop_body
          %1174 = vst [vmem:[%s1168] sm:$0xff] %v1169
          %v1175 = vld [vmem:[%s1167 + $0x8] sm:$0xff]
          %1176 = vst [vmem:[%s1168 + $0x8] sm:$0xff] %v1175
          %v1177 = vld [vmem:[%s1167 + $0x10] sm:$0xff]
          %1178 = vst [vmem:[%s1168 + $0x10] sm:$0xff] %v1177
          %v1179 = vld [vmem:[%s1167 + $0x18] sm:$0xff]
          %1180 = vst [vmem:[%s1168 + $0x18] sm:$0xff] %v1179
          %v1181 = vld [vmem:[%s1167 + $0x20] sm:$0xff]
          %1182 = vst [vmem:[%s1168 + $0x20] sm:$0xff] %v1181
          %v1183 = vld [vmem:[%s1167 + $0x28] sm:$0xff]
          %1184 = vst [vmem:[%s1168 + $0x28] sm:$0xff] %v1183
          %v1185 = vld [vmem:[%s1167 + $0x30] sm:$0xff]
          %1186 = vst [vmem:[%s1168 + $0x30] sm:$0xff] %v1185
          %v1187 = vld [vmem:[%s1167 + $0x38] sm:$0xff]
          %1188 = vst [vmem:[%s1168 + $0x38] sm:$0xff] %v1187
        $region190: #{custom-call.34} parent=184 // loop_footer
          %s1189 = scalar_lea.vmem %s1167, 64
          %s1190 = scalar_lea.vmem %s1168, 64
          %v1191 = vld [vmem:[%s1167 + $0x40] sm:$0xff]
        $region191: #{custom-call.34} parent=184 // loop_footer_branch
          %1192 = sbr.rel target = $region187
        $region192: #{custom-call.34} parent=184 // loop_exit
          _
        // While loop
        $region193: #{custom-call.34} parent=184 // loop_pre_header
          _
        $region194: #{custom-call.34} parent=184 // loop_header
          %s1193 = sphi %s1167, %s1201
          %s1194 = sphi %s1168, %s1202
          %v1195 = vphi %v1169, %v1195
          %p1196 = scmp.gt.s32.totalorder %s1193, %s1165
        $region195: #{custom-call.34} parent=184 // loop_header_branch
          %1198 = sbr.rel (%p1196) target = $region199
        $region196: #{custom-call.34} parent=184 // loop_body
          %v1199 = vld [vmem:[%s1193] sm:$0xff]
          %1200 = vst [vmem:[%s1194] sm:$0xff] %v1199
        $region197: #{custom-call.34} parent=184 // loop_footer
          %s1201 = scalar_lea.vmem %s1193, 8
          %s1202 = scalar_lea.vmem %s1194, 8
        $region198: #{custom-call.34} parent=184 // loop_footer_branch
          %1203 = sbr.rel target = $region194
        $region199: #{custom-call.34} parent=184 // loop_exit
          _
      $region185: #{custom-call.34} parent=180 // pred_fallthru
        _
      %s1204 = sand.u32 4, 7
      %s1205 = sshll.u32 1, %s1204
      %s1206 = ssub.s32 %s1205, 1
      %s1207 = smul.u32 %s1157, 128
      %s1208 = sshra.s32 %s1207, 4
      %s1209 = scalar_lea.vmem %s7, %s1208
      %s1210 = smul.u32 %s1157, 128
      %s1211 = sshra.s32 %s1210, 4
      %s1212 = scalar_lea.vmem [#allocation15], %s1211
      %v1213 = vld [vmem:[%s1212] sm:%s1206]
      %1214 = vst [vmem:[%s1209] sm:%s1206] %v1213
    $region181: #{custom-call.34} parent=1 // pred_fallthru
      _
    %p1216 = scmp.gt.s32.totalorder 4, 0
    // Predicated region
    $region200: #{custom-call.34} parent=1 // pred_check
      %p1217 = pneg %p1216
    $region201: #{custom-call.34} parent=1 // pred_check_branch
      %1219 = sbr.rel (%p1217) target = $region203
    $region202: #{custom-call.34} parent=1 // pred_region
      %s1220 = sshra.s32 4, 3
      %p1221 = scmp.gt.s32.totalorder %s1220, 0
      // Predicated region
      $region204: #{custom-call.34} parent=202 // pred_check
        %p1222 = pneg %p1221
      $region205: #{custom-call.34} parent=202 // pred_check_branch
        %1224 = sbr.rel (%p1222) target = $region207
      $region206: #{custom-call.34} parent=202 // pred_region
        %s1225 = ssub.s32 %s1220, 1
        %s1226 = smul.u32 %s1225, 128
        %s1227 = sshra.s32 %s1226, 4
        %s1228 = scalar_lea.vmem [#allocation17], %s1227
        %v1229 = vld [vmem:[#allocation17] sm:$0xff]
        // While loop
        $region208: #{custom-call.34} parent=206 // loop_pre_header
          _
        $region209: #{custom-call.34} parent=206 // loop_header
          %s1230 = sphi [#allocation17], %s1252
          %s1231 = sphi %s8, %s1253
          %v1232 = vphi %v1229, %v1254
          %s1233 = ssub.s32 %s1228, 64
          %p1234 = scmp.gt.s32.totalorder %s1230, %s1233
        $region210: #{custom-call.34} parent=206 // loop_header_branch
          %1236 = sbr.rel (%p1234) target = $region214
        $region211: #{custom-call.34} parent=206 // loop_body
          %1237 = vst [vmem:[%s1231] sm:$0xff] %v1232
          %v1238 = vld [vmem:[%s1230 + $0x8] sm:$0xff]
          %1239 = vst [vmem:[%s1231 + $0x8] sm:$0xff] %v1238
          %v1240 = vld [vmem:[%s1230 + $0x10] sm:$0xff]
          %1241 = vst [vmem:[%s1231 + $0x10] sm:$0xff] %v1240
          %v1242 = vld [vmem:[%s1230 + $0x18] sm:$0xff]
          %1243 = vst [vmem:[%s1231 + $0x18] sm:$0xff] %v1242
          %v1244 = vld [vmem:[%s1230 + $0x20] sm:$0xff]
          %1245 = vst [vmem:[%s1231 + $0x20] sm:$0xff] %v1244
          %v1246 = vld [vmem:[%s1230 + $0x28] sm:$0xff]
          %1247 = vst [vmem:[%s1231 + $0x28] sm:$0xff] %v1246
          %v1248 = vld [vmem:[%s1230 + $0x30] sm:$0xff]
          %1249 = vst [vmem:[%s1231 + $0x30] sm:$0xff] %v1248
          %v1250 = vld [vmem:[%s1230 + $0x38] sm:$0xff]
          %1251 = vst [vmem:[%s1231 + $0x38] sm:$0xff] %v1250
        $region212: #{custom-call.34} parent=206 // loop_footer
          %s1252 = scalar_lea.vmem %s1230, 64
          %s1253 = scalar_lea.vmem %s1231, 64
          %v1254 = vld [vmem:[%s1230 + $0x40] sm:$0xff]
        $region213: #{custom-call.34} parent=206 // loop_footer_branch
          %1255 = sbr.rel target = $region209
        $region214: #{custom-call.34} parent=206 // loop_exit
          _
        // While loop
        $region215: #{custom-call.34} parent=206 // loop_pre_header
          _
        $region216: #{custom-call.34} parent=206 // loop_header
          %s1256 = sphi %s1230, %s1264
          %s1257 = sphi %s1231, %s1265
          %v1258 = vphi %v1232, %v1258
          %p1259 = scmp.gt.s32.totalorder %s1256, %s1228
        $region217: #{custom-call.34} parent=206 // loop_header_branch
          %1261 = sbr.rel (%p1259) target = $region221
        $region218: #{custom-call.34} parent=206 // loop_body
          %v1262 = vld [vmem:[%s1256] sm:$0xff]
          %1263 = vst [vmem:[%s1257] sm:$0xff] %v1262
        $region219: #{custom-call.34} parent=206 // loop_footer
          %s1264 = scalar_lea.vmem %s1256, 8
          %s1265 = scalar_lea.vmem %s1257, 8
        $region220: #{custom-call.34} parent=206 // loop_footer_branch
          %1266 = sbr.rel target = $region216
        $region221: #{custom-call.34} parent=206 // loop_exit
          _
      $region207: #{custom-call.34} parent=202 // pred_fallthru
        _
      %s1267 = sand.u32 4, 7
      %s1268 = sshll.u32 1, %s1267
      %s1269 = ssub.s32 %s1268, 1
      %s1270 = smul.u32 %s1220, 128
      %s1271 = sshra.s32 %s1270, 4
      %s1272 = scalar_lea.vmem %s8, %s1271
      %s1273 = smul.u32 %s1220, 128
      %s1274 = sshra.s32 %s1273, 4
      %s1275 = scalar_lea.vmem [#allocation17], %s1274
      %v1276 = vld [vmem:[%s1275] sm:%s1269]
      %1277 = vst [vmem:[%s1272] sm:%s1269] %v1276
    $region203: #{custom-call.34} parent=1 // pred_fallthru
      _
    %p1279 = scmp.gt.s32.totalorder 4, 0
    // Predicated region
    $region222: #{custom-call.34} parent=1 // pred_check
      %p1280 = pneg %p1279
    $region223: #{custom-call.34} parent=1 // pred_check_branch
      %1282 = sbr.rel (%p1280) target = $region225
    $region224: #{custom-call.34} parent=1 // pred_region
      %s1283 = sshra.s32 4, 3
      %p1284 = scmp.gt.s32.totalorder %s1283, 0
      // Predicated region
      $region226: #{custom-call.34} parent=224 // pred_check
        %p1285 = pneg %p1284
      $region227: #{custom-call.34} parent=224 // pred_check_branch
        %1287 = sbr.rel (%p1285) target = $region229
      $region228: #{custom-call.34} parent=224 // pred_region
        %s1288 = ssub.s32 %s1283, 1
        %s1289 = smul.u32 %s1288, 128
        %s1290 = sshra.s32 %s1289, 4
        %s1291 = scalar_lea.vmem [#allocation19], %s1290
        %v1292 = vld [vmem:[#allocation19] sm:$0xff]
        // While loop
        $region230: #{custom-call.34} parent=228 // loop_pre_header
          _
        $region231: #{custom-call.34} parent=228 // loop_header
          %s1293 = sphi [#allocation19], %s1315
          %s1294 = sphi %s9, %s1316
          %v1295 = vphi %v1292, %v1317
          %s1296 = ssub.s32 %s1291, 64
          %p1297 = scmp.gt.s32.totalorder %s1293, %s1296
        $region232: #{custom-call.34} parent=228 // loop_header_branch
          %1299 = sbr.rel (%p1297) target = $region236
        $region233: #{custom-call.34} parent=228 // loop_body
          %1300 = vst [vmem:[%s1294] sm:$0xff] %v1295
          %v1301 = vld [vmem:[%s1293 + $0x8] sm:$0xff]
          %1302 = vst [vmem:[%s1294 + $0x8] sm:$0xff] %v1301
          %v1303 = vld [vmem:[%s1293 + $0x10] sm:$0xff]
          %1304 = vst [vmem:[%s1294 + $0x10] sm:$0xff] %v1303
          %v1305 = vld [vmem:[%s1293 + $0x18] sm:$0xff]
          %1306 = vst [vmem:[%s1294 + $0x18] sm:$0xff] %v1305
          %v1307 = vld [vmem:[%s1293 + $0x20] sm:$0xff]
          %1308 = vst [vmem:[%s1294 + $0x20] sm:$0xff] %v1307
          %v1309 = vld [vmem:[%s1293 + $0x28] sm:$0xff]
          %1310 = vst [vmem:[%s1294 + $0x28] sm:$0xff] %v1309
          %v1311 = vld [vmem:[%s1293 + $0x30] sm:$0xff]
          %1312 = vst [vmem:[%s1294 + $0x30] sm:$0xff] %v1311
          %v1313 = vld [vmem:[%s1293 + $0x38] sm:$0xff]
          %1314 = vst [vmem:[%s1294 + $0x38] sm:$0xff] %v1313
        $region234: #{custom-call.34} parent=228 // loop_footer
          %s1315 = scalar_lea.vmem %s1293, 64
          %s1316 = scalar_lea.vmem %s1294, 64
          %v1317 = vld [vmem:[%s1293 + $0x40] sm:$0xff]
        $region235: #{custom-call.34} parent=228 // loop_footer_branch
          %1318 = sbr.rel target = $region231
        $region236: #{custom-call.34} parent=228 // loop_exit
          _
        // While loop
        $region237: #{custom-call.34} parent=228 // loop_pre_header
          _
        $region238: #{custom-call.34} parent=228 // loop_header
          %s1319 = sphi %s1293, %s1327
          %s1320 = sphi %s1294, %s1328
          %v1321 = vphi %v1295, %v1321
          %p1322 = scmp.gt.s32.totalorder %s1319, %s1291
        $region239: #{custom-call.34} parent=228 // loop_header_branch
          %1324 = sbr.rel (%p1322) target = $region243
        $region240: #{custom-call.34} parent=228 // loop_body
          %v1325 = vld [vmem:[%s1319] sm:$0xff]
          %1326 = vst [vmem:[%s1320] sm:$0xff] %v1325
        $region241: #{custom-call.34} parent=228 // loop_footer
          %s1327 = scalar_lea.vmem %s1319, 8
          %s1328 = scalar_lea.vmem %s1320, 8
        $region242: #{custom-call.34} parent=228 // loop_footer_branch
          %1329 = sbr.rel target = $region238
        $region243: #{custom-call.34} parent=228 // loop_exit
          _
      $region229: #{custom-call.34} parent=224 // pred_fallthru
        _
      %s1330 = sand.u32 4, 7
      %s1331 = sshll.u32 1, %s1330
      %s1332 = ssub.s32 %s1331, 1
      %s1333 = smul.u32 %s1283, 128
      %s1334 = sshra.s32 %s1333, 4
      %s1335 = scalar_lea.vmem %s9, %s1334
      %s1336 = smul.u32 %s1283, 128
      %s1337 = sshra.s32 %s1336, 4
      %s1338 = scalar_lea.vmem [#allocation19], %s1337
      %v1339 = vld [vmem:[%s1338] sm:%s1332]
      %1340 = vst [vmem:[%s1335] sm:%s1332] %v1339
    $region225: #{custom-call.34} parent=1 // pred_fallthru
      _
    // Predicated region
    $region244: #{custom-call.34} parent=1 // pred_check
      _
    $region245: #{custom-call.34} parent=1 // pred_check_branch
      %1342 = sbr.rel (0) target = $region247
    $region246: #{custom-call.34} parent=1 // pred_region
      _
    $region247: #{custom-call.34} parent=1 // pred_fallthru
      _
    // Predicated region
    $region248: #{custom-call.34} parent=1 // pred_check
      _
    $region249: #{custom-call.34} parent=1 // pred_check_branch
      %1344 = sbr.rel (0) target = $region251
    $region250: #{custom-call.34} parent=1 // pred_region
      _
    $region251: #{custom-call.34} parent=1 // pred_fallthru
      _

// kernel: reverse
$region0: #{reverse}
  %s0 = inlined_call_operand.vmem [shape: f32[8], index: 0, kind: input, shape index: {}]
  %s1 = inlined_call_operand.vmem [shape: f32[8], index: 1, kind: output, shape index: {}]
  %v2 = vlaneseq
  %v3 = vsub.s32 7, %v2
  %4 = vset.pattern.permute.xlu0 %v3
  $region1: #{reverse} parent=0
    #allocation0 [shape = 'u8[8192]{0}', space=vmem, size = 0x2000, scoped, tag = 'operand span for operand 0']
    #allocation1 [shape = 'u8[1024]{0}', space=vmem, size = 0x400, scoped, tag = 'packed  for operand 0']
    #allocation2 [shape = 'u8[4096]{0}', space=vmem, size = 0x1000, scoped, tag = 'operand span for operand 1']
    #allocation3 [shape = 'u8[512]{0}', space=vmem, size = 0x400, scoped, tag = 'packed  for operand 1']
    %s5 = scalar_lea.vmem [#allocation1], 1
    // Predicated region
    $region2: #{reverse} parent=1 // pred_check
      _
    $region3: #{reverse} parent=1 // pred_check_branch
      %7 = sbr.rel (0) target = $region5
    $region4: #{reverse} parent=1 // pred_region
      // Predicated region
      $region6: #{reverse} parent=4 // pred_check
        _
      $region7: #{reverse} parent=4 // pred_check_branch
        %9 = sbr.rel target = $region9
      $region8: #{reverse} parent=4 // pred_region
        // Predicated region
        $region21: #{reverse} parent=8 // pred_check
          _
        $region22: #{reverse} parent=8 // pred_check_branch
          %25 = sbr.rel (0) target = $region24
        $region23: #{reverse} parent=8 // pred_region
          %s27 = ssub.s32 2, 1
          loop: start=0, step=1, limit=1
          $region25: #{reverse} parent=23 // loop_pre_header
            _
          $region26: #{reverse} parent=23 // loop_header
            %s29 = sphi 0, %s33
            %p30 = scmp.ge.s32.totalorder %s29, 1
            %s34 = sphi %s0, %s0
            %s35 = sphi %s5, %s5
          $region27: #{reverse} parent=23 // loop_header_branch
            %32 = sbr.rel (%p30) target = $region31
          $region28: #{reverse} parent=23 // loop_body
            %v36 = vld [vmem:[%s34] sm:%s27]
            %37 = vst [vmem:[%s35] sm:%s27] %v36
          $region29: #{reverse} parent=23 // loop_footer
            %s33 = sadd.s32 1, %s29
          $region30: #{reverse} parent=23 // loop_footer_branch
            %28 = sbr.rel target = $region26
          $region31: #{reverse} parent=23 // loop_exit
            _
        $region24: #{reverse} parent=8 // pred_fallthru
          _
      $region9: #{reverse} parent=4 // pred_fallthru
        _
      // Predicated region
      $region10: #{reverse} parent=4 // pred_check
        _
      $region11: #{reverse} parent=4 // pred_check_branch
        %11 = sbr.rel (0) target = $region13
      $region12: #{reverse} parent=4 // pred_region
        %s13 = ssub.s32 2, 1
        loop: start=0, step=1, limit=1
        $region14: #{reverse} parent=12 // loop_pre_header
          _
        $region15: #{reverse} parent=12 // loop_header
          %s15 = sphi 0, %s19
          %p16 = scmp.ge.s32.totalorder %s15, 1
          %s20 = sphi %s0, %s0
          %s21 = sphi %s5, %s5
        $region16: #{reverse} parent=12 // loop_header_branch
          %18 = sbr.rel (%p16) target = $region20
        $region17: #{reverse} parent=12 // loop_body
          %v22 = vld [vmem:[%s20] sm:%s13]
          %23 = vst [vmem:[%s21] sm:%s13] %v22
        $region18: #{reverse} parent=12 // loop_footer
          %s19 = sadd.s32 1, %s15
        $region19: #{reverse} parent=12 // loop_footer_branch
          %14 = sbr.rel target = $region15
        $region20: #{reverse} parent=12 // loop_exit
          _
      $region13: #{reverse} parent=4 // pred_fallthru
        _
    $region5: #{reverse} parent=1 // pred_fallthru
      _
    %38 = vnop
    %s40 = sshll.u32 1, 1
    %s41 = ssub.s32 %s40, 1
    %s42 = scalar_lea.vmem [#allocation1], 1
    %v43 = vld [vmem:[%s42] sm:%s41]
    %s44 = scalar_lea.vmem [#allocation0], 8
    %45 = vst [vmem:[%s44] sm:%s41] %v43
    %v46 = vld [vmem:[#allocation1] sm:%s41]
    %47 = vst [vmem:[#allocation0] sm:%s41] %v46
    %s48 = scalar_lea.vmem [#allocation0], 7
    %v49 = vld [vmem:[%s48] ss:$-1 sm:$0xff]
    %v50 = vrot.slane %v49, 7
    %51 = vperm.xlu0 %4, %v50
    %v52 = vpop.permute.xlu0 %51
    %53 = vst [vmem:[#allocation2] sm:$0xff] %v52
    %s54 = scalar_lea.vmem [#allocation0], 8
    %s55 = scalar_lea.vmem %s54, 7 [#allocation0]
    %v56 = vld [vmem:[%s55] ss:$-1 sm:$0xff]
    %v57 = vrot.slane %v56, 7
    %58 = vperm.xlu0 %4, %v57
    %v59 = vpop.permute.xlu0 %58
    %v60 = vlaneseq
    %v61 = vshrl.u32 %v60, 7
    %vm62 = vcmp.lt.s32.totalorder %v61, 1
    %63 = vst.msk [vmem:[#allocation2] sm:$0xff] %vm62, %v59
    %s65 = sshll.u32 1, 1
    %s66 = ssub.s32 %s65, 1
    %v68 = vld [vmem:[#allocation2] sm:%s66]
    %s69 = sshll.u32 1, 1
    %s70 = ssub.s32 %s69, 1
    %71 = vst [vmem:[#allocation3] sm:%s70] %v68
    // Predicated region
    $region32: #{reverse} parent=1 // pred_check
      _
    $region33: #{reverse} parent=1 // pred_check_branch
      %73 = sbr.rel (0) target = $region35
    $region34: #{reverse} parent=1 // pred_region
      // Predicated region
      $region36: #{reverse} parent=34 // pred_check
        _
      $region37: #{reverse} parent=34 // pred_check_branch
        %75 = sbr.rel target = $region39
      $region38: #{reverse} parent=34 // pred_region
        // Predicated region
        $region51: #{reverse} parent=38 // pred_check
          _
        $region52: #{reverse} parent=38 // pred_check_branch
          %91 = sbr.rel (0) target = $region54
        $region53: #{reverse} parent=38 // pred_region
          %s93 = ssub.s32 2, 1
          loop: start=0, step=1, limit=1
          $region55: #{reverse} parent=53 // loop_pre_header
            _
          $region56: #{reverse} parent=53 // loop_header
            %s95 = sphi 0, %s99
            %p96 = scmp.ge.s32.totalorder %s95, 1
            %s100 = sphi [#allocation3], [#allocation3]
            %s101 = sphi %s1, %s1
          $region57: #{reverse} parent=53 // loop_header_branch
            %98 = sbr.rel (%p96) target = $region61
          $region58: #{reverse} parent=53 // loop_body
            %v102 = vld [vmem:[%s100] sm:%s93]
            %103 = vst [vmem:[%s101] sm:%s93] %v102
          $region59: #{reverse} parent=53 // loop_footer
            %s99 = sadd.s32 1, %s95
          $region60: #{reverse} parent=53 // loop_footer_branch
            %94 = sbr.rel target = $region56
          $region61: #{reverse} parent=53 // loop_exit
            _
        $region54: #{reverse} parent=38 // pred_fallthru
          _
      $region39: #{reverse} parent=34 // pred_fallthru
        _
      // Predicated region
      $region40: #{reverse} parent=34 // pred_check
        _
      $region41: #{reverse} parent=34 // pred_check_branch
        %77 = sbr.rel (0) target = $region43
      $region42: #{reverse} parent=34 // pred_region
        %s79 = ssub.s32 2, 1
        loop: start=0, step=1, limit=1
        $region44: #{reverse} parent=42 // loop_pre_header
          _
        $region45: #{reverse} parent=42 // loop_header
          %s81 = sphi 0, %s85
          %p82 = scmp.ge.s32.totalorder %s81, 1
          %s86 = sphi [#allocation3], [#allocation3]
          %s87 = sphi %s1, %s1
        $region46: #{reverse} parent=42 // loop_header_branch
          %84 = sbr.rel (%p82) target = $region50
        $region47: #{reverse} parent=42 // loop_body
          %v88 = vld [vmem:[%s86] sm:%s79]
          %89 = vst [vmem:[%s87] sm:%s79] %v88
        $region48: #{reverse} parent=42 // loop_footer
          %s85 = sadd.s32 1, %s81
        $region49: #{reverse} parent=42 // loop_footer_branch
          %80 = sbr.rel target = $region45
        $region50: #{reverse} parent=42 // loop_exit
          _
      $region43: #{reverse} parent=34 // pred_fallthru
        _
    $region35: #{reverse} parent=1 // pred_fallthru
      _
    %104 = vnop

// kernel: custom-call.19
$region0: #{custom-call.19}
  %s0 = inlined_call_operand.vmem [shape: f32[8,8], index: 0, kind: input, shape index: {}]
  %s1 = inlined_call_operand.vmem [shape: f32[8,8], index: 1, kind: output, shape index: {0}]
  %s2 = inlined_call_operand.vmem [shape: f32[8], index: 2, kind: output, shape index: {1}]
  %3 = xla_tuple %s1, %s2
  $region1: #{custom-call.19} parent=0
    #allocation0 [shape = 'u8[4096]{0}', space=vmem, size = 0x1000, scoped, tag = 'operand span for operand 0']
    #allocation1 [shape = 'u8[4096]{0}', space=vmem, size = 0x1000, scoped, tag = 'operand span for operand 1']
    #allocation2 [shape = 'u8[4096]{0}', space=vmem, size = 0x1000, scoped, tag = 'operand span for operand 2']
    #allocation3 [shape = 'u8[512]{0}', space=vmem, size = 0x400, scoped, tag = 'packed  for operand 2']
    #allocation4 [shape = 'f32[8,128]{1,0}', space=vmem, size = 0x1000, scoped, tag = 'scratch for Householder reflectors']
    // Predicated region
    $region2: #{custom-call.19} parent=1 // pred_check
      _
    $region3: #{custom-call.19} parent=1 // pred_check_branch
      %5 = sbr.rel (0) target = $region5
    $region4: #{custom-call.19} parent=1 // pred_region
      // Predicated region
      $region6: #{custom-call.19} parent=4 // pred_check
        _
      $region7: #{custom-call.19} parent=4 // pred_check_branch
        %7 = sbr.rel (0) target = $region9
      $region8: #{custom-call.19} parent=4 // pred_region
        // Predicated region
        $region21: #{custom-call.19} parent=8 // pred_check
          _
        $region22: #{custom-call.19} parent=8 // pred_check_branch
          %23 = sbr.rel (0) target = $region24
        $region23: #{custom-call.19} parent=8 // pred_region
          loop: start=0, step=1, limit=1
          $region25: #{custom-call.19} parent=23 // loop_pre_header
            _
          $region26: #{custom-call.19} parent=23 // loop_header
            %s25 = sphi 0, %s29
            %p26 = scmp.ge.s32.totalorder %s25, 1
            %s30 = sphi %s0, %s0
            %s31 = sphi [#allocation0], [#allocation0]
          $region27: #{custom-call.19} parent=23 // loop_header_branch
            %28 = sbr.rel (%p26) target = $region31
          $region28: #{custom-call.19} parent=23 // loop_body
            %v32 = vld [vmem:[%s30] sm:$0xff]
            %33 = vst [vmem:[%s31] sm:$0xff] %v32
          $region29: #{custom-call.19} parent=23 // loop_footer
            %s29 = sadd.s32 1, %s25
          $region30: #{custom-call.19} parent=23 // loop_footer_branch
            %24 = sbr.rel target = $region26
          $region31: #{custom-call.19} parent=23 // loop_exit
            _
        $region24: #{custom-call.19} parent=8 // pred_fallthru
          _
        // Predicated region
        $region32: #{custom-call.19} parent=8 // pred_check
          _
        $region33: #{custom-call.19} parent=8 // pred_check_branch
          %35 = sbr.rel target = $region35
        $region34: #{custom-call.19} parent=8 // pred_region
          _
        $region35: #{custom-call.19} parent=8 // pred_fallthru
          _
      $region9: #{custom-call.19} parent=4 // pred_fallthru
        _
      // Predicated region
      $region10: #{custom-call.19} parent=4 // pred_check
        _
      $region11: #{custom-call.19} parent=4 // pred_check_branch
        %9 = sbr.rel target = $region13
      $region12: #{custom-call.19} parent=4 // pred_region
        %s11 = ssub.s32 256, 1
        loop: start=0, step=1, limit=1
        $region14: #{custom-call.19} parent=12 // loop_pre_header
          _
        $region15: #{custom-call.19} parent=12 // loop_header
          %s13 = sphi 0, %s17
          %p14 = scmp.ge.s32.totalorder %s13, 1
          %s18 = sphi %s0, %s0
          %s19 = sphi [#allocation0], [#allocation0]
        $region16: #{custom-call.19} parent=12 // loop_header_branch
          %16 = sbr.rel (%p14) target = $region20
        $region17: #{custom-call.19} parent=12 // loop_body
          %v20 = vld [vmem:[%s18] sm:%s11]
          %21 = vst [vmem:[%s19] sm:%s11] %v20
        $region18: #{custom-call.19} parent=12 // loop_footer
          %s17 = sadd.s32 1, %s13
        $region19: #{custom-call.19} parent=12 // loop_footer_branch
          %12 = sbr.rel target = $region15
        $region20: #{custom-call.19} parent=12 // loop_exit
          _
      $region13: #{custom-call.19} parent=4 // pred_fallthru
        _
    $region5: #{custom-call.19} parent=1 // pred_fallthru
      _
    %36 = vnop
    %v37 = vld [vmem:[#allocation0] sm:$0xff]
    %38 = vst [vmem:[#allocation1] sm:$0xff] %v37
    %39 = vst [vmem:[#allocation2] sm:$0x1] 0.0
    loop: start=0, step=1, limit=8
    $region36: #{custom-call.19} parent=1 // loop_pre_header
      _
    $region37: #{custom-call.19} parent=1 // loop_header
      %s41 = sphi 0, %s45
      %p42 = scmp.ge.s32.totalorder %s41, 8
    $region38: #{custom-call.19} parent=1 // loop_header_branch
      %44 = sbr.rel (%p42) target = $region42
    $region39: #{custom-call.19} parent=1 // loop_body
      %v46 = vld [vmem:[#allocation1] sm:$0xff]
      %v47 = vlaneseq
      %v48 = vshrl.u32 %v47, 7
      %v50 = vstv %s41
      %vm51 = vcmp.gt.s32.totalorder %v48, %v50
      %vm52 = vcmp.lt.s32.totalorder %v48, 8
      %vm53 = vmand %vm51, %vm52
      %v54 = vsel %vm53, %v46, 0.0
      %v55 = vmul.f32 %v54, %v54
      %v56 = vrot.slane %v55, 4
      %v57 = vadd.f32 %v55, %v56
      %v58 = vrot.slane %v57, 2
      %v59 = vadd.f32 %v57, %v58
      %v60 = vrot.slane %v59, 1
      %v61 = vadd.f32 %v59, %v60
      %v62 = vrsqrt.pop %v61
      %v63 = vmul.f32 %v61, %v62
      %vm64 = vcmp.eq.f32.partialorder %v61, inf
      %v65 = vsel %vm64, %v61, %v63
      %vm66 = vcmp.eq.f32.partialorder %v61, 0.0
      %v67 = vand.u32 %v61, 2147483648
      %v68 = vsel %vm66, %v67, %v65
      %vm69 = vcmp.eq.f32.partialorder %v61, 0.0
      %s70 = sshrl.u32 %s41, 3
      %s71 = sand.u32 %s41, 7
      %s72 = smul.addr %s70, 8
      %s73 = sadd.s32 %s71, %s72
      %s74 = scalar_lea.vmem [#allocation1], %s73
      %v75 = vld [vmem:[%s74] ss:$0 sm:$0xff]
      %v76 = vand.u32 2147483647, %v75
      %v77 = vmax.f32 %v76, 0.0
      %v78 = vand.u32 2147483647, %v68
      %v79 = vmax.f32 %v77, %v78
      %v80 = vrcp.pop %v79
      %v81 = vmul.f32 %v76, %v80
      %v82 = vmul.f32 %v81, %v81
      %v83 = vrcp.pop %v79
      %v84 = vmul.f32 0.0, %v83
      %v85 = vmul.f32 %v84, %v84
      %v86 = vadd.f32 %v82, %v85
      %v87 = vrcp.pop %v79
      %v88 = vmul.f32 %v78, %v87
      %v89 = vmul.f32 %v88, %v88
      %v90 = vadd.f32 %v86, %v89
      %vm91 = vcmp.eq.f32.partialorder %v79, 0.0
      %v92 = vrsqrt.pop %v90
      %v93 = vmul.f32 %v90, %v92
      %vm94 = vcmp.eq.f32.partialorder %v90, inf
      %v95 = vsel %vm94, %v90, %v93
      %vm96 = vcmp.eq.f32.partialorder %v90, 0.0
      %v97 = vand.u32 %v90, 2147483648
      %v98 = vsel %vm96, %v97, %v95
      %v99 = vmul.f32 %v79, %v98
      %v100 = vsel %vm91, 0.0, %v99
      %vm101 = vcmp.lt.f32.partialorder %v75, 0.0
      %v102 = vxor.u32 %v100, 2147483648
      %v103 = vsel %vm101, %v100, %v102
      %v104 = vsub.f32 %v103, %v75
      %v105 = vrcp.pop %v103
      %v106 = vmul.f32 %v104, %v105
      %v107 = vsel %vm69, %v75, %v103
      %v108 = vsel %vm69, 0.0, %v106
      %v109 = vsub.f32 %v75, %v107
      %s110 = smov [#allocation1]
      %v111 = vlaneseq
      %v112 = vshrl.u32 %v111, 7
      %v113 = vmov %v112
      %v114 = vld [vmem:[%s110] sm:$0xff]
      %v116 = vstv %s41
      %vm117 = vcmp.gt.s32.totalorder %v113, %v116
      %vm118 = vcmp.lt.s32.totalorder %v113, 8
      %vm119 = vmand %vm117, %vm118
      %v120 = vsel %vm119, %v114, 0.0
      %v121 = vrcp.pop %v109
      %v122 = vmul.f32 %v120, %v121
      %v123 = vsel %vm69, 0.0, %v122
      %v124 = vstv %s41
      %v125 = vlaneseq
      %v126 = vand.u32 %v125, 127
      %vm127 = vcmp.eq.s32.totalorder %v126, %v124
      %v128 = vsel %vm127, %v123, 0.0
      %129 = vadd.xlane.f32.xlu0 %v128
      %v130 = vpop.xlane.xlu0 %129
      %131 = vst [vmem:[#allocation4] sm:$0xff] %v130
      %s132 = scalar_lea.vmem [#allocation4], %s41
      %133 = vst [vmem:[%s132] sm:$0x1] 1.0
      %v134 = vstv %s41
      %v135 = vlaneseq
      %v136 = vand.u32 %v135, 127
      %vm137 = vcmp.eq.s32.totalorder %v136, %v134
      %v138 = vsel %vm137, %v108, 0.0
      %139 = vadd.xlane.f32.xlu0 %v138
      %v140 = vpop.xlane.xlu0 %139
      %v141 = vstv %s41
      %v142 = vlaneseq
      %v143 = vand.u32 %v142, 127
      %vm144 = vcmp.eq.s32.totalorder %v143, %v141
      %v145 = vld [vmem:[#allocation2] ss:$0 sm:$0xff]
      %v146 = vsel %vm144, %v140, %v145
      %147 = vst [vmem:[#allocation2] sm:$0x1] %v146
      %s148 = smov [#allocation1]
      %s149 = smov [#allocation4]
      %v150 = vlaneseq
      %v151 = vshrl.u32 %v150, 7
      %v152 = vmov %v151
      %v154 = vld [vmem:[%s149] sm:$0xff]
      %v155 = vld [vmem:[%s148] sm:$0xff]
      %v156 = vmul.f32 %v154, %v155
      %vm157 = vcmp.lt.s32.totalorder %v152, 8
      %v158 = vsel %vm157, %v156, 0.0
      %v159 = vrot.slane %v158, 4
      %v160 = vadd.f32 %v158, %v159
      %v161 = vrot.slane %v160, 2
      %v162 = vadd.f32 %v160, %v161
      %v163 = vrot.slane %v162, 1
      %v164 = vadd.f32 %v162, %v163
      %s165 = smov %s148
      %s166 = smov %s149
      %v167 = vlaneseq
      %v168 = vshrl.u32 %v167, 7
      %v169 = vmov %v168
      %v170 = vmul.f32 %v164, %v140
      %v172 = vlaneseq
      %v173 = vand.u32 %v172, 127
      %v174 = vld [vmem:[%s166] sm:$0xff]
      %v175 = vmul.f32 %v174, %v170
      %v176 = vld [vmem:[%s165] sm:$0xff]
      %v177 = vstv %s41
      %vm178 = vcmp.gt.s32.totalorder %v173, %v177
      %v179 = vsub.f32 %v176, %v175
      %v180 = vsel %vm178, %v179, %v176
      %v181 = vstv %s41
      %v182 = vlaneseq
      %v183 = vand.u32 %v182, 127
      %vm184 = vcmp.eq.s32.totalorder %v183, %v181
      %v185 = vstv %s41
      %vm186 = vcmp.ge.s32.totalorder %v169, %v185
      %vm187 = vmand %vm184, %vm186
      %v188 = vsel %vm187, %v174, %v180
      %189 = vst [vmem:[%s165] sm:$0xff] %v188
      %s190 = scalar_lea.vmem %s165, %s41
      %v191 = vld [vmem:[%s190] ss:$0 sm:$0xff]
      %v192 = vstv %s41
      %v193 = vlaneseq
      %v194 = vand.u32 %v193, 127
      %vm195 = vcmp.eq.s32.totalorder %v194, %v192
      %v196 = vsel %vm195, %v107, %v191
      %197 = vst [vmem:[%s190] sm:$0x1] %v196
    $region40: #{custom-call.19} parent=1 // loop_footer
      %s45 = sadd.s32 1, %s41
    $region41: #{custom-call.19} parent=1 // loop_footer_branch
      %40 = sbr.rel target = $region37
    $region42: #{custom-call.19} parent=1 // loop_exit
      _
    %s199 = sshll.u32 1, 1
    %s200 = ssub.s32 %s199, 1
    %v202 = vld [vmem:[#allocation2] sm:%s200]
    %s203 = sshll.u32 1, 1
    %s204 = ssub.s32 %s203, 1
    %205 = vst [vmem:[#allocation3] sm:%s204] %v202
    // Predicated region
    $region43: #{custom-call.19} parent=1 // pred_check
      _
    $region44: #{custom-call.19} parent=1 // pred_check_branch
      %207 = sbr.rel (0) target = $region46
    $region45: #{custom-call.19} parent=1 // pred_region
      // Predicated region
      $region47: #{custom-call.19} parent=45 // pred_check
        _
      $region48: #{custom-call.19} parent=45 // pred_check_branch
        %209 = sbr.rel (0) target = $region50
      $region49: #{custom-call.19} parent=45 // pred_region
        // Predicated region
        $region62: #{custom-call.19} parent=49 // pred_check
          _
        $region63: #{custom-call.19} parent=49 // pred_check_branch
          %225 = sbr.rel (0) target = $region65
        $region64: #{custom-call.19} parent=49 // pred_region
          loop: start=0, step=1, limit=1
          $region66: #{custom-call.19} parent=64 // loop_pre_header
            _
          $region67: #{custom-call.19} parent=64 // loop_header
            %s227 = sphi 0, %s231
            %p228 = scmp.ge.s32.totalorder %s227, 1
            %s232 = sphi [#allocation1], [#allocation1]
            %s233 = sphi %s1, %s1
          $region68: #{custom-call.19} parent=64 // loop_header_branch
            %230 = sbr.rel (%p228) target = $region72
          $region69: #{custom-call.19} parent=64 // loop_body
            %v234 = vld [vmem:[%s232] sm:$0xff]
            %235 = vst [vmem:[%s233] sm:$0xff] %v234
          $region70: #{custom-call.19} parent=64 // loop_footer
            %s231 = sadd.s32 1, %s227
          $region71: #{custom-call.19} parent=64 // loop_footer_branch
            %226 = sbr.rel target = $region67
          $region72: #{custom-call.19} parent=64 // loop_exit
            _
        $region65: #{custom-call.19} parent=49 // pred_fallthru
          _
        // Predicated region
        $region73: #{custom-call.19} parent=49 // pred_check
          _
        $region74: #{custom-call.19} parent=49 // pred_check_branch
          %237 = sbr.rel target = $region76
        $region75: #{custom-call.19} parent=49 // pred_region
          _
        $region76: #{custom-call.19} parent=49 // pred_fallthru
          _
      $region50: #{custom-call.19} parent=45 // pred_fallthru
        _
      // Predicated region
      $region51: #{custom-call.19} parent=45 // pred_check
        _
      $region52: #{custom-call.19} parent=45 // pred_check_branch
        %211 = sbr.rel target = $region54
      $region53: #{custom-call.19} parent=45 // pred_region
        %s213 = ssub.s32 256, 1
        loop: start=0, step=1, limit=1
        $region55: #{custom-call.19} parent=53 // loop_pre_header
          _
        $region56: #{custom-call.19} parent=53 // loop_header
          %s215 = sphi 0, %s219
          %p216 = scmp.ge.s32.totalorder %s215, 1
          %s220 = sphi [#allocation1], [#allocation1]
          %s221 = sphi %s1, %s1
        $region57: #{custom-call.19} parent=53 // loop_header_branch
          %218 = sbr.rel (%p216) target = $region61
        $region58: #{custom-call.19} parent=53 // loop_body
          %v222 = vld [vmem:[%s220] sm:%s213]
          %223 = vst [vmem:[%s221] sm:%s213] %v222
        $region59: #{custom-call.19} parent=53 // loop_footer
          %s219 = sadd.s32 1, %s215
        $region60: #{custom-call.19} parent=53 // loop_footer_branch
          %214 = sbr.rel target = $region56
        $region61: #{custom-call.19} parent=53 // loop_exit
          _
      $region54: #{custom-call.19} parent=45 // pred_fallthru
        _
    $region46: #{custom-call.19} parent=1 // pred_fallthru
      _
    %238 = vnop
    // Predicated region
    $region77: #{custom-call.19} parent=1 // pred_check
      _
    $region78: #{custom-call.19} parent=1 // pred_check_branch
      %240 = sbr.rel (0) target = $region80
    $region79: #{custom-call.19} parent=1 // pred_region
      // Predicated region
      $region81: #{custom-call.19} parent=79 // pred_check
        _
      $region82: #{custom-call.19} parent=79 // pred_check_branch
        %242 = sbr.rel (0) target = $region84
      $region83: #{custom-call.19} parent=79 // pred_region
        // Predicated region
        $region85: #{custom-call.19} parent=83 // pred_check
          _
        $region86: #{custom-call.19} parent=83 // pred_check_branch
          %244 = sbr.rel target = $region88
        $region87: #{custom-call.19} parent=83 // pred_region
          // Predicated region
          $region100: #{custom-call.19} parent=87 // pred_check
            _
          $region101: #{custom-call.19} parent=87 // pred_check_branch
            %260 = sbr.rel (0) target = $region103
          $region102: #{custom-call.19} parent=87 // pred_region
            %s262 = ssub.s32 2, 1
            loop: start=0, step=1, limit=1
            $region104: #{custom-call.19} parent=102 // loop_pre_header
              _
            $region105: #{custom-call.19} parent=102 // loop_header
              %s264 = sphi 0, %s268
              %p265 = scmp.ge.s32.totalorder %s264, 1
              %s269 = sphi [#allocation3], [#allocation3]
              %s270 = sphi %s2, %s2
            $region106: #{custom-call.19} parent=102 // loop_header_branch
              %267 = sbr.rel (%p265) target = $region110
            $region107: #{custom-call.19} parent=102 // loop_body
              %v271 = vld [vmem:[%s269] sm:%s262]
              %272 = vst [vmem:[%s270] sm:%s262] %v271
            $region108: #{custom-call.19} parent=102 // loop_footer
              %s268 = sadd.s32 1, %s264
            $region109: #{custom-call.19} parent=102 // loop_footer_branch
              %263 = sbr.rel target = $region105
            $region110: #{custom-call.19} parent=102 // loop_exit
              _
          $region103: #{custom-call.19} parent=87 // pred_fallthru
            _
        $region88: #{custom-call.19} parent=83 // pred_fallthru
          _
        // Predicated region
        $region89: #{custom-call.19} parent=83 // pred_check
          _
        $region90: #{custom-call.19} parent=83 // pred_check_branch
          %246 = sbr.rel (0) target = $region92
        $region91: #{custom-call.19} parent=83 // pred_region
          %s248 = ssub.s32 2, 1
          loop: start=0, step=1, limit=1
          $region93: #{custom-call.19} parent=91 // loop_pre_header
            _
          $region94: #{custom-call.19} parent=91 // loop_header
            %s250 = sphi 0, %s254
            %p251 = scmp.ge.s32.totalorder %s250, 1
            %s255 = sphi [#allocation3], [#allocation3]
            %s256 = sphi %s2, %s2
          $region95: #{custom-call.19} parent=91 // loop_header_branch
            %253 = sbr.rel (%p251) target = $region99
          $region96: #{custom-call.19} parent=91 // loop_body
            %v257 = vld [vmem:[%s255] sm:%s248]
            %258 = vst [vmem:[%s256] sm:%s248] %v257
          $region97: #{custom-call.19} parent=91 // loop_footer
            %s254 = sadd.s32 1, %s250
          $region98: #{custom-call.19} parent=91 // loop_footer_branch
            %249 = sbr.rel target = $region94
          $region99: #{custom-call.19} parent=91 // loop_exit
            _
        $region92: #{custom-call.19} parent=83 // pred_fallthru
          _
      $region84: #{custom-call.19} parent=79 // pred_fallthru
        _
      %273 = vnop
    $region80: #{custom-call.19} parent=1 // pred_fallthru
      _
    // Predicated region
    $region111: #{custom-call.19} parent=1 // pred_check
      _
    $region112: #{custom-call.19} parent=1 // pred_check_branch
      %275 = sbr.rel (0) target = $region114
    $region113: #{custom-call.19} parent=1 // pred_region
      _
    $region114: #{custom-call.19} parent=1 // pred_fallthru
      _

// kernel: reduced_svd_conv_forward.2
$region0: #{reduced_svd_conv_forward.2}
  #allocation0 [shape = 'u32[]', space=smem, size = 0x4, offset = 0x4, fixed_abs, tag = 'smem constant byte address 0x4 - core index']
  #allocation1 [shape = 'u32[144,128]{1,0:T(1,128)}', space=vmem, size = 0x12000, scoped, tag = 'internal scratch']
  %s0 = inlined_call_operand.hbm [shape: f32[8,8], index: 0, kind: input, shape index: {}]
  %s1 = inlined_call_operand.hbm [shape: f32[1,8], index: 1, kind: input, shape index: {}]
  %s2 = inlined_call_operand.vmem [shape: f32[8,36], index: 2, kind: input, shape index: {}]
  %s3 = inlined_call_operand.vmem [shape: f32[8,36], index: 3, kind: output, shape index: {}]
  %s4 = sld [smem:[#allocation0]]
  $region30: #{reduced_svd_conv_forward.2} parent=0
    _
  %s6 = ssub.s32 1, %s4
  %s7 = scalar_select 0, %s6, %s4
  $region1: #{reduced_svd_conv_forward.2} parent=0
    #allocation2 [shape = 'u8[4096]{0}', space=vmem, size = 0x1000, scoped, tag = 'input window, operand 0, single buffered']
    #allocation3 [shape = 's32[1]{0}', space=sflag, size = 0x4, scoped, tag = 'scoped memory for reduced_svd_conv_forward.2']
    #allocation4 [shape = 'u8[512]{0}', space=vmem, size = 0x400, scoped, tag = 'input window, operand 1, single buffered']
    #allocation5 [shape = 's32[1]{0}', space=sflag, size = 0x4, scoped, tag = 'scoped memory for reduced_svd_conv_forward.2']
    %8 = vsyncpa [#allocation3], 0
    %9 = vsyncpa [#allocation5], 0
    // Predicated region
    $region2: #{reduced_svd_conv_forward.2} parent=1 // pred_check
      _
    $region3: #{reduced_svd_conv_forward.2} parent=1 // pred_check_branch
      %11 = sbr.rel (0) target = $region5
    $region4: #{reduced_svd_conv_forward.2} parent=1 // pred_region
      %s13 = ssub.s32 128, 128
      %14 = vsyncadd [#allocation3], %s13
      %s16 = sshll.u32 [#allocation2], 4
      %s17 = int_to_ptr.vmem [resolvable:$true] %s16
      %19 = dma.hbm_to_vmem [thread:$0]  %s0, 128, %s17, [#allocation3]
    $region5: #{reduced_svd_conv_forward.2} parent=1 // pred_fallthru
      _
    // Predicated region
    $region6: #{reduced_svd_conv_forward.2} parent=1 // pred_check
      _
    $region7: #{reduced_svd_conv_forward.2} parent=1 // pred_check_branch
      %21 = sbr.rel (0) target = $region9
    $region8: #{reduced_svd_conv_forward.2} parent=1 // pred_region
      %s23 = ssub.s32 16, 16
      %24 = vsyncadd [#allocation5], %s23
      %s26 = sshll.u32 [#allocation4], 4
      %s27 = int_to_ptr.vmem [resolvable:$true] %s26
      %29 = dma.hbm_to_vmem [thread:$0]  %s1, 16, %s27, [#allocation5]
    $region9: #{reduced_svd_conv_forward.2} parent=1 // pred_fallthru
      _
    // Predicated region
    $region10: #{reduced_svd_conv_forward.2} parent=1 // pred_check
      _
    $region11: #{reduced_svd_conv_forward.2} parent=1 // pred_check_branch
      %31 = sbr.rel (0) target = $region13
    $region12: #{reduced_svd_conv_forward.2} parent=1 // pred_region
      _
    $region13: #{reduced_svd_conv_forward.2} parent=1 // pred_fallthru
      _
    // Predicated region
    $region14: #{reduced_svd_conv_forward.2} parent=1 // pred_check
      _
    $region15: #{reduced_svd_conv_forward.2} parent=1 // pred_check_branch
      %33 = sbr.rel (0) target = $region17
    $region16: #{reduced_svd_conv_forward.2} parent=1 // pred_region
      %34 = dma.done [#allocation3], 128
    $region17: #{reduced_svd_conv_forward.2} parent=1 // pred_fallthru
      _
    // Predicated region
    $region18: #{reduced_svd_conv_forward.2} parent=1 // pred_check
      _
    $region19: #{reduced_svd_conv_forward.2} parent=1 // pred_check_branch
      %36 = sbr.rel (0) target = $region21
    $region20: #{reduced_svd_conv_forward.2} parent=1 // pred_region
      %37 = dma.done [#allocation5], 16
    $region21: #{reduced_svd_conv_forward.2} parent=1 // pred_fallthru
      _
    %v38 = vld [vmem:[#allocation2] sm:$0xff]
    %v39 = vld [vmem:[#allocation4] sm:$0x1]
    %v41 = vlaneseq
    %v42 = vshrl.u32 %v41, 7
    %v43 = vsub.s32 0, %v42
    %v44 = vrot.slane %v39, %v43
    %v46 = vmul.f32 %v38, %v44
    %v47 = vld [vmem:[%s2] sm:$0xff]
    %vm48 = vcmask 64512
    %v50 = vsel %vm48, %v46, 0
    %52 = vmatprep.subr.mxu0 0.0
    %53 = vmatpush1.msra.mxu0 0.0
    %54 = vmatprep.subr.mxu0 0.0
    %55 = vmatpush1.msra.mxu0 0.0
    %56 = vmatprep.subr.mxu0 0.0
    %57 = vmatpush1.msra.mxu0 0.0
    %58 = vmatprep.subr.mxu0 0.0
    %59 = vmatpush1.msra.mxu0 0.0
    %60 = vmatprep.subr.mxu0 0.0
    %61 = vmatpush1.msra.mxu0 0.0
    %62 = vmatprep.subr.mxu0 0.0
    %63 = vmatpush1.msra.mxu0 0.0
    %64 = vmatprep.subr.mxu0 0.0
    %65 = vmatpush1.msra.mxu0 0.0
    %66 = vmatprep.subr.mxu0 0.0
    %67 = vmatpush1.msra.mxu0 0.0
    %68 = vmatprep.subr.mxu0 0.0
    %69 = vmatpush1.msra.mxu0 0.0
    %70 = vmatprep.subr.mxu0 0.0
    %71 = vmatpush1.msra.mxu0 0.0
    %72 = vmatprep.subr.mxu0 0.0
    %73 = vmatpush1.msra.mxu0 0.0
    %74 = vmatprep.subr.mxu0 0.0
    %75 = vmatpush1.msra.mxu0 0.0
    %76 = vmatprep.subr.mxu0 0.0
    %77 = vmatpush1.msra.mxu0 0.0
    %78 = vmatprep.subr.mxu0 0.0
    %79 = vmatpush1.msra.mxu0 0.0
    %80 = vmatprep.subr.mxu0 0.0
    %81 = vmatpush1.msra.mxu0 0.0
    %82 = vmatprep.subr.mxu0 0.0
    %83 = vmatpush1.msra.mxu0 %v47
    %84 = vmatprep.subr.mxu0 0.0
    %85 = vmatpush2.msra.mxu0 0.0
    %86 = vmatprep.subr.mxu0 0.0
    %87 = vmatpush2.msra.mxu0 0.0
    %88 = vmatprep.subr.mxu0 0.0
    %89 = vmatpush2.msra.mxu0 0.0
    %90 = vmatprep.subr.mxu0 0.0
    %91 = vmatpush2.msra.mxu0 0.0
    %92 = vmatprep.subr.mxu0 0.0
    %93 = vmatpush2.msra.mxu0 0.0
    %94 = vmatprep.subr.mxu0 0.0
    %95 = vmatpush2.msra.mxu0 0.0
    %96 = vmatprep.subr.mxu0 0.0
    %97 = vmatpush2.msra.mxu0 0.0
    %98 = vmatprep.subr.mxu0 0.0
    %99 = vmatpush2.msra.mxu0 0.0
    %100 = vmatprep.subr.mxu0 0.0
    %101 = vmatpush2.msra.mxu0 0.0
    %102 = vmatprep.subr.mxu0 0.0
    %103 = vmatpush2.msra.mxu0 0.0
    %104 = vmatprep.subr.mxu0 0.0
    %105 = vmatpush2.msra.mxu0 0.0
    %106 = vmatprep.subr.mxu0 0.0
    %107 = vmatpush2.msra.mxu0 0.0
    %108 = vmatprep.subr.mxu0 0.0
    %109 = vmatpush2.msra.mxu0 0.0
    %110 = vmatprep.subr.mxu0 0.0
    %111 = vmatpush2.msra.mxu0 0.0
    %112 = vmatprep.subr.mxu0 0.0
    %113 = vmatpush2.msra.mxu0 0.0
    %114 = vmatprep.subr.mxu0 0.0
    %115 = vmatpush2.msra.mxu0 0.0
    %116 = vmatprep.mubr.f32.mxu0 0.0
    %117 = vmatmul.mubr.f32.gmra.mxu0 %v50
    %v118 = vpop.f32.mrf.mxu0
    %v119 = vadd.f32 0.0, %v118
    %v120 = vpop.f32.mrf.mxu0
    %121 = vdwg.mxu0
    %vm122 = vcmask 293888
    %123 = vst.msk [vmem:[%s3] sm:$0xff] %vm122, %v119
    // Predicated region
    $region22: #{reduced_svd_conv_forward.2} parent=1 // pred_check
      _
    $region23: #{reduced_svd_conv_forward.2} parent=1 // pred_check_branch
      %125 = sbr.rel (0) target = $region25
    $region24: #{reduced_svd_conv_forward.2} parent=1 // pred_region
      _
    $region25: #{reduced_svd_conv_forward.2} parent=1 // pred_fallthru
      _
    // Predicated region
    $region26: #{reduced_svd_conv_forward.2} parent=1 // pred_check
      _
    $region27: #{reduced_svd_conv_forward.2} parent=1 // pred_check_branch
      %127 = sbr.rel (0) target = $region29
    $region28: #{reduced_svd_conv_forward.2} parent=1 // pred_region
      _
    $region29: #{reduced_svd_conv_forward.2} parent=1 // pred_fallthru
      _
    %128 = vsyncpa [#allocation3], 1
    %129 = vsyncpa [#allocation5], 1

// kernel: reduced_svd_conv_forward.3
$region0: #{reduced_svd_conv_forward.3}
  #allocation0 [shape = 'u32[]', space=smem, size = 0x4, offset = 0x4, fixed_abs, tag = 'smem constant byte address 0x4 - core index']
  #allocation1 [shape = 'u32[144,128]{1,0:T(1,128)}', space=vmem, size = 0x12000, scoped, tag = 'internal scratch']
  %s0 = inlined_call_operand.vmem [shape: bf16[2,4,512], index: 0, kind: input, shape index: {}]
  %s1 = inlined_call_operand.vmem [shape: bf16[9,8,4], index: 1, kind: input, shape index: {}]
  %s2 = inlined_call_operand.vmem [shape: f32[8,1], index: 2, kind: input, shape index: {}]
  %s3 = inlined_call_operand.vmem [shape: f32[2,8,384], index: 3, kind: output, shape index: {}]
  %s4 = sld [smem:[#allocation0]]
  $region45: #{reduced_svd_conv_forward.3} parent=0
    _
  %s6 = ssub.s32 1, %s4
  %s7 = scalar_select 0, %s6, %s4
  loop: start=0, step=1, limit=4
  $region2: #{reduced_svd_conv_forward.3} parent=0 // loop_pre_header
    _
  $region3: #{reduced_svd_conv_forward.3} parent=0 // loop_header
    %s9 = sphi 0, %s13
    %p10 = scmp.ge.s32.totalorder %s9, 4
    %s19 = sphi 0, %s21
    %s22 = sphi 0, %s19
    %s23 = sphi 0, %s22
    %s39 = sphi 0, %s23
    %s43 = sphi 0, %s43
    %s45 = sphi 0, %s43
    %s46 = sphi 0, %s45
    %s60 = sphi 0, %s46
    %s64 = sphi 0, %s64
    %s66 = sphi 0, %s64
    %s67 = sphi 0, %s66
    %s81 = sphi 0, %s67
    %s87 = sphi 0, %s89
    %s90 = sphi 0, %s87
    %s91 = sphi 0, %s90
    %s107 = sphi 0, %s91
  $region4: #{reduced_svd_conv_forward.3} parent=0 // loop_header_branch
    %12 = sbr.rel (%p10) target = $region8
  $region5: #{reduced_svd_conv_forward.3} parent=0 // loop_body
    %s14 = ssub.s32 %s9, 1
    %s15 = ssub.s32 %s9, 2
    %s16 = sadd.s32 %s9, 1
    %s17 = ssub.s32 %s9, %s16
    %p18 = scmp.eq.s32.totalorder %s17, 0
    %s20 = sadd.s32 %s19, 1
    %s21 = scalar_select %p18, %s19, %s20
    %p24 = pneg %p18
    %p25 = scmp.eq.s32.totalorder %s9, 1
    %p26 = por %p24, %p25
    %p27 = scmp.ne.s32.totalorder %s19, %s22
    %p28 = scmp.eq.s32.totalorder %s9, 0
    %p29 = por %p27, %p28
    %p30 = scmp.ne.s32.totalorder %s19, %s22
    %p31 = scmp.eq.s32.totalorder %s14, 1
    %p32 = por %p30, %p31
    %p33 = scmp.ne.s32.totalorder %s22, %s23
    %p34 = scmp.eq.s32.totalorder %s14, 0
    %p35 = por %p33, %p34
    %p36 = scmp.ne.s32.totalorder %s22, %s23
    %p37 = scmp.eq.s32.totalorder %s15, 1
    %p38 = por %p36, %p37
    %p40 = scmp.ne.s32.totalorder %s23, %s39
    %p41 = scmp.eq.s32.totalorder %s15, 0
    %p42 = por %p40, %p41
    %s44 = sadd.s32 %s43, 1
    %p47 = scmp.eq.s32.totalorder %s9, 1
    %p48 = scmp.ne.s32.totalorder %s43, %s45
    %p49 = scmp.eq.s32.totalorder %s9, 0
    %p50 = por %p48, %p49
    %p51 = scmp.ne.s32.totalorder %s43, %s45
    %p52 = scmp.eq.s32.totalorder %s14, 1
    %p53 = por %p51, %p52
    %p54 = scmp.ne.s32.totalorder %s45, %s46
    %p55 = scmp.eq.s32.totalorder %s14, 0
    %p56 = por %p54, %p55
    %p57 = scmp.ne.s32.totalorder %s45, %s46
    %p58 = scmp.eq.s32.totalorder %s15, 1
    %p59 = por %p57, %p58
    %p61 = scmp.ne.s32.totalorder %s46, %s60
    %p62 = scmp.eq.s32.totalorder %s15, 0
    %p63 = por %p61, %p62
    %s65 = sadd.s32 %s64, 1
    %p68 = scmp.eq.s32.totalorder %s9, 1
    %p69 = scmp.ne.s32.totalorder %s64, %s66
    %p70 = scmp.eq.s32.totalorder %s9, 0
    %p71 = por %p69, %p70
    %p72 = scmp.ne.s32.totalorder %s64, %s66
    %p73 = scmp.eq.s32.totalorder %s14, 1
    %p74 = por %p72, %p73
    %p75 = scmp.ne.s32.totalorder %s66, %s67
    %p76 = scmp.eq.s32.totalorder %s14, 0
    %p77 = por %p75, %p76
    %p78 = scmp.ne.s32.totalorder %s66, %s67
    %p79 = scmp.eq.s32.totalorder %s15, 1
    %p80 = por %p78, %p79
    %p82 = scmp.ne.s32.totalorder %s67, %s81
    %p83 = scmp.eq.s32.totalorder %s15, 0
    %p84 = por %p82, %p83
    %s85 = ssub.s32 %s9, %s16
    %p86 = scmp.eq.s32.totalorder %s85, 0
    %s88 = sadd.s32 %s87, 1
    %s89 = scalar_select %p86, %s87, %s88
    %p92 = pneg %p86
    %p93 = scmp.eq.s32.totalorder %s9, 1
    %p94 = por %p92, %p93
    %p95 = scmp.ne.s32.totalorder %s87, %s90
    %p96 = scmp.eq.s32.totalorder %s9, 0
    %p97 = por %p95, %p96
    %p98 = scmp.ne.s32.totalorder %s87, %s90
    %p99 = scmp.eq.s32.totalorder %s14, 1
    %p100 = por %p98, %p99
    %p101 = scmp.ne.s32.totalorder %s90, %s91
    %p102 = scmp.eq.s32.totalorder %s14, 0
    %p103 = por %p101, %p102
    %p104 = scmp.ne.s32.totalorder %s90, %s91
    %p105 = scmp.eq.s32.totalorder %s15, 1
    %p106 = por %p104, %p105
    %p108 = scmp.ne.s32.totalorder %s91, %s107
    %p109 = scmp.eq.s32.totalorder %s15, 0
    %p110 = por %p108, %p109
    %p111 = scmp.le.s32.totalorder 1, %s9
    %p112 = scmp.lt.s32.totalorder %s9, 3
    %p113 = pnand %p111, %p112
    %p114 = pneg %p113
    // Predicated region
    $region9: #{reduced_svd_conv_forward.3} parent=5 // pred_check
      _
    $region10: #{reduced_svd_conv_forward.3} parent=5 // pred_check_branch
      %116 = sbr.rel (%p113) target = $region12
    $region11: #{reduced_svd_conv_forward.3} parent=5 // pred_region
      %s117 = ssub.s32 %s9, 1
      // Predicated region
      $region13: #{reduced_svd_conv_forward.3} parent=11 // pred_check
        %p118 = pneg %p56
      $region14: #{reduced_svd_conv_forward.3} parent=11 // pred_check_branch
        %120 = sbr.rel (%p118) target = $region16
      $region15: #{reduced_svd_conv_forward.3} parent=11 // pred_region
        _
      $region16: #{reduced_svd_conv_forward.3} parent=11 // pred_fallthru
        _
      // Predicated region
      $region17: #{reduced_svd_conv_forward.3} parent=11 // pred_check
        %p121 = pneg %p77
      $region18: #{reduced_svd_conv_forward.3} parent=11 // pred_check_branch
        %123 = sbr.rel (%p121) target = $region20
      $region19: #{reduced_svd_conv_forward.3} parent=11 // pred_region
        _
      $region20: #{reduced_svd_conv_forward.3} parent=11 // pred_fallthru
        _
    $region12: #{reduced_svd_conv_forward.3} parent=5 // pred_fallthru
      _
    %p124 = scmp.lt.s32.totalorder %s9, 2
    // Predicated region
    $region21: #{reduced_svd_conv_forward.3} parent=5 // pred_check
      %p125 = pneg %p124
    $region22: #{reduced_svd_conv_forward.3} parent=5 // pred_check_branch
      %127 = sbr.rel (%p125) target = $region24
    $region23: #{reduced_svd_conv_forward.3} parent=5 // pred_region
      // Predicated region
      $region25: #{reduced_svd_conv_forward.3} parent=23 // pred_check
        %p128 = pneg %p29
      $region26: #{reduced_svd_conv_forward.3} parent=23 // pred_check_branch
        %130 = sbr.rel (%p128) target = $region28
      $region27: #{reduced_svd_conv_forward.3} parent=23 // pred_region
        %p131 = scmp.lt.s32.totalorder %s9, 1
        %s132 = scalar_select %p131, %s9, 1
        %s133 = smul.addr %s132, 4
        %s134 = smul.addr %s133, 2
        %s135 = scalar_lea.vmem %s0, %s134
      $region28: #{reduced_svd_conv_forward.3} parent=23 // pred_fallthru
        _
    $region24: #{reduced_svd_conv_forward.3} parent=5 // pred_fallthru
      _
    %p136 = scmp.le.s32.totalorder 1, %s9
    %p137 = scmp.lt.s32.totalorder %s9, 3
    %p138 = pnand %p136, %p137
    %p139 = pneg %p138
    // Predicated region
    $region29: #{reduced_svd_conv_forward.3} parent=5 // pred_check
      _
    $region30: #{reduced_svd_conv_forward.3} parent=5 // pred_check_branch
      %141 = sbr.rel (%p138) target = $region32
    $region31: #{reduced_svd_conv_forward.3} parent=5 // pred_region
      %s142 = ssub.s32 %s9, 1
      %p143 = scmp.lt.s32.totalorder %s14, 1
      %s144 = scalar_select %p143, %s14, 1
      %s145 = smul.addr %s144, 4
      %s146 = smul.addr %s145, 2
      %s147 = scalar_lea.vmem %s0, %s146
      %p148 = pneg %p35
      %p149 = pneg %p32
      %p150 = pneg %p56
      %p151 = pneg %p53
      %p152 = pneg %p77
      %p153 = pneg %p74
      %p154 = pneg %p103
      %p155 = pneg %p100
      %p156 = scmp.lt.s32.totalorder %s14, 1
      %s157 = scalar_select %p156, %s14, 1
      %s158 = smul.addr %s157, 3
      %s159 = smul.addr %s158, 8
      %s160 = scalar_lea.vmem %s3, %s159
      %p161 = scmp.lt.s32.totalorder %s14, 1
      %s162 = scalar_select %p161, %s14, 1
      %s163 = smul.addr %s162, 4
      %s164 = smul.addr %s163, 2
      %s165 = scalar_lea.vmem %s0, %s164
      %p166 = scmp.lt.s32.totalorder %s14, 1
      %s167 = scalar_select %p166, %s14, 1
      %s168 = smul.addr %s167, 3
      %s169 = smul.addr %s168, 8
      %s170 = scalar_lea.vmem %s3, %s169
      %v172 = vld [vmem:[%s165] sm:$0x3f]
      %v173 = vld [vmem:[%s1] sm:$0xf]
      %v174 = vld [vmem:[%s165] sm:$0xff]
      %s175 = scalar_lea.vmem %s1, 4
      %v176 = vld [vmem:[%s175] sm:$0xf]
      %v178 = vcombine.high %v174, %v174
      %v180 = vunpack.c.l.s4 1983009808
      %v181 = vunpack.c.0.s8 %v180
      %v182 = vlaneseq
      %v183 = vshrl.u32 %v182, 7
      %v184 = vsub.s32 %v181, %v183
      %v185 = vrot.slane %v174, %v184
      %v187 = vunpack.c.l.s4 1983009808
      %v188 = vunpack.c.0.s8 %v187
      %v189 = vlaneseq
      %v190 = vshrl.u32 %v189, 7
      %v191 = vsub.s32 %v188, %v190
      %v192 = vrot.slane %v178, %v191
      %v193 = vcombine.high %v185, %v185
      %v194 = vcombine.high %v192, %v192
      %195 = vrot.lane.b32.xlu0 %v185, 127
      %v196 = vpop.permute.xlu0 %195
      %197 = vrot.lane.b32.xlu0 %v193, 127
      %v198 = vpop.permute.xlu0 %197
      %199 = vrot.lane.b32.xlu0 %v192, 127
      %v200 = vpop.permute.xlu0 %199
      %201 = vrot.lane.b32.xlu0 %v194, 127
      %v202 = vpop.permute.xlu0 %201
      %vm203 = vcmask 1039360
      %v204 = vsel %vm203, %v196, %v198
      %v205 = vsel %vm203, %v198, %v200
      %v206 = vsel %vm203, %v200, %v202
      %vm207 = vcmask 31744
      %v209 = vsel %vm207, %v176, 0
      %vm211 = vcmask 1041408
      %v213 = vsel %vm211, %v204, 0
      %v216 = vsel %vm211, %v205, 0
      %v219 = vsel %vm211, %v206, 0
      %221 = vmatprep.subr.bf16.mxu0 0
      %222 = vmatpush1.bf16.msra.mxu0 0
      %223 = vmatprep.subr.bf16.mxu0 0
      %224 = vmatpush1.bf16.msra.mxu0 0
      %225 = vmatprep.subr.bf16.mxu0 0
      %226 = vmatpush1.bf16.msra.mxu0 0
      %227 = vmatprep.subr.bf16.mxu0 0
      %228 = vmatpush1.bf16.msra.mxu0 0
      %229 = vmatprep.subr.bf16.mxu0 0
      %230 = vmatpush1.bf16.msra.mxu0 0
      %231 = vmatprep.subr.bf16.mxu0 0
      %232 = vmatpush1.bf16.msra.mxu0 0
      %233 = vmatprep.subr.bf16.mxu0 0
      %234 = vmatpush1.bf16.msra.mxu0 0
      %235 = vmatprep.subr.bf16.mxu0 %v216
      %236 = vmatpush1.bf16.msra.mxu0 %v213
      %237 = vmatprep.subr.bf16.mxu0 0
      %238 = vmatpush2.bf16.msra.mxu0 0
      %239 = vmatprep.subr.bf16.mxu0 0
      %240 = vmatpush2.bf16.msra.mxu0 0
      %241 = vmatprep.subr.bf16.mxu0 0
      %242 = vmatpush2.bf16.msra.mxu0 0
      %243 = vmatprep.subr.bf16.mxu0 0
      %244 = vmatpush2.bf16.msra.mxu0 0
      %245 = vmatprep.subr.bf16.mxu0 0
      %246 = vmatpush2.bf16.msra.mxu0 0
      %247 = vmatprep.subr.bf16.mxu0 0
      %248 = vmatpush2.bf16.msra.mxu0 0
      %249 = vmatprep.subr.bf16.mxu0 0
      %250 = vmatpush2.bf16.msra.mxu0 0
      %251 = vmatprep.subr.bf16.mxu0 0
      %252 = vmatpush2.bf16.msra.mxu0 0
      %253 = vmatprep.mubr.bf16.mxu0 0
      %254 = vmatmul.mubr.bf16.gmra.mxu0 %v209
      %v255 = vpop.f32.mrf.mxu0
      %v256 = vadd.f32 0.0, %v255
      %v257 = vpop.f32.mrf.mxu0
      %v258 = vadd.f32 0.0, %v257
      %v259 = vpop.f32.mrf.mxu0
      %v260 = vpop.f32.mrf.mxu0
      %261 = vdwg.mxu0
      %262 = vmatprep.subr.bf16.mxu0 0
      %263 = vmatpush1.bf16.msra.mxu0 0
      %264 = vmatprep.subr.bf16.mxu0 0
      %265 = vmatpush1.bf16.msra.mxu0 0
      %266 = vmatprep.subr.bf16.mxu0 0
      %267 = vmatpush1.bf16.msra.mxu0 0
      %268 = vmatprep.subr.bf16.mxu0 0
      %269 = vmatpush1.bf16.msra.mxu0 0
      %270 = vmatprep.subr.bf16.mxu0 0
      %271 = vmatpush1.bf16.msra.mxu0 0
      %272 = vmatprep.subr.bf16.mxu0 0
      %273 = vmatpush1.bf16.msra.mxu0 0
      %274 = vmatprep.subr.bf16.mxu0 0
      %275 = vmatpush1.bf16.msra.mxu0 0
      %276 = vmatprep.subr.bf16.mxu0 0
      %277 = vmatpush1.bf16.msra.mxu0 %v219
      %278 = vmatprep.subr.bf16.mxu0 0
      %279 = vmatpush2.bf16.msra.mxu0 0
      %280 = vmatprep.subr.bf16.mxu0 0
      %281 = vmatpush2.bf16.msra.mxu0 0
      %282 = vmatprep.subr.bf16.mxu0 0
      %283 = vmatpush2.bf16.msra.mxu0 0
      %284 = vmatprep.subr.bf16.mxu0 0
      %285 = vmatpush2.bf16.msra.mxu0 0
      %286 = vmatprep.subr.bf16.mxu0 0
      %287 = vmatpush2.bf16.msra.mxu0 0
      %288 = vmatprep.subr.bf16.mxu0 0
      %289 = vmatpush2.bf16.msra.mxu0 0
      %290 = vmatprep.subr.bf16.mxu0 0
      %291 = vmatpush2.bf16.msra.mxu0 0
      %292 = vmatprep.subr.bf16.mxu0 0
      %293 = vmatpush2.bf16.msra.mxu0 0
      %294 = vmatprep.mubr.bf16.mxu0 0
      %295 = vmatmul.mubr.bf16.gmra.mxu0 %v209
      %v296 = vpop.f32.mrf.mxu0
      %v297 = vadd.f32 0.0, %v296
      %v298 = vpop.f32.mrf.mxu0
      %v299 = vpop.f32.mrf.mxu0
      %v300 = vpop.f32.mrf.mxu0
      %301 = vdwg.mxu0
      %v303 = vcombine.high %v172, %v172
      %v305 = vunpack.c.l.s4 1983009808
      %v306 = vunpack.c.0.s8 %v305
      %v307 = vlaneseq
      %v308 = vshrl.u32 %v307, 7
      %v309 = vsub.s32 %v306, %v308
      %v310 = vrot.slane %v172, %v309
      %v312 = vunpack.c.l.s4 1983009808
      %v313 = vunpack.c.0.s8 %v312
      %v314 = vlaneseq
      %v315 = vshrl.u32 %v314, 7
      %v316 = vsub.s32 %v313, %v315
      %v317 = vrot.slane %v303, %v316
      %v318 = vcombine.high %v310, %v310
      %v320 = vsel %vm207, %v173, 0
      %v323 = vsel %vm211, %v310, 0
      %v326 = vsel %vm211, %v318, 0
      %v329 = vsel %vm211, %v317, 0
      %331 = vmatprep.subr.bf16.mxu0 0
      %332 = vmatpush1.bf16.msra.mxu0 0
      %333 = vmatprep.subr.bf16.mxu0 0
      %334 = vmatpush1.bf16.msra.mxu0 0
      %335 = vmatprep.subr.bf16.mxu0 0
      %336 = vmatpush1.bf16.msra.mxu0 0
      %337 = vmatprep.subr.bf16.mxu0 0
      %338 = vmatpush1.bf16.msra.mxu0 0
      %339 = vmatprep.subr.bf16.mxu0 0
      %340 = vmatpush1.bf16.msra.mxu0 0
      %341 = vmatprep.subr.bf16.mxu0 0
      %342 = vmatpush1.bf16.msra.mxu0 0
      %343 = vmatprep.subr.bf16.mxu0 0
      %344 = vmatpush1.bf16.msra.mxu0 0
      %345 = vmatprep.subr.bf16.mxu0 %v326
      %346 = vmatpush1.bf16.msra.mxu0 %v323
      %347 = vmatprep.subr.bf16.mxu0 0
      %348 = vmatpush2.bf16.msra.mxu0 0
      %349 = vmatprep.subr.bf16.mxu0 0
      %350 = vmatpush2.bf16.msra.mxu0 0
      %351 = vmatprep.subr.bf16.mxu0 0
      %352 = vmatpush2.bf16.msra.mxu0 0
      %353 = vmatprep.subr.bf16.mxu0 0
      %354 = vmatpush2.bf16.msra.mxu0 0
      %355 = vmatprep.subr.bf16.mxu0 0
      %356 = vmatpush2.bf16.msra.mxu0 0
      %357 = vmatprep.subr.bf16.mxu0 0
      %358 = vmatpush2.bf16.msra.mxu0 0
      %359 = vmatprep.subr.bf16.mxu0 0
      %360 = vmatpush2.bf16.msra.mxu0 0
      %361 = vmatprep.subr.bf16.mxu0 0
      %362 = vmatpush2.bf16.msra.mxu0 0
      %363 = vmatprep.mubr.bf16.mxu0 0
      %364 = vmatmul.mubr.bf16.gmra.mxu0 %v320
      %v365 = vpop.f32.mrf.mxu0
      %v366 = vadd.f32 %v256, %v365
      %v367 = vpop.f32.mrf.mxu0
      %v368 = vadd.f32 %v258, %v367
      %v369 = vpop.f32.mrf.mxu0
      %v370 = vpop.f32.mrf.mxu0
      %371 = vdwg.mxu0
      %372 = vmatprep.subr.bf16.mxu0 0
      %373 = vmatpush1.bf16.msra.mxu0 0
      %374 = vmatprep.subr.bf16.mxu0 0
      %375 = vmatpush1.bf16.msra.mxu0 0
      %376 = vmatprep.subr.bf16.mxu0 0
      %377 = vmatpush1.bf16.msra.mxu0 0
      %378 = vmatprep.subr.bf16.mxu0 0
      %379 = vmatpush1.bf16.msra.mxu0 0
      %380 = vmatprep.subr.bf16.mxu0 0
      %381 = vmatpush1.bf16.msra.mxu0 0
      %382 = vmatprep.subr.bf16.mxu0 0
      %383 = vmatpush1.bf16.msra.mxu0 0
      %384 = vmatprep.subr.bf16.mxu0 0
      %385 = vmatpush1.bf16.msra.mxu0 0
      %386 = vmatprep.subr.bf16.mxu0 0
      %387 = vmatpush1.bf16.msra.mxu0 %v329
      %388 = vmatprep.subr.bf16.mxu0 0
      %389 = vmatpush2.bf16.msra.mxu0 0
      %390 = vmatprep.subr.bf16.mxu0 0
      %391 = vmatpush2.bf16.msra.mxu0 0
      %392 = vmatprep.subr.bf16.mxu0 0
      %393 = vmatpush2.bf16.msra.mxu0 0
      %394 = vmatprep.subr.bf16.mxu0 0
      %395 = vmatpush2.bf16.msra.mxu0 0
      %396 = vmatprep.subr.bf16.mxu0 0
      %397 = vmatpush2.bf16.msra.mxu0 0
      %398 = vmatprep.subr.bf16.mxu0 0
      %399 = vmatpush2.bf16.msra.mxu0 0
      %400 = vmatprep.subr.bf16.mxu0 0
      %401 = vmatpush2.bf16.msra.mxu0 0
      %402 = vmatprep.subr.bf16.mxu0 0
      %403 = vmatpush2.bf16.msra.mxu0 0
      %404 = vmatprep.mubr.bf16.mxu0 0
      %405 = vmatmul.mubr.bf16.gmra.mxu0 %v320
      %v406 = vpop.f32.mrf.mxu0
      %v407 = vadd.f32 %v297, %v406
      %v408 = vpop.f32.mrf.mxu0
      %v409 = vpop.f32.mrf.mxu0
      %v410 = vpop.f32.mrf.mxu0
      %411 = vdwg.mxu0
      %v412 = vld [vmem:[%s165] sm:$0xff]
      %s413 = scalar_lea.vmem %s1, 8
      %v414 = vld [vmem:[%s413] sm:$0xf]
      %v416 = vcombine.high %v412, %v412
      %v418 = vunpack.c.l.s4 1983009808
      %v419 = vunpack.c.0.s8 %v418
      %v420 = vlaneseq
      %v421 = vshrl.u32 %v420, 7
      %v422 = vsub.s32 %v419, %v421
      %v423 = vrot.slane %v412, %v422
      %v425 = vunpack.c.l.s4 1983009808
      %v426 = vunpack.c.0.s8 %v425
      %v427 = vlaneseq
      %v428 = vshrl.u32 %v427, 7
      %v429 = vsub.s32 %v426, %v428
      %v430 = vrot.slane %v416, %v429
      %v431 = vcombine.high %v423, %v423
      %v432 = vcombine.high %v430, %v430
      %433 = vrot.lane.b32.xlu0 %v423, 126
      %v434 = vpop.permute.xlu0 %433
      %435 = vrot.lane.b32.xlu0 %v431, 126
      %v436 = vpop.permute.xlu0 %435
      %437 = vrot.lane.b32.xlu0 %v430, 126
      %v438 = vpop.permute.xlu0 %437
      %439 = vrot.lane.b32.xlu0 %v432, 126
      %v440 = vpop.permute.xlu0 %439
      %vm441 = vcmask 1031168
      %v442 = vsel %vm441, %v434, %v436
      %v443 = vsel %vm441, %v436, %v438
      %v444 = vsel %vm441, %v438, %v440
      %v446 = vsel %vm207, %v414, 0
      %v449 = vsel %vm211, %v442, 0
      %v452 = vsel %vm211, %v443, 0
      %v455 = vsel %vm211, %v444, 0
      %457 = vmatprep.subr.bf16.mxu0 0
      %458 = vmatpush1.bf16.msra.mxu0 0
      %459 = vmatprep.subr.bf16.mxu0 0
      %460 = vmatpush1.bf16.msra.mxu0 0
      %461 = vmatprep.subr.bf16.mxu0 0
      %462 = vmatpush1.bf16.msra.mxu0 0
      %463 = vmatprep.subr.bf16.mxu0 0
      %464 = vmatpush1.bf16.msra.mxu0 0
      %465 = vmatprep.subr.bf16.mxu0 0
      %466 = vmatpush1.bf16.msra.mxu0 0
      %467 = vmatprep.subr.bf16.mxu0 0
      %468 = vmatpush1.bf16.msra.mxu0 0
      %469 = vmatprep.subr.bf16.mxu0 0
      %470 = vmatpush1.bf16.msra.mxu0 0
      %471 = vmatprep.subr.bf16.mxu0 %v452
      %472 = vmatpush1.bf16.msra.mxu0 %v449
      %473 = vmatprep.subr.bf16.mxu0 0
      %474 = vmatpush2.bf16.msra.mxu0 0
      %475 = vmatprep.subr.bf16.mxu0 0
      %476 = vmatpush2.bf16.msra.mxu0 0
      %477 = vmatprep.subr.bf16.mxu0 0
      %478 = vmatpush2.bf16.msra.mxu0 0
      %479 = vmatprep.subr.bf16.mxu0 0
      %480 = vmatpush2.bf16.msra.mxu0 0
      %481 = vmatprep.subr.bf16.mxu0 0
      %482 = vmatpush2.bf16.msra.mxu0 0
      %483 = vmatprep.subr.bf16.mxu0 0
      %484 = vmatpush2.bf16.msra.mxu0 0
      %485 = vmatprep.subr.bf16.mxu0 0
      %486 = vmatpush2.bf16.msra.mxu0 0
      %487 = vmatprep.subr.bf16.mxu0 0
      %488 = vmatpush2.bf16.msra.mxu0 0
      %489 = vmatprep.mubr.bf16.mxu0 0
      %490 = vmatmul.mubr.bf16.gmra.mxu0 %v446
      %v491 = vpop.f32.mrf.mxu0
      %v492 = vadd.f32 0.0, %v491
      %v493 = vpop.f32.mrf.mxu0
      %v494 = vadd.f32 0.0, %v493
      %v495 = vpop.f32.mrf.mxu0
      %v496 = vpop.f32.mrf.mxu0
      %497 = vdwg.mxu0
      %498 = vmatprep.subr.bf16.mxu0 0
      %499 = vmatpush1.bf16.msra.mxu0 0
      %500 = vmatprep.subr.bf16.mxu0 0
      %501 = vmatpush1.bf16.msra.mxu0 0
      %502 = vmatprep.subr.bf16.mxu0 0
      %503 = vmatpush1.bf16.msra.mxu0 0
      %504 = vmatprep.subr.bf16.mxu0 0
      %505 = vmatpush1.bf16.msra.mxu0 0
      %506 = vmatprep.subr.bf16.mxu0 0
      %507 = vmatpush1.bf16.msra.mxu0 0
      %508 = vmatprep.subr.bf16.mxu0 0
      %509 = vmatpush1.bf16.msra.mxu0 0
      %510 = vmatprep.subr.bf16.mxu0 0
      %511 = vmatpush1.bf16.msra.mxu0 0
      %512 = vmatprep.subr.bf16.mxu0 0
      %513 = vmatpush1.bf16.msra.mxu0 %v455
      %514 = vmatprep.subr.bf16.mxu0 0
      %515 = vmatpush2.bf16.msra.mxu0 0
      %516 = vmatprep.subr.bf16.mxu0 0
      %517 = vmatpush2.bf16.msra.mxu0 0
      %518 = vmatprep.subr.bf16.mxu0 0
      %519 = vmatpush2.bf16.msra.mxu0 0
      %520 = vmatprep.subr.bf16.mxu0 0
      %521 = vmatpush2.bf16.msra.mxu0 0
      %522 = vmatprep.subr.bf16.mxu0 0
      %523 = vmatpush2.bf16.msra.mxu0 0
      %524 = vmatprep.subr.bf16.mxu0 0
      %525 = vmatpush2.bf16.msra.mxu0 0
      %526 = vmatprep.subr.bf16.mxu0 0
      %527 = vmatpush2.bf16.msra.mxu0 0
      %528 = vmatprep.subr.bf16.mxu0 0
      %529 = vmatpush2.bf16.msra.mxu0 0
      %530 = vmatprep.mubr.bf16.mxu0 0
      %531 = vmatmul.mubr.bf16.gmra.mxu0 %v446
      %v532 = vpop.f32.mrf.mxu0
      %v533 = vadd.f32 0.0, %v532
      %v534 = vpop.f32.mrf.mxu0
      %v535 = vpop.f32.mrf.mxu0
      %v536 = vpop.f32.mrf.mxu0
      %537 = vdwg.mxu0
      %v538 = vadd.f32 %v366, %v492
      %v539 = vadd.f32 %v368, %v494
      %v540 = vadd.f32 %v407, %v533
      %v541 = vld [vmem:[%s165] sm:$0xff]
      %s542 = scalar_lea.vmem %s1, 12
      %v543 = vld [vmem:[%s542] sm:$0xf]
      %v545 = vcombine.high %v541, %v541
      %v547 = vunpack.c.l.s4 1983009808
      %v548 = vunpack.c.0.s8 %v547
      %v549 = vlaneseq
      %v550 = vshrl.u32 %v549, 7
      %v551 = vsub.s32 %v548, %v550
      %v552 = vrot.slane %v541, %v551
      %v554 = vunpack.c.l.s4 1983009808
      %v555 = vunpack.c.0.s8 %v554
      %v556 = vlaneseq
      %v557 = vshrl.u32 %v556, 7
      %v558 = vsub.s32 %v555, %v557
      %v559 = vrot.slane %v545, %v558
      %v560 = vcombine.high %v552, %v552
      %v561 = vcombine.high %v559, %v559
      %562 = vrot.lane.b32.xlu0 %v552, 110
      %v563 = vpop.permute.xlu0 %562
      %564 = vrot.lane.b32.xlu0 %v560, 110
      %v565 = vpop.permute.xlu0 %564
      %566 = vrot.lane.b32.xlu0 %v559, 110
      %v567 = vpop.permute.xlu0 %566
      %568 = vrot.lane.b32.xlu0 %v561, 110
      %v569 = vpop.permute.xlu0 %568
      %vm570 = vcmask 900096
      %v571 = vsel %vm570, %v563, %v565
      %v572 = vsel %vm570, %v565, %v567
      %v573 = vsel %vm570, %v567, %v569
      %v575 = vsel %vm207, %v543, 0
      %v578 = vsel %vm211, %v571, 0
      %v581 = vsel %vm211, %v572, 0
      %v584 = vsel %vm211, %v573, 0
      %586 = vmatprep.subr.bf16.mxu0 0
      %587 = vmatpush1.bf16.msra.mxu0 0
      %588 = vmatprep.subr.bf16.mxu0 0
      %589 = vmatpush1.bf16.msra.mxu0 0
      %590 = vmatprep.subr.bf16.mxu0 0
      %591 = vmatpush1.bf16.msra.mxu0 0
      %592 = vmatprep.subr.bf16.mxu0 0
      %593 = vmatpush1.bf16.msra.mxu0 0
      %594 = vmatprep.subr.bf16.mxu0 0
      %595 = vmatpush1.bf16.msra.mxu0 0
      %596 = vmatprep.subr.bf16.mxu0 0
      %597 = vmatpush1.bf16.msra.mxu0 0
      %598 = vmatprep.subr.bf16.mxu0 0
      %599 = vmatpush1.bf16.msra.mxu0 0
      %600 = vmatprep.subr.bf16.mxu0 %v581
      %601 = vmatpush1.bf16.msra.mxu0 %v578
      %602 = vmatprep.subr.bf16.mxu0 0
      %603 = vmatpush2.bf16.msra.mxu0 0
      %604 = vmatprep.subr.bf16.mxu0 0
      %605 = vmatpush2.bf16.msra.mxu0 0
      %606 = vmatprep.subr.bf16.mxu0 0
      %607 = vmatpush2.bf16.msra.mxu0 0
      %608 = vmatprep.subr.bf16.mxu0 0
      %609 = vmatpush2.bf16.msra.mxu0 0
      %610 = vmatprep.subr.bf16.mxu0 0
      %611 = vmatpush2.bf16.msra.mxu0 0
      %612 = vmatprep.subr.bf16.mxu0 0
      %613 = vmatpush2.bf16.msra.mxu0 0
      %614 = vmatprep.subr.bf16.mxu0 0
      %615 = vmatpush2.bf16.msra.mxu0 0
      %616 = vmatprep.subr.bf16.mxu0 0
      %617 = vmatpush2.bf16.msra.mxu0 0
      %618 = vmatprep.mubr.bf16.mxu0 0
      %619 = vmatmul.mubr.bf16.gmra.mxu0 %v575
      %v620 = vpop.f32.mrf.mxu0
      %v621 = vadd.f32 0.0, %v620
      %v622 = vpop.f32.mrf.mxu0
      %v623 = vadd.f32 0.0, %v622
      %v624 = vpop.f32.mrf.mxu0
      %v625 = vpop.f32.mrf.mxu0
      %626 = vdwg.mxu0
      %627 = vmatprep.subr.bf16.mxu0 0
      %628 = vmatpush1.bf16.msra.mxu0 0
      %629 = vmatprep.subr.bf16.mxu0 0
      %630 = vmatpush1.bf16.msra.mxu0 0
      %631 = vmatprep.subr.bf16.mxu0 0
      %632 = vmatpush1.bf16.msra.mxu0 0
      %633 = vmatprep.subr.bf16.mxu0 0
      %634 = vmatpush1.bf16.msra.mxu0 0
      %635 = vmatprep.subr.bf16.mxu0 0
      %636 = vmatpush1.bf16.msra.mxu0 0
      %637 = vmatprep.subr.bf16.mxu0 0
      %638 = vmatpush1.bf16.msra.mxu0 0
      %639 = vmatprep.subr.bf16.mxu0 0
      %640 = vmatpush1.bf16.msra.mxu0 0
      %641 = vmatprep.subr.bf16.mxu0 0
      %642 = vmatpush1.bf16.msra.mxu0 %v584
      %643 = vmatprep.subr.bf16.mxu0 0
      %644 = vmatpush2.bf16.msra.mxu0 0
      %645 = vmatprep.subr.bf16.mxu0 0
      %646 = vmatpush2.bf16.msra.mxu0 0
      %647 = vmatprep.subr.bf16.mxu0 0
      %648 = vmatpush2.bf16.msra.mxu0 0
      %649 = vmatprep.subr.bf16.mxu0 0
      %650 = vmatpush2.bf16.msra.mxu0 0
      %651 = vmatprep.subr.bf16.mxu0 0
      %652 = vmatpush2.bf16.msra.mxu0 0
      %653 = vmatprep.subr.bf16.mxu0 0
      %654 = vmatpush2.bf16.msra.mxu0 0
      %655 = vmatprep.subr.bf16.mxu0 0
      %656 = vmatpush2.bf16.msra.mxu0 0
      %657 = vmatprep.subr.bf16.mxu0 0
      %658 = vmatpush2.bf16.msra.mxu0 0
      %659 = vmatprep.mubr.bf16.mxu0 0
      %660 = vmatmul.mubr.bf16.gmra.mxu0 %v575
      %v661 = vpop.f32.mrf.mxu0
      %v662 = vadd.f32 0.0, %v661
      %v663 = vpop.f32.mrf.mxu0
      %v664 = vpop.f32.mrf.mxu0
      %v665 = vpop.f32.mrf.mxu0
      %666 = vdwg.mxu0
      %v667 = vadd.f32 %v538, %v621
      %v668 = vadd.f32 %v539, %v623
      %v669 = vadd.f32 %v540, %v662
      %v670 = vld [vmem:[%s165] sm:$0xff]
      %s671 = scalar_lea.vmem %s1, 16
      %v672 = vld [vmem:[%s671] sm:$0xf]
      %v674 = vcombine.high %v670, %v670
      %v676 = vunpack.c.l.s4 1983009808
      %v677 = vunpack.c.0.s8 %v676
      %v678 = vlaneseq
      %v679 = vshrl.u32 %v678, 7
      %v680 = vsub.s32 %v677, %v679
      %v681 = vrot.slane %v670, %v680
      %v683 = vunpack.c.l.s4 1983009808
      %v684 = vunpack.c.0.s8 %v683
      %v685 = vlaneseq
      %v686 = vshrl.u32 %v685, 7
      %v687 = vsub.s32 %v684, %v686
      %v688 = vrot.slane %v674, %v687
      %v689 = vcombine.high %v681, %v681
      %v690 = vcombine.high %v688, %v688
      %691 = vrot.lane.b32.xlu0 %v681, 109
      %v692 = vpop.permute.xlu0 %691
      %693 = vrot.lane.b32.xlu0 %v689, 109
      %v694 = vpop.permute.xlu0 %693
      %695 = vrot.lane.b32.xlu0 %v688, 109
      %v696 = vpop.permute.xlu0 %695
      %697 = vrot.lane.b32.xlu0 %v690, 109
      %v698 = vpop.permute.xlu0 %697
      %vm699 = vcmask 891904
      %v700 = vsel %vm699, %v692, %v694
      %v701 = vsel %vm699, %v694, %v696
      %v702 = vsel %vm699, %v696, %v698
      %v704 = vsel %vm207, %v672, 0
      %v707 = vsel %vm211, %v700, 0
      %v710 = vsel %vm211, %v701, 0
      %v713 = vsel %vm211, %v702, 0
      %715 = vmatprep.subr.bf16.mxu0 0
      %716 = vmatpush1.bf16.msra.mxu0 0
      %717 = vmatprep.subr.bf16.mxu0 0
      %718 = vmatpush1.bf16.msra.mxu0 0
      %719 = vmatprep.subr.bf16.mxu0 0
      %720 = vmatpush1.bf16.msra.mxu0 0
      %721 = vmatprep.subr.bf16.mxu0 0
      %722 = vmatpush1.bf16.msra.mxu0 0
      %723 = vmatprep.subr.bf16.mxu0 0
      %724 = vmatpush1.bf16.msra.mxu0 0
      %725 = vmatprep.subr.bf16.mxu0 0
      %726 = vmatpush1.bf16.msra.mxu0 0
      %727 = vmatprep.subr.bf16.mxu0 0
      %728 = vmatpush1.bf16.msra.mxu0 0
      %729 = vmatprep.subr.bf16.mxu0 %v710
      %730 = vmatpush1.bf16.msra.mxu0 %v707
      %731 = vmatprep.subr.bf16.mxu0 0
      %732 = vmatpush2.bf16.msra.mxu0 0
      %733 = vmatprep.subr.bf16.mxu0 0
      %734 = vmatpush2.bf16.msra.mxu0 0
      %735 = vmatprep.subr.bf16.mxu0 0
      %736 = vmatpush2.bf16.msra.mxu0 0
      %737 = vmatprep.subr.bf16.mxu0 0
      %738 = vmatpush2.bf16.msra.mxu0 0
      %739 = vmatprep.subr.bf16.mxu0 0
      %740 = vmatpush2.bf16.msra.mxu0 0
      %741 = vmatprep.subr.bf16.mxu0 0
      %742 = vmatpush2.bf16.msra.mxu0 0
      %743 = vmatprep.subr.bf16.mxu0 0
      %744 = vmatpush2.bf16.msra.mxu0 0
      %745 = vmatprep.subr.bf16.mxu0 0
      %746 = vmatpush2.bf16.msra.mxu0 0
      %747 = vmatprep.mubr.bf16.mxu0 0
      %748 = vmatmul.mubr.bf16.gmra.mxu0 %v704
      %v749 = vpop.f32.mrf.mxu0
      %v750 = vadd.f32 0.0, %v749
      %v751 = vpop.f32.mrf.mxu0
      %v752 = vadd.f32 0.0, %v751
      %v753 = vpop.f32.mrf.mxu0
      %v754 = vpop.f32.mrf.mxu0
      %755 = vdwg.mxu0
      %756 = vmatprep.subr.bf16.mxu0 0
      %757 = vmatpush1.bf16.msra.mxu0 0
      %758 = vmatprep.subr.bf16.mxu0 0
      %759 = vmatpush1.bf16.msra.mxu0 0
      %760 = vmatprep.subr.bf16.mxu0 0
      %761 = vmatpush1.bf16.msra.mxu0 0
      %762 = vmatprep.subr.bf16.mxu0 0
      %763 = vmatpush1.bf16.msra.mxu0 0
      %764 = vmatprep.subr.bf16.mxu0 0
      %765 = vmatpush1.bf16.msra.mxu0 0
      %766 = vmatprep.subr.bf16.mxu0 0
      %767 = vmatpush1.bf16.msra.mxu0 0
      %768 = vmatprep.subr.bf16.mxu0 0
      %769 = vmatpush1.bf16.msra.mxu0 0
      %770 = vmatprep.subr.bf16.mxu0 0
      %771 = vmatpush1.bf16.msra.mxu0 %v713
      %772 = vmatprep.subr.bf16.mxu0 0
      %773 = vmatpush2.bf16.msra.mxu0 0
      %774 = vmatprep.subr.bf16.mxu0 0
      %775 = vmatpush2.bf16.msra.mxu0 0
      %776 = vmatprep.subr.bf16.mxu0 0
      %777 = vmatpush2.bf16.msra.mxu0 0
      %778 = vmatprep.subr.bf16.mxu0 0
      %779 = vmatpush2.bf16.msra.mxu0 0
      %780 = vmatprep.subr.bf16.mxu0 0
      %781 = vmatpush2.bf16.msra.mxu0 0
      %782 = vmatprep.subr.bf16.mxu0 0
      %783 = vmatpush2.bf16.msra.mxu0 0
      %784 = vmatprep.subr.bf16.mxu0 0
      %785 = vmatpush2.bf16.msra.mxu0 0
      %786 = vmatprep.subr.bf16.mxu0 0
      %787 = vmatpush2.bf16.msra.mxu0 0
      %788 = vmatprep.mubr.bf16.mxu0 0
      %789 = vmatmul.mubr.bf16.gmra.mxu0 %v704
      %v790 = vpop.f32.mrf.mxu0
      %v791 = vadd.f32 0.0, %v790
      %v792 = vpop.f32.mrf.mxu0
      %v793 = vpop.f32.mrf.mxu0
      %v794 = vpop.f32.mrf.mxu0
      %795 = vdwg.mxu0
      %v796 = vadd.f32 %v667, %v750
      %v797 = vadd.f32 %v668, %v752
      %v798 = vadd.f32 %v669, %v791
      %v799 = vld [vmem:[%s165] sm:$0xff]
      %s800 = scalar_lea.vmem %s1, 20
      %v801 = vld [vmem:[%s800] sm:$0xf]
      %v803 = vcombine.high %v799, %v799
      %v805 = vunpack.c.l.s4 1983009808
      %v806 = vunpack.c.0.s8 %v805
      %v807 = vlaneseq
      %v808 = vshrl.u32 %v807, 7
      %v809 = vsub.s32 %v806, %v808
      %v810 = vrot.slane %v799, %v809
      %v812 = vunpack.c.l.s4 1983009808
      %v813 = vunpack.c.0.s8 %v812
      %v814 = vlaneseq
      %v815 = vshrl.u32 %v814, 7
      %v816 = vsub.s32 %v813, %v815
      %v817 = vrot.slane %v803, %v816
      %v818 = vcombine.high %v810, %v810
      %v819 = vcombine.high %v817, %v817
      %820 = vrot.lane.b32.xlu0 %v810, 108
      %v821 = vpop.permute.xlu0 %820
      %822 = vrot.lane.b32.xlu0 %v818, 108
      %v823 = vpop.permute.xlu0 %822
      %824 = vrot.lane.b32.xlu0 %v817, 108
      %v825 = vpop.permute.xlu0 %824
      %826 = vrot.lane.b32.xlu0 %v819, 108
      %v827 = vpop.permute.xlu0 %826
      %vm828 = vcmask 883712
      %v829 = vsel %vm828, %v821, %v823
      %v830 = vsel %vm828, %v823, %v825
      %v831 = vsel %vm828, %v825, %v827
      %v833 = vsel %vm207, %v801, 0
      %v836 = vsel %vm211, %v829, 0
      %v839 = vsel %vm211, %v830, 0
      %v842 = vsel %vm211, %v831, 0
      %844 = vmatprep.subr.bf16.mxu0 0
      %845 = vmatpush1.bf16.msra.mxu0 0
      %846 = vmatprep.subr.bf16.mxu0 0
      %847 = vmatpush1.bf16.msra.mxu0 0
      %848 = vmatprep.subr.bf16.mxu0 0
      %849 = vmatpush1.bf16.msra.mxu0 0
      %850 = vmatprep.subr.bf16.mxu0 0
      %851 = vmatpush1.bf16.msra.mxu0 0
      %852 = vmatprep.subr.bf16.mxu0 0
      %853 = vmatpush1.bf16.msra.mxu0 0
      %854 = vmatprep.subr.bf16.mxu0 0
      %855 = vmatpush1.bf16.msra.mxu0 0
      %856 = vmatprep.subr.bf16.mxu0 0
      %857 = vmatpush1.bf16.msra.mxu0 0
      %858 = vmatprep.subr.bf16.mxu0 %v839
      %859 = vmatpush1.bf16.msra.mxu0 %v836
      %860 = vmatprep.subr.bf16.mxu0 0
      %861 = vmatpush2.bf16.msra.mxu0 0
      %862 = vmatprep.subr.bf16.mxu0 0
      %863 = vmatpush2.bf16.msra.mxu0 0
      %864 = vmatprep.subr.bf16.mxu0 0
      %865 = vmatpush2.bf16.msra.mxu0 0
      %866 = vmatprep.subr.bf16.mxu0 0
      %867 = vmatpush2.bf16.msra.mxu0 0
      %868 = vmatprep.subr.bf16.mxu0 0
      %869 = vmatpush2.bf16.msra.mxu0 0
      %870 = vmatprep.subr.bf16.mxu0 0
      %871 = vmatpush2.bf16.msra.mxu0 0
      %872 = vmatprep.subr.bf16.mxu0 0
      %873 = vmatpush2.bf16.msra.mxu0 0
      %874 = vmatprep.subr.bf16.mxu0 0
      %875 = vmatpush2.bf16.msra.mxu0 0
      %876 = vmatprep.mubr.bf16.mxu0 0
      %877 = vmatmul.mubr.bf16.gmra.mxu0 %v833
      %v878 = vpop.f32.mrf.mxu0
      %v879 = vadd.f32 0.0, %v878
      %v880 = vpop.f32.mrf.mxu0
      %v881 = vadd.f32 0.0, %v880
      %v882 = vpop.f32.mrf.mxu0
      %v883 = vpop.f32.mrf.mxu0
      %884 = vdwg.mxu0
      %885 = vmatprep.subr.bf16.mxu0 0
      %886 = vmatpush1.bf16.msra.mxu0 0
      %887 = vmatprep.subr.bf16.mxu0 0
      %888 = vmatpush1.bf16.msra.mxu0 0
      %889 = vmatprep.subr.bf16.mxu0 0
      %890 = vmatpush1.bf16.msra.mxu0 0
      %891 = vmatprep.subr.bf16.mxu0 0
      %892 = vmatpush1.bf16.msra.mxu0 0
      %893 = vmatprep.subr.bf16.mxu0 0
      %894 = vmatpush1.bf16.msra.mxu0 0
      %895 = vmatprep.subr.bf16.mxu0 0
      %896 = vmatpush1.bf16.msra.mxu0 0
      %897 = vmatprep.subr.bf16.mxu0 0
      %898 = vmatpush1.bf16.msra.mxu0 0
      %899 = vmatprep.subr.bf16.mxu0 0
      %900 = vmatpush1.bf16.msra.mxu0 %v842
      %901 = vmatprep.subr.bf16.mxu0 0
      %902 = vmatpush2.bf16.msra.mxu0 0
      %903 = vmatprep.subr.bf16.mxu0 0
      %904 = vmatpush2.bf16.msra.mxu0 0
      %905 = vmatprep.subr.bf16.mxu0 0
      %906 = vmatpush2.bf16.msra.mxu0 0
      %907 = vmatprep.subr.bf16.mxu0 0
      %908 = vmatpush2.bf16.msra.mxu0 0
      %909 = vmatprep.subr.bf16.mxu0 0
      %910 = vmatpush2.bf16.msra.mxu0 0
      %911 = vmatprep.subr.bf16.mxu0 0
      %912 = vmatpush2.bf16.msra.mxu0 0
      %913 = vmatprep.subr.bf16.mxu0 0
      %914 = vmatpush2.bf16.msra.mxu0 0
      %915 = vmatprep.subr.bf16.mxu0 0
      %916 = vmatpush2.bf16.msra.mxu0 0
      %917 = vmatprep.mubr.bf16.mxu0 0
      %918 = vmatmul.mubr.bf16.gmra.mxu0 %v833
      %v919 = vpop.f32.mrf.mxu0
      %v920 = vadd.f32 0.0, %v919
      %v921 = vpop.f32.mrf.mxu0
      %v922 = vpop.f32.mrf.mxu0
      %v923 = vpop.f32.mrf.mxu0
      %924 = vdwg.mxu0
      %v925 = vadd.f32 %v796, %v879
      %v926 = vadd.f32 %v797, %v881
      %v927 = vadd.f32 %v798, %v920
      %v928 = vld [vmem:[%s165] sm:$0xff]
      %s929 = scalar_lea.vmem %s1, 24
      %v930 = vld [vmem:[%s929] sm:$0xf]
      %v932 = vcombine.high %v928, %v928
      %v934 = vunpack.c.l.s4 1983009808
      %v935 = vunpack.c.0.s8 %v934
      %v936 = vlaneseq
      %v937 = vshrl.u32 %v936, 7
      %v938 = vsub.s32 %v935, %v937
      %v939 = vrot.slane %v928, %v938
      %v941 = vunpack.c.l.s4 1983009808
      %v942 = vunpack.c.0.s8 %v941
      %v943 = vlaneseq
      %v944 = vshrl.u32 %v943, 7
      %v945 = vsub.s32 %v942, %v944
      %v946 = vrot.slane %v932, %v945
      %v947 = vcombine.high %v939, %v939
      %v948 = vcombine.high %v946, %v946
      %949 = vrot.lane.b32.xlu0 %v939, 92
      %v950 = vpop.permute.xlu0 %949
      %951 = vrot.lane.b32.xlu0 %v947, 92
      %v952 = vpop.permute.xlu0 %951
      %953 = vrot.lane.b32.xlu0 %v946, 92
      %v954 = vpop.permute.xlu0 %953
      %955 = vrot.lane.b32.xlu0 %v948, 92
      %v956 = vpop.permute.xlu0 %955
      %vm957 = vcmask 752640
      %v958 = vsel %vm957, %v950, %v952
      %v959 = vsel %vm957, %v952, %v954
      %v960 = vsel %vm957, %v954, %v956
      %v962 = vsel %vm207, %v930, 0
      %v965 = vsel %vm211, %v958, 0
      %v968 = vsel %vm211, %v959, 0
      %v971 = vsel %vm211, %v960, 0
      %973 = vmatprep.subr.bf16.mxu0 0
      %974 = vmatpush1.bf16.msra.mxu0 0
      %975 = vmatprep.subr.bf16.mxu0 0
      %976 = vmatpush1.bf16.msra.mxu0 0
      %977 = vmatprep.subr.bf16.mxu0 0
      %978 = vmatpush1.bf16.msra.mxu0 0
      %979 = vmatprep.subr.bf16.mxu0 0
      %980 = vmatpush1.bf16.msra.mxu0 0
      %981 = vmatprep.subr.bf16.mxu0 0
      %982 = vmatpush1.bf16.msra.mxu0 0
      %983 = vmatprep.subr.bf16.mxu0 0
      %984 = vmatpush1.bf16.msra.mxu0 0
      %985 = vmatprep.subr.bf16.mxu0 0
      %986 = vmatpush1.bf16.msra.mxu0 0
      %987 = vmatprep.subr.bf16.mxu0 %v968
      %988 = vmatpush1.bf16.msra.mxu0 %v965
      %989 = vmatprep.subr.bf16.mxu0 0
      %990 = vmatpush2.bf16.msra.mxu0 0
      %991 = vmatprep.subr.bf16.mxu0 0
      %992 = vmatpush2.bf16.msra.mxu0 0
      %993 = vmatprep.subr.bf16.mxu0 0
      %994 = vmatpush2.bf16.msra.mxu0 0
      %995 = vmatprep.subr.bf16.mxu0 0
      %996 = vmatpush2.bf16.msra.mxu0 0
      %997 = vmatprep.subr.bf16.mxu0 0
      %998 = vmatpush2.bf16.msra.mxu0 0
      %999 = vmatprep.subr.bf16.mxu0 0
      %1000 = vmatpush2.bf16.msra.mxu0 0
      %1001 = vmatprep.subr.bf16.mxu0 0
      %1002 = vmatpush2.bf16.msra.mxu0 0
      %1003 = vmatprep.subr.bf16.mxu0 0
      %1004 = vmatpush2.bf16.msra.mxu0 0
      %1005 = vmatprep.mubr.bf16.mxu0 0
      %1006 = vmatmul.mubr.bf16.gmra.mxu0 %v962
      %v1007 = vpop.f32.mrf.mxu0
      %v1008 = vadd.f32 0.0, %v1007
      %v1009 = vpop.f32.mrf.mxu0
      %v1010 = vadd.f32 0.0, %v1009
      %v1011 = vpop.f32.mrf.mxu0
      %v1012 = vpop.f32.mrf.mxu0
      %1013 = vdwg.mxu0
      %1014 = vmatprep.subr.bf16.mxu0 0
      %1015 = vmatpush1.bf16.msra.mxu0 0
      %1016 = vmatprep.subr.bf16.mxu0 0
      %1017 = vmatpush1.bf16.msra.mxu0 0
      %1018 = vmatprep.subr.bf16.mxu0 0
      %1019 = vmatpush1.bf16.msra.mxu0 0
      %1020 = vmatprep.subr.bf16.mxu0 0
      %1021 = vmatpush1.bf16.msra.mxu0 0
      %1022 = vmatprep.subr.bf16.mxu0 0
      %1023 = vmatpush1.bf16.msra.mxu0 0
      %1024 = vmatprep.subr.bf16.mxu0 0
      %1025 = vmatpush1.bf16.msra.mxu0 0
      %1026 = vmatprep.subr.bf16.mxu0 0
      %1027 = vmatpush1.bf16.msra.mxu0 0
      %1028 = vmatprep.subr.bf16.mxu0 0
      %1029 = vmatpush1.bf16.msra.mxu0 %v971
      %1030 = vmatprep.subr.bf16.mxu0 0
      %1031 = vmatpush2.bf16.msra.mxu0 0
      %1032 = vmatprep.subr.bf16.mxu0 0
      %1033 = vmatpush2.bf16.msra.mxu0 0
      %1034 = vmatprep.subr.bf16.mxu0 0
      %1035 = vmatpush2.bf16.msra.mxu0 0
      %1036 = vmatprep.subr.bf16.mxu0 0
      %1037 = vmatpush2.bf16.msra.mxu0 0
      %1038 = vmatprep.subr.bf16.mxu0 0
      %1039 = vmatpush2.bf16.msra.mxu0 0
      %1040 = vmatprep.subr.bf16.mxu0 0
      %1041 = vmatpush2.bf16.msra.mxu0 0
      %1042 = vmatprep.subr.bf16.mxu0 0
      %1043 = vmatpush2.bf16.msra.mxu0 0
      %1044 = vmatprep.subr.bf16.mxu0 0
      %1045 = vmatpush2.bf16.msra.mxu0 0
      %1046 = vmatprep.mubr.bf16.mxu0 0
      %1047 = vmatmul.mubr.bf16.gmra.mxu0 %v962
      %v1048 = vpop.f32.mrf.mxu0
      %v1049 = vadd.f32 0.0, %v1048
      %v1050 = vpop.f32.mrf.mxu0
      %v1051 = vpop.f32.mrf.mxu0
      %v1052 = vpop.f32.mrf.mxu0
      %1053 = vdwg.mxu0
      %v1054 = vadd.f32 %v925, %v1008
      %v1055 = vadd.f32 %v926, %v1010
      %v1056 = vadd.f32 %v927, %v1049
      %v1057 = vld [vmem:[%s165] sm:$0xff]
      %s1058 = scalar_lea.vmem %s1, 28
      %v1059 = vld [vmem:[%s1058] sm:$0xf]
      %v1061 = vcombine.high %v1057, %v1057
      %v1063 = vunpack.c.l.s4 1983009808
      %v1064 = vunpack.c.0.s8 %v1063
      %v1065 = vlaneseq
      %v1066 = vshrl.u32 %v1065, 7
      %v1067 = vsub.s32 %v1064, %v1066
      %v1068 = vrot.slane %v1057, %v1067
      %v1070 = vunpack.c.l.s4 1983009808
      %v1071 = vunpack.c.0.s8 %v1070
      %v1072 = vlaneseq
      %v1073 = vshrl.u32 %v1072, 7
      %v1074 = vsub.s32 %v1071, %v1073
      %v1075 = vrot.slane %v1061, %v1074
      %v1076 = vcombine.high %v1068, %v1068
      %v1077 = vcombine.high %v1075, %v1075
      %1078 = vrot.lane.b32.xlu0 %v1068, 91
      %v1079 = vpop.permute.xlu0 %1078
      %1080 = vrot.lane.b32.xlu0 %v1076, 91
      %v1081 = vpop.permute.xlu0 %1080
      %1082 = vrot.lane.b32.xlu0 %v1075, 91
      %v1083 = vpop.permute.xlu0 %1082
      %1084 = vrot.lane.b32.xlu0 %v1077, 91
      %v1085 = vpop.permute.xlu0 %1084
      %vm1086 = vcmask 744448
      %v1087 = vsel %vm1086, %v1079, %v1081
      %v1088 = vsel %vm1086, %v1081, %v1083
      %v1089 = vsel %vm1086, %v1083, %v1085
      %v1091 = vsel %vm207, %v1059, 0
      %v1094 = vsel %vm211, %v1087, 0
      %v1097 = vsel %vm211, %v1088, 0
      %v1100 = vsel %vm211, %v1089, 0
      %1102 = vmatprep.subr.bf16.mxu0 0
      %1103 = vmatpush1.bf16.msra.mxu0 0
      %1104 = vmatprep.subr.bf16.mxu0 0
      %1105 = vmatpush1.bf16.msra.mxu0 0
      %1106 = vmatprep.subr.bf16.mxu0 0
      %1107 = vmatpush1.bf16.msra.mxu0 0
      %1108 = vmatprep.subr.bf16.mxu0 0
      %1109 = vmatpush1.bf16.msra.mxu0 0
      %1110 = vmatprep.subr.bf16.mxu0 0
      %1111 = vmatpush1.bf16.msra.mxu0 0
      %1112 = vmatprep.subr.bf16.mxu0 0
      %1113 = vmatpush1.bf16.msra.mxu0 0
      %1114 = vmatprep.subr.bf16.mxu0 0
      %1115 = vmatpush1.bf16.msra.mxu0 0
      %1116 = vmatprep.subr.bf16.mxu0 %v1097
      %1117 = vmatpush1.bf16.msra.mxu0 %v1094
      %1118 = vmatprep.subr.bf16.mxu0 0
      %1119 = vmatpush2.bf16.msra.mxu0 0
      %1120 = vmatprep.subr.bf16.mxu0 0
      %1121 = vmatpush2.bf16.msra.mxu0 0
      %1122 = vmatprep.subr.bf16.mxu0 0
      %1123 = vmatpush2.bf16.msra.mxu0 0
      %1124 = vmatprep.subr.bf16.mxu0 0
      %1125 = vmatpush2.bf16.msra.mxu0 0
      %1126 = vmatprep.subr.bf16.mxu0 0
      %1127 = vmatpush2.bf16.msra.mxu0 0
      %1128 = vmatprep.subr.bf16.mxu0 0
      %1129 = vmatpush2.bf16.msra.mxu0 0
      %1130 = vmatprep.subr.bf16.mxu0 0
      %1131 = vmatpush2.bf16.msra.mxu0 0
      %1132 = vmatprep.subr.bf16.mxu0 0
      %1133 = vmatpush2.bf16.msra.mxu0 0
      %1134 = vmatprep.mubr.bf16.mxu0 0
      %1135 = vmatmul.mubr.bf16.gmra.mxu0 %v1091
      %v1136 = vpop.f32.mrf.mxu0
      %v1137 = vadd.f32 0.0, %v1136
      %v1138 = vpop.f32.mrf.mxu0
      %v1139 = vadd.f32 0.0, %v1138
      %v1140 = vpop.f32.mrf.mxu0
      %v1141 = vpop.f32.mrf.mxu0
      %1142 = vdwg.mxu0
      %1143 = vmatprep.subr.bf16.mxu0 0
      %1144 = vmatpush1.bf16.msra.mxu0 0
      %1145 = vmatprep.subr.bf16.mxu0 0
      %1146 = vmatpush1.bf16.msra.mxu0 0
      %1147 = vmatprep.subr.bf16.mxu0 0
      %1148 = vmatpush1.bf16.msra.mxu0 0
      %1149 = vmatprep.subr.bf16.mxu0 0
      %1150 = vmatpush1.bf16.msra.mxu0 0
      %1151 = vmatprep.subr.bf16.mxu0 0
      %1152 = vmatpush1.bf16.msra.mxu0 0
      %1153 = vmatprep.subr.bf16.mxu0 0
      %1154 = vmatpush1.bf16.msra.mxu0 0
      %1155 = vmatprep.subr.bf16.mxu0 0
      %1156 = vmatpush1.bf16.msra.mxu0 0
      %1157 = vmatprep.subr.bf16.mxu0 0
      %1158 = vmatpush1.bf16.msra.mxu0 %v1100
      %1159 = vmatprep.subr.bf16.mxu0 0
      %1160 = vmatpush2.bf16.msra.mxu0 0
      %1161 = vmatprep.subr.bf16.mxu0 0
      %1162 = vmatpush2.bf16.msra.mxu0 0
      %1163 = vmatprep.subr.bf16.mxu0 0
      %1164 = vmatpush2.bf16.msra.mxu0 0
      %1165 = vmatprep.subr.bf16.mxu0 0
      %1166 = vmatpush2.bf16.msra.mxu0 0
      %1167 = vmatprep.subr.bf16.mxu0 0
      %1168 = vmatpush2.bf16.msra.mxu0 0
      %1169 = vmatprep.subr.bf16.mxu0 0
      %1170 = vmatpush2.bf16.msra.mxu0 0
      %1171 = vmatprep.subr.bf16.mxu0 0
      %1172 = vmatpush2.bf16.msra.mxu0 0
      %1173 = vmatprep.subr.bf16.mxu0 0
      %1174 = vmatpush2.bf16.msra.mxu0 0
      %1175 = vmatprep.mubr.bf16.mxu0 0
      %1176 = vmatmul.mubr.bf16.gmra.mxu0 %v1091
      %v1177 = vpop.f32.mrf.mxu0
      %v1178 = vadd.f32 0.0, %v1177
      %v1179 = vpop.f32.mrf.mxu0
      %v1180 = vpop.f32.mrf.mxu0
      %v1181 = vpop.f32.mrf.mxu0
      %1182 = vdwg.mxu0
      %v1183 = vadd.f32 %v1054, %v1137
      %v1184 = vadd.f32 %v1055, %v1139
      %v1185 = vadd.f32 %v1056, %v1178
      %v1186 = vld [vmem:[%s165] sm:$0xff]
      %s1187 = scalar_lea.vmem %s1, 32
      %v1188 = vld [vmem:[%s1187] sm:$0xf]
      %v1190 = vcombine.high %v1186, %v1186
      %v1192 = vunpack.c.l.s4 1983009808
      %v1193 = vunpack.c.0.s8 %v1192
      %v1194 = vlaneseq
      %v1195 = vshrl.u32 %v1194, 7
      %v1196 = vsub.s32 %v1193, %v1195
      %v1197 = vrot.slane %v1186, %v1196
      %v1199 = vunpack.c.l.s4 1983009808
      %v1200 = vunpack.c.0.s8 %v1199
      %v1201 = vlaneseq
      %v1202 = vshrl.u32 %v1201, 7
      %v1203 = vsub.s32 %v1200, %v1202
      %v1204 = vrot.slane %v1190, %v1203
      %v1205 = vcombine.high %v1197, %v1197
      %v1206 = vcombine.high %v1204, %v1204
      %1207 = vrot.lane.b32.xlu0 %v1197, 90
      %v1208 = vpop.permute.xlu0 %1207
      %1209 = vrot.lane.b32.xlu0 %v1205, 90
      %v1210 = vpop.permute.xlu0 %1209
      %1211 = vrot.lane.b32.xlu0 %v1204, 90
      %v1212 = vpop.permute.xlu0 %1211
      %1213 = vrot.lane.b32.xlu0 %v1206, 90
      %v1214 = vpop.permute.xlu0 %1213
      %vm1215 = vcmask 736256
      %v1216 = vsel %vm1215, %v1208, %v1210
      %v1217 = vsel %vm1215, %v1210, %v1212
      %v1218 = vsel %vm1215, %v1212, %v1214
      %v1220 = vsel %vm207, %v1188, 0
      %v1223 = vsel %vm211, %v1216, 0
      %v1226 = vsel %vm211, %v1217, 0
      %v1229 = vsel %vm211, %v1218, 0
      %1231 = vmatprep.subr.bf16.mxu0 0
      %1232 = vmatpush1.bf16.msra.mxu0 0
      %1233 = vmatprep.subr.bf16.mxu0 0
      %1234 = vmatpush1.bf16.msra.mxu0 0
      %1235 = vmatprep.subr.bf16.mxu0 0
      %1236 = vmatpush1.bf16.msra.mxu0 0
      %1237 = vmatprep.subr.bf16.mxu0 0
      %1238 = vmatpush1.bf16.msra.mxu0 0
      %1239 = vmatprep.subr.bf16.mxu0 0
      %1240 = vmatpush1.bf16.msra.mxu0 0
      %1241 = vmatprep.subr.bf16.mxu0 0
      %1242 = vmatpush1.bf16.msra.mxu0 0
      %1243 = vmatprep.subr.bf16.mxu0 0
      %1244 = vmatpush1.bf16.msra.mxu0 0
      %1245 = vmatprep.subr.bf16.mxu0 %v1226
      %1246 = vmatpush1.bf16.msra.mxu0 %v1223
      %1247 = vmatprep.subr.bf16.mxu0 0
      %1248 = vmatpush2.bf16.msra.mxu0 0
      %1249 = vmatprep.subr.bf16.mxu0 0
      %1250 = vmatpush2.bf16.msra.mxu0 0
      %1251 = vmatprep.subr.bf16.mxu0 0
      %1252 = vmatpush2.bf16.msra.mxu0 0
      %1253 = vmatprep.subr.bf16.mxu0 0
      %1254 = vmatpush2.bf16.msra.mxu0 0
      %1255 = vmatprep.subr.bf16.mxu0 0
      %1256 = vmatpush2.bf16.msra.mxu0 0
      %1257 = vmatprep.subr.bf16.mxu0 0
      %1258 = vmatpush2.bf16.msra.mxu0 0
      %1259 = vmatprep.subr.bf16.mxu0 0
      %1260 = vmatpush2.bf16.msra.mxu0 0
      %1261 = vmatprep.subr.bf16.mxu0 0
      %1262 = vmatpush2.bf16.msra.mxu0 0
      %1263 = vmatprep.mubr.bf16.mxu0 0
      %1264 = vmatmul.mubr.bf16.gmra.mxu0 %v1220
      %v1265 = vpop.f32.mrf.mxu0
      %v1266 = vadd.f32 0.0, %v1265
      %v1267 = vpop.f32.mrf.mxu0
      %v1268 = vadd.f32 0.0, %v1267
      %v1269 = vpop.f32.mrf.mxu0
      %v1270 = vpop.f32.mrf.mxu0
      %1271 = vdwg.mxu0
      %1272 = vmatprep.subr.bf16.mxu0 0
      %1273 = vmatpush1.bf16.msra.mxu0 0
      %1274 = vmatprep.subr.bf16.mxu0 0
      %1275 = vmatpush1.bf16.msra.mxu0 0
      %1276 = vmatprep.subr.bf16.mxu0 0
      %1277 = vmatpush1.bf16.msra.mxu0 0
      %1278 = vmatprep.subr.bf16.mxu0 0
      %1279 = vmatpush1.bf16.msra.mxu0 0
      %1280 = vmatprep.subr.bf16.mxu0 0
      %1281 = vmatpush1.bf16.msra.mxu0 0
      %1282 = vmatprep.subr.bf16.mxu0 0
      %1283 = vmatpush1.bf16.msra.mxu0 0
      %1284 = vmatprep.subr.bf16.mxu0 0
      %1285 = vmatpush1.bf16.msra.mxu0 0
      %1286 = vmatprep.subr.bf16.mxu0 0
      %1287 = vmatpush1.bf16.msra.mxu0 %v1229
      %1288 = vmatprep.subr.bf16.mxu0 0
      %1289 = vmatpush2.bf16.msra.mxu0 0
      %1290 = vmatprep.subr.bf16.mxu0 0
      %1291 = vmatpush2.bf16.msra.mxu0 0
      %1292 = vmatprep.subr.bf16.mxu0 0
      %1293 = vmatpush2.bf16.msra.mxu0 0
      %1294 = vmatprep.subr.bf16.mxu0 0
      %1295 = vmatpush2.bf16.msra.mxu0 0
      %1296 = vmatprep.subr.bf16.mxu0 0
      %1297 = vmatpush2.bf16.msra.mxu0 0
      %1298 = vmatprep.subr.bf16.mxu0 0
      %1299 = vmatpush2.bf16.msra.mxu0 0
      %1300 = vmatprep.subr.bf16.mxu0 0
      %1301 = vmatpush2.bf16.msra.mxu0 0
      %1302 = vmatprep.subr.bf16.mxu0 0
      %1303 = vmatpush2.bf16.msra.mxu0 0
      %1304 = vmatprep.mubr.bf16.mxu0 0
      %1305 = vmatmul.mubr.bf16.gmra.mxu0 %v1220
      %v1306 = vpop.f32.mrf.mxu0
      %v1307 = vadd.f32 0.0, %v1306
      %v1308 = vpop.f32.mrf.mxu0
      %v1309 = vpop.f32.mrf.mxu0
      %v1310 = vpop.f32.mrf.mxu0
      %1311 = vdwg.mxu0
      %v1312 = vadd.f32 %v1183, %v1266
      %v1313 = vadd.f32 %v1184, %v1268
      %v1314 = vadd.f32 %v1185, %v1307
      %v1315 = vld [vmem:[%s2] sm:$0xff]
      %1317 = vset.pattern.permute.xlu0 0
      %1318 = vperm.xlu0 %1317, %v1315
      %v1319 = vpop.permute.xlu0 %1318
      %v1321 = vadd.f32 %v1312, %v1319
      %v1322 = vadd.f32 %v1313, %v1319
      %v1323 = vadd.f32 %v1314, %v1319
      %1324 = vst [vmem:[%s170] sm:$0xff] %v1321
      %1325 = vst [vmem:[%s170 + $0x8] sm:$0xff] %v1322
      %1326 = vst [vmem:[%s170 + $0x10] sm:$0xff] %v1323
      %p1327 = scmp.lt.s32.totalorder %s14, 1
      %s1328 = scalar_select %p1327, %s14, 1
      %s1329 = smul.addr %s1328, 3
      %s1330 = smul.addr %s1329, 8
      %s1331 = scalar_lea.vmem %s3, %s1330
      // Predicated region
      $region33: #{reduced_svd_conv_forward.3} parent=31 // pred_check
        %p1332 = pneg %p100
      $region34: #{reduced_svd_conv_forward.3} parent=31 // pred_check_branch
        %1334 = sbr.rel (%p1332) target = $region36
      $region35: #{reduced_svd_conv_forward.3} parent=31 // pred_region
        _
      $region36: #{reduced_svd_conv_forward.3} parent=31 // pred_fallthru
        _
    $region32: #{reduced_svd_conv_forward.3} parent=5 // pred_fallthru
      _
    %p1335 = scmp.le.s32.totalorder 2, %s9
    // Predicated region
    $region37: #{reduced_svd_conv_forward.3} parent=5 // pred_check
      %p1336 = pneg %p1335
    $region38: #{reduced_svd_conv_forward.3} parent=5 // pred_check_branch
      %1338 = sbr.rel (%p1336) target = $region40
    $region39: #{reduced_svd_conv_forward.3} parent=5 // pred_region
      %s1339 = ssub.s32 %s9, 2
      // Predicated region
      $region41: #{reduced_svd_conv_forward.3} parent=39 // pred_check
        %p1340 = pneg %p106
      $region42: #{reduced_svd_conv_forward.3} parent=39 // pred_check_branch
        %1342 = sbr.rel (%p1340) target = $region44
      $region43: #{reduced_svd_conv_forward.3} parent=39 // pred_region
        %p1343 = scmp.lt.s32.totalorder %s15, 1
        %s1344 = scalar_select %p1343, %s15, 1
        %s1345 = smul.addr %s1344, 3
        %s1346 = smul.addr %s1345, 8
        %s1347 = scalar_lea.vmem %s3, %s1346
      $region44: #{reduced_svd_conv_forward.3} parent=39 // pred_fallthru
        _
    $region40: #{reduced_svd_conv_forward.3} parent=5 // pred_fallthru
      _
  $region6: #{reduced_svd_conv_forward.3} parent=0 // loop_footer
    %s13 = sadd.s32 1, %s9
  $region7: #{reduced_svd_conv_forward.3} parent=0 // loop_footer_branch
    %8 = sbr.rel target = $region3
  $region8: #{reduced_svd_conv_forward.3} parent=0 // loop_exit
    _

</llo_original>
